<compile_context>
chip_gen: v7x
topology: tpu7x:2x2x1
jax: 0.10.0
libtpu: 0.0.40
codegen_flags: <defaults>
</compile_context>

<pallas_src>
import functools

import jax
import jax.numpy as jnp
from jax import lax
from jax.experimental import pallas as pl
from jax.experimental.pallas import tpu as pltpu

# ----------------------------- configuration ---------------------------------
BATCH = 2
SEQ = 64                  # n (tokens)
DIM = 128                 # model dim
HEADS = 8                 # module default
DIM_HEAD = 64             # module default
INNER = HEADS * DIM_HEAD  # 512
# project_out = not (heads == 1 and dim_head == dim) -> True, so to_out = Linear(inner, dim).


# ------------------------------ fused kernel ----------------------------------
def _attention_fused_kernel(heads, dim_head,
                            x_ref, wqkv_ref, wo_ref, bo_ref, o_ref, qkv_ref):
    """One batch element per grid step.

    x_ref:    (N, D)        f32
    wqkv_ref: (D, 3*inner)  bf16   (scale already folded into the q columns)
    wo_ref:   (inner, D)    bf16
    bo_ref:   (1, D)        f32
    o_ref:    (N, D)        f32
    qkv_ref:  (N, 3*inner)  bf16 VMEM scratch (staged QKV projection)
    """
    inner = heads * dim_head
    bf16 = jnp.bfloat16

    # --- to_qkv: one big MXU matmul, staged once into VMEM scratch (lane-dense
    # full-width store).  Result is kept in bf16: that is exactly the precision
    # the attention matmuls consume, and it halves scratch traffic.
    qkv_ref[...] = jnp.dot(x_ref[...].astype(bf16), wqkv_ref[...],
                           preferred_element_type=jnp.float32).astype(bf16)

    # --- per-head softmax attention (heads is small & static -> unrolled).
    # Per-head working set: a few vregs read straight from the scratch ref.
    head_outs = []
    for h in range(heads):
        q0 = h * dim_head
        k0 = inner + h * dim_head
        v0 = 2 * inner + h * dim_head
        qh = qkv_ref[:, q0:q0 + dim_head]               # (N, Dh) bf16, pre-scaled
        kh = qkv_ref[:, k0:k0 + dim_head]               # (N, Dh) bf16
        vh = qkv_ref[:, v0:v0 + dim_head]               # (N, Dh) bf16

        s = lax.dot_general(qh, kh, (((1,), (1,)), ((), ())),
                            preferred_element_type=jnp.float32)   # (N, N) f32
        m = jnp.max(s, axis=-1, keepdims=True)
        p = jnp.exp(s - m)
        p = p / jnp.sum(p, axis=-1, keepdims=True)                # exact softmax
        oh = jnp.dot(p.astype(bf16), vh,
                     preferred_element_type=jnp.float32)          # (N, Dh) f32
        head_outs.append(oh.astype(bf16))

    # --- 'b h n d -> b n (h d)' re-pack: one lane-dense concat (no acc_ref,
    # no masked 64-lane stores), fed straight into the output projection.
    out_inner = jnp.concatenate(head_outs, axis=-1)               # (N, inner) bf16

    # --- to_out: Linear(inner, dim) + bias.
    o_ref[...] = jnp.dot(out_inner, wo_ref[...],
                         preferred_element_type=jnp.float32) + bo_ref[...]


def attention_forward(x, w_qkv_scaled_bf16, w_o_bf16, b_o, *,
                      heads=HEADS, dim_head=DIM_HEAD):
    """x: (B, N, D) f32 -> (B, N, D) f32.  Single fused pallas_call, grid=(B,)."""
    B, N, D = x.shape
    inner = heads * dim_head
    kernel = functools.partial(_attention_fused_kernel, heads, dim_head)
    return pl.pallas_call(
        kernel,
        out_shape=jax.ShapeDtypeStruct((B, N, D), jnp.float32),
        grid=(B,),
        in_specs=[
            pl.BlockSpec((None, N, D), lambda b: (b, 0, 0)),      # x (per-batch slab)
            pl.BlockSpec((D, 3 * inner), lambda b: (0, 0)),       # W_qkv (bf16, resident)
            pl.BlockSpec((inner, D), lambda b: (0, 0)),           # W_o   (bf16, resident)
            pl.BlockSpec((1, D), lambda b: (0, 0)),               # b_o   (f32)
        ],
        out_specs=pl.BlockSpec((None, N, D), lambda b: (b, 0, 0)),
        scratch_shapes=[pltpu.VMEM((N, 3 * inner), jnp.bfloat16)],  # staged QKV
        compiler_params=pltpu.CompilerParams(
            dimension_semantics=("parallel",)),                   # 2 TCs on v7x
    )(x, w_qkv_scaled_bf16, w_o_bf16, b_o)


def prepare_params(w_qkv_f32, w_o_f32, *, heads=HEADS, dim_head=DIM_HEAD):
    """One-time host-side parameter prep: fold softmax scale into the q columns
    of W_qkv and cast both projection weights to bf16 (MXU operand dtype)."""
    inner = heads * dim_head
    scale = dim_head ** -0.5
    w_qkv_scaled = w_qkv_f32.at[:, :inner].multiply(scale)
    return w_qkv_scaled.astype(jnp.bfloat16), w_o_f32.astype(jnp.bfloat16)


# ----------------------- pure-JAX reference (sanity check) --------------------
def attention_reference(x, w_qkv, w_o, b_o, heads, dim_head):
    """Mirrors the kernel's bf16-operand / f32-accumulate precision policy so the
    runtime check isolates kernel-structure bugs from the deliberate bf16 casts."""
    B, N, D = x.shape
    inner = heads * dim_head
    bf = jnp.bfloat16
    qkv = jnp.dot(x.astype(bf), w_qkv.astype(bf), preferred_element_type=jnp.float32)
    q, k, v = jnp.split(qkv, 3, axis=-1)
    q = (q * dim_head ** -0.5).reshape(B, N, heads, dim_head).transpose(0, 2, 1, 3)
    k = k.reshape(B, N, heads, dim_head).transpose(0, 2, 1, 3)
    v = v.reshape(B, N, heads, dim_head).transpose(0, 2, 1, 3)
    s = jnp.einsum('bhqd,bhkd->bhqk', q.astype(bf), k.astype(bf),
                   preferred_element_type=jnp.float32)
    p = jax.nn.softmax(s, axis=-1)
    o = jnp.einsum('bhqk,bhkd->bhqd', p.astype(bf), v.astype(bf),
                   preferred_element_type=jnp.float32)
    o = o.transpose(0, 2, 1, 3).reshape(B, N, inner)
    return jnp.dot(o.astype(bf), w_o.astype(bf),
                   preferred_element_type=jnp.float32) + b_o


# ----------------------------------- main --------------------------------------
if __name__ == "__main__":
    key = jax.random.PRNGKey(0)
    kx, kq, ko, kb = jax.random.split(key, 4)
    x = jax.random.normal(kx, (BATCH, SEQ, DIM), dtype=jnp.float32)
    w_qkv = (jax.random.normal(kq, (DIM, 3 * INNER)) * DIM ** -0.5).astype(jnp.float32)
    w_o = (jax.random.normal(ko, (INNER, DIM)) * INNER ** -0.5).astype(jnp.float32)
    b_o = (0.02 * jax.random.normal(kb, (1, DIM))).astype(jnp.float32)

    # One-time host transform (scale folding + bf16 cast), outside the jitted fwd.
    w_qkv_k, w_o_k = prepare_params(w_qkv, w_o, heads=HEADS, dim_head=DIM_HEAD)

    fwd = jax.jit(functools.partial(attention_forward, heads=HEADS, dim_head=DIM_HEAD))
    out = jax.block_until_ready(fwd(x, w_qkv_k, w_o_k, b_o))

    assert out.shape == (BATCH, SEQ, DIM) and out.dtype == jnp.float32

    ref = attention_reference(x, w_qkv, w_o, b_o, HEADS, DIM_HEAD)
    err = float(jnp.max(jnp.abs(out - ref)))
    assert err < 5e-2, f"max abs error {err}"
    print("KERNEL_OK")
</pallas_src>

<mosaic_0001>
module attributes {stable_mosaic.version = 11 : i64} {
  func.func @_attention_fused_kernel(%arg0: i32, %arg1: memref<1x64x128xf32, #tpu.memory_space<vmem>>, %arg2: memref<128x1536xbf16, #tpu.memory_space<vmem>>, %arg3: memref<512x128xbf16, #tpu.memory_space<vmem>>, %arg4: memref<1x128xf32, #tpu.memory_space<vmem>>, %arg5: memref<1x64x128xf32, #tpu.memory_space<vmem>>, %arg6: memref<64x1536xbf16, #tpu.memory_space<vmem>>) attributes {dimension_semantics = [#tpu.dimension_semantics<parallel>], iteration_bounds = array<i64: 2>, scalar_prefetch = 0 : i64, scratch_operands = 1 : i64, tpu.core_type = #tpu.core_type<tc>, window_params = [{transform_indices = @transform_0, window_bounds = array<i64: 1, 64, 128>}, {pipeline_mode = #tpu.pipeline_mode<synchronous>, transform_indices = @transform_1, window_bounds = array<i64: 128, 1536>}, {pipeline_mode = #tpu.pipeline_mode<synchronous>, transform_indices = @transform_2, window_bounds = array<i64: 512, 128>}, {pipeline_mode = #tpu.pipeline_mode<synchronous>, transform_indices = @transform_3, window_bounds = array<i64: 1, 128>}, {transform_indices = @transform_4, window_bounds = array<i64: 1, 64, 128>}]} {
    %c0 = arith.constant 0 : index
    %c0_0 = arith.constant 0 : index
    %c0_1 = arith.constant 0 : index
    %0 = vector.load %arg1[%c0, %c0_0, %c0_1] : memref<1x64x128xf32, #tpu.memory_space<vmem>>, vector<1x64x128xf32>
    %1 = vector.shape_cast %0 : vector<1x64x128xf32> to vector<64x128xf32>
    %2 = arith.truncf %1 : vector<64x128xf32> to vector<64x128xbf16>
    %c0_2 = arith.constant 0 : index
    %c0_3 = arith.constant 0 : index
    %3 = vector.load %arg2[%c0_2, %c0_3] : memref<128x1536xbf16, #tpu.memory_space<vmem>>, vector<128x1536xbf16>
    %cst = arith.constant dense<0.000000e+00> : vector<64x1536xf32>
    %4 = tpu.matmul %2, %3, %cst {dimension_numbers = #tpu.dot_dimension_numbers<[1], [0], [0], [1], [0, 0, 1, 1], [], []>} : vector<64x128xbf16>, vector<128x1536xbf16>, vector<64x1536xf32> -> vector<64x1536xf32>
    %5 = arith.truncf %4 : vector<64x1536xf32> to vector<64x1536xbf16>
    %c0_4 = arith.constant 0 : index
    %c0_5 = arith.constant 0 : index
    %6 = vector.load %arg6[%c0_4, %c0_5] : memref<64x1536xbf16, #tpu.memory_space<vmem>>, vector<64x1536xbf16>
    tpu.vector_store %arg6[%c0_4, %c0_5], %5 {strides = array<i32>} : memref<64x1536xbf16, #tpu.memory_space<vmem>>, vector<64x1536xbf16>,
    %c0_6 = arith.constant 0 : index
    %c0_7 = arith.constant 0 : index
    %7 = vector.load %arg6[%c0_6, %c0_7] : memref<64x1536xbf16, #tpu.memory_space<vmem>>, vector<64x64xbf16>
    %c0_8 = arith.constant 0 : index
    %c512 = arith.constant 512 : index
    %8 = vector.load %arg6[%c0_8, %c512] : memref<64x1536xbf16, #tpu.memory_space<vmem>>, vector<64x64xbf16>
    %c0_9 = arith.constant 0 : index
    %c1024 = arith.constant 1024 : index
    %9 = vector.load %arg6[%c0_9, %c1024] : memref<64x1536xbf16, #tpu.memory_space<vmem>>, vector<64x64xbf16>
    %cst_10 = arith.constant dense<0.000000e+00> : vector<64x64xf32>
    %10 = tpu.matmul %7, %8, %cst_10 {dimension_numbers = #tpu.dot_dimension_numbers<[1], [1], [0], [0], [0, 0, 1, 0], [], []>} : vector<64x64xbf16>, vector<64x64xbf16>, vector<64x64xf32> -> vector<64x64xf32>
    %cst_11 = arith.constant dense<0xFF800000> : vector<64xf32>
    %11 = vector.multi_reduction <maximumf>, %10, %cst_11 [1] : vector<64x64xf32> to vector<64xf32>
    %12 = vector.shape_cast %11 : vector<64xf32> to vector<64x1xf32>
    %13 = vector.broadcast %12 : vector<64x1xf32> to vector<64x64xf32>
    %14 = arith.subf %10, %13 : vector<64x64xf32>
    %15 = math.exp %14 : vector<64x64xf32>
    %cst_12 = arith.constant dense<0.000000e+00> : vector<64xf32>
    %16 = vector.multi_reduction <add>, %15, %cst_12 [1] : vector<64x64xf32> to vector<64xf32>
    %17 = vector.shape_cast %16 : vector<64xf32> to vector<64x1xf32>
    %18 = vector.broadcast %17 : vector<64x1xf32> to vector<64x64xf32>
    %19 = arith.divf %15, %18 : vector<64x64xf32>
    %20 = arith.truncf %19 : vector<64x64xf32> to vector<64x64xbf16>
    %cst_13 = arith.constant dense<0.000000e+00> : vector<64x64xf32>
    %21 = tpu.matmul %20, %9, %cst_13 {dimension_numbers = #tpu.dot_dimension_numbers<[1], [0], [0], [1], [0, 0, 1, 1], [], []>} : vector<64x64xbf16>, vector<64x64xbf16>, vector<64x64xf32> -> vector<64x64xf32>
    %22 = arith.truncf %21 : vector<64x64xf32> to vector<64x64xbf16>
    %c0_14 = arith.constant 0 : index
    %c64 = arith.constant 64 : index
    %23 = vector.load %arg6[%c0_14, %c64] : memref<64x1536xbf16, #tpu.memory_space<vmem>>, vector<64x64xbf16>
    %c0_15 = arith.constant 0 : index
    %c576 = arith.constant 576 : index
    %24 = vector.load %arg6[%c0_15, %c576] : memref<64x1536xbf16, #tpu.memory_space<vmem>>, vector<64x64xbf16>
    %c0_16 = arith.constant 0 : index
    %c1088 = arith.constant 1088 : index
    %25 = vector.load %arg6[%c0_16, %c1088] : memref<64x1536xbf16, #tpu.memory_space<vmem>>, vector<64x64xbf16>
    %cst_17 = arith.constant dense<0.000000e+00> : vector<64x64xf32>
    %26 = tpu.matmul %23, %24, %cst_17 {dimension_numbers = #tpu.dot_dimension_numbers<[1], [1], [0], [0], [0, 0, 1, 0], [], []>} : vector<64x64xbf16>, vector<64x64xbf16>, vector<64x64xf32> -> vector<64x64xf32>
    %cst_18 = arith.constant dense<0xFF800000> : vector<64xf32>
    %27 = vector.multi_reduction <maximumf>, %26, %cst_18 [1] : vector<64x64xf32> to vector<64xf32>
    %28 = vector.shape_cast %27 : vector<64xf32> to vector<64x1xf32>
    %29 = vector.broadcast %28 : vector<64x1xf32> to vector<64x64xf32>
    %30 = arith.subf %26, %29 : vector<64x64xf32>
    %31 = math.exp %30 : vector<64x64xf32>
    %cst_19 = arith.constant dense<0.000000e+00> : vector<64xf32>
    %32 = vector.multi_reduction <add>, %31, %cst_19 [1] : vector<64x64xf32> to vector<64xf32>
    %33 = vector.shape_cast %32 : vector<64xf32> to vector<64x1xf32>
    %34 = vector.broadcast %33 : vector<64x1xf32> to vector<64x64xf32>
    %35 = arith.divf %31, %34 : vector<64x64xf32>
    %36 = arith.truncf %35 : vector<64x64xf32> to vector<64x64xbf16>
    %cst_20 = arith.constant dense<0.000000e+00> : vector<64x64xf32>
    %37 = tpu.matmul %36, %25, %cst_20 {dimension_numbers = #tpu.dot_dimension_numbers<[1], [0], [0], [1], [0, 0, 1, 1], [], []>} : vector<64x64xbf16>, vector<64x64xbf16>, vector<64x64xf32> -> vector<64x64xf32>
    %38 = arith.truncf %37 : vector<64x64xf32> to vector<64x64xbf16>
    %c0_21 = arith.constant 0 : index
    %c128 = arith.constant 128 : index
    %39 = vector.load %arg6[%c0_21, %c128] : memref<64x1536xbf16, #tpu.memory_space<vmem>>, vector<64x64xbf16>
    %c0_22 = arith.constant 0 : index
    %c640 = arith.constant 640 : index
    %40 = vector.load %arg6[%c0_22, %c640] : memref<64x1536xbf16, #tpu.memory_space<vmem>>, vector<64x64xbf16>
    %c0_23 = arith.constant 0 : index
    %c1152 = arith.constant 1152 : index
    %41 = vector.load %arg6[%c0_23, %c1152] : memref<64x1536xbf16, #tpu.memory_space<vmem>>, vector<64x64xbf16>
    %cst_24 = arith.constant dense<0.000000e+00> : vector<64x64xf32>
    %42 = tpu.matmul %39, %40, %cst_24 {dimension_numbers = #tpu.dot_dimension_numbers<[1], [1], [0], [0], [0, 0, 1, 0], [], []>} : vector<64x64xbf16>, vector<64x64xbf16>, vector<64x64xf32> -> vector<64x64xf32>
    %cst_25 = arith.constant dense<0xFF800000> : vector<64xf32>
    %43 = vector.multi_reduction <maximumf>, %42, %cst_25 [1] : vector<64x64xf32> to vector<64xf32>
    %44 = vector.shape_cast %43 : vector<64xf32> to vector<64x1xf32>
    %45 = vector.broadcast %44 : vector<64x1xf32> to vector<64x64xf32>
    %46 = arith.subf %42, %45 : vector<64x64xf32>
    %47 = math.exp %46 : vector<64x64xf32>
    %cst_26 = arith.constant dense<0.000000e+00> : vector<64xf32>
    %48 = vector.multi_reduction <add>, %47, %cst_26 [1] : vector<64x64xf32> to vector<64xf32>
    %49 = vector.shape_cast %48 : vector<64xf32> to vector<64x1xf32>
    %50 = vector.broadcast %49 : vector<64x1xf32> to vector<64x64xf32>
    %51 = arith.divf %47, %50 : vector<64x64xf32>
    %52 = arith.truncf %51 : vector<64x64xf32> to vector<64x64xbf16>
    %cst_27 = arith.constant dense<0.000000e+00> : vector<64x64xf32>
    %53 = tpu.matmul %52, %41, %cst_27 {dimension_numbers = #tpu.dot_dimension_numbers<[1], [0], [0], [1], [0, 0, 1, 1], [], []>} : vector<64x64xbf16>, vector<64x64xbf16>, vector<64x64xf32> -> vector<64x64xf32>
    %54 = arith.truncf %53 : vector<64x64xf32> to vector<64x64xbf16>
    %c0_28 = arith.constant 0 : index
    %c192 = arith.constant 192 : index
    %55 = vector.load %arg6[%c0_28, %c192] : memref<64x1536xbf16, #tpu.memory_space<vmem>>, vector<64x64xbf16>
    %c0_29 = arith.constant 0 : index
    %c704 = arith.constant 704 : index
    %56 = vector.load %arg6[%c0_29, %c704] : memref<64x1536xbf16, #tpu.memory_space<vmem>>, vector<64x64xbf16>
    %c0_30 = arith.constant 0 : index
    %c1216 = arith.constant 1216 : index
    %57 = vector.load %arg6[%c0_30, %c1216] : memref<64x1536xbf16, #tpu.memory_space<vmem>>, vector<64x64xbf16>
    %cst_31 = arith.constant dense<0.000000e+00> : vector<64x64xf32>
    %58 = tpu.matmul %55, %56, %cst_31 {dimension_numbers = #tpu.dot_dimension_numbers<[1], [1], [0], [0], [0, 0, 1, 0], [], []>} : vector<64x64xbf16>, vector<64x64xbf16>, vector<64x64xf32> -> vector<64x64xf32>
    %cst_32 = arith.constant dense<0xFF800000> : vector<64xf32>
    %59 = vector.multi_reduction <maximumf>, %58, %cst_32 [1] : vector<64x64xf32> to vector<64xf32>
    %60 = vector.shape_cast %59 : vector<64xf32> to vector<64x1xf32>
    %61 = vector.broadcast %60 : vector<64x1xf32> to vector<64x64xf32>
    %62 = arith.subf %58, %61 : vector<64x64xf32>
    %63 = math.exp %62 : vector<64x64xf32>
    %cst_33 = arith.constant dense<0.000000e+00> : vector<64xf32>
    %64 = vector.multi_reduction <add>, %63, %cst_33 [1] : vector<64x64xf32> to vector<64xf32>
    %65 = vector.shape_cast %64 : vector<64xf32> to vector<64x1xf32>
    %66 = vector.broadcast %65 : vector<64x1xf32> to vector<64x64xf32>
    %67 = arith.divf %63, %66 : vector<64x64xf32>
    %68 = arith.truncf %67 : vector<64x64xf32> to vector<64x64xbf16>
    %cst_34 = arith.constant dense<0.000000e+00> : vector<64x64xf32>
    %69 = tpu.matmul %68, %57, %cst_34 {dimension_numbers = #tpu.dot_dimension_numbers<[1], [0], [0], [1], [0, 0, 1, 1], [], []>} : vector<64x64xbf16>, vector<64x64xbf16>, vector<64x64xf32> -> vector<64x64xf32>
    %70 = arith.truncf %69 : vector<64x64xf32> to vector<64x64xbf16>
    %c0_35 = arith.constant 0 : index
    %c256 = arith.constant 256 : index
    %71 = vector.load %arg6[%c0_35, %c256] : memref<64x1536xbf16, #tpu.memory_space<vmem>>, vector<64x64xbf16>
    %c0_36 = arith.constant 0 : index
    %c768 = arith.constant 768 : index
    %72 = vector.load %arg6[%c0_36, %c768] : memref<64x1536xbf16, #tpu.memory_space<vmem>>, vector<64x64xbf16>
    %c0_37 = arith.constant 0 : index
    %c1280 = arith.constant 1280 : index
    %73 = vector.load %arg6[%c0_37, %c1280] : memref<64x1536xbf16, #tpu.memory_space<vmem>>, vector<64x64xbf16>
    %cst_38 = arith.constant dense<0.000000e+00> : vector<64x64xf32>
    %74 = tpu.matmul %71, %72, %cst_38 {dimension_numbers = #tpu.dot_dimension_numbers<[1], [1], [0], [0], [0, 0, 1, 0], [], []>} : vector<64x64xbf16>, vector<64x64xbf16>, vector<64x64xf32> -> vector<64x64xf32>
    %cst_39 = arith.constant dense<0xFF800000> : vector<64xf32>
    %75 = vector.multi_reduction <maximumf>, %74, %cst_39 [1] : vector<64x64xf32> to vector<64xf32>
    %76 = vector.shape_cast %75 : vector<64xf32> to vector<64x1xf32>
    %77 = vector.broadcast %76 : vector<64x1xf32> to vector<64x64xf32>
    %78 = arith.subf %74, %77 : vector<64x64xf32>
    %79 = math.exp %78 : vector<64x64xf32>
    %cst_40 = arith.constant dense<0.000000e+00> : vector<64xf32>
    %80 = vector.multi_reduction <add>, %79, %cst_40 [1] : vector<64x64xf32> to vector<64xf32>
    %81 = vector.shape_cast %80 : vector<64xf32> to vector<64x1xf32>
    %82 = vector.broadcast %81 : vector<64x1xf32> to vector<64x64xf32>
    %83 = arith.divf %79, %82 : vector<64x64xf32>
    %84 = arith.truncf %83 : vector<64x64xf32> to vector<64x64xbf16>
    %cst_41 = arith.constant dense<0.000000e+00> : vector<64x64xf32>
    %85 = tpu.matmul %84, %73, %cst_41 {dimension_numbers = #tpu.dot_dimension_numbers<[1], [0], [0], [1], [0, 0, 1, 1], [], []>} : vector<64x64xbf16>, vector<64x64xbf16>, vector<64x64xf32> -> vector<64x64xf32>
    %86 = arith.truncf %85 : vector<64x64xf32> to vector<64x64xbf16>
    %c0_42 = arith.constant 0 : index
    %c320 = arith.constant 320 : index
    %87 = vector.load %arg6[%c0_42, %c320] : memref<64x1536xbf16, #tpu.memory_space<vmem>>, vector<64x64xbf16>
    %c0_43 = arith.constant 0 : index
    %c832 = arith.constant 832 : index
    %88 = vector.load %arg6[%c0_43, %c832] : memref<64x1536xbf16, #tpu.memory_space<vmem>>, vector<64x64xbf16>
    %c0_44 = arith.constant 0 : index
    %c1344 = arith.constant 1344 : index
    %89 = vector.load %arg6[%c0_44, %c1344] : memref<64x1536xbf16, #tpu.memory_space<vmem>>, vector<64x64xbf16>
    %cst_45 = arith.constant dense<0.000000e+00> : vector<64x64xf32>
    %90 = tpu.matmul %87, %88, %cst_45 {dimension_numbers = #tpu.dot_dimension_numbers<[1], [1], [0], [0], [0, 0, 1, 0], [], []>} : vector<64x64xbf16>, vector<64x64xbf16>, vector<64x64xf32> -> vector<64x64xf32>
    %cst_46 = arith.constant dense<0xFF800000> : vector<64xf32>
    %91 = vector.multi_reduction <maximumf>, %90, %cst_46 [1] : vector<64x64xf32> to vector<64xf32>
    %92 = vector.shape_cast %91 : vector<64xf32> to vector<64x1xf32>
    %93 = vector.broadcast %92 : vector<64x1xf32> to vector<64x64xf32>
    %94 = arith.subf %90, %93 : vector<64x64xf32>
    %95 = math.exp %94 : vector<64x64xf32>
    %cst_47 = arith.constant dense<0.000000e+00> : vector<64xf32>
    %96 = vector.multi_reduction <add>, %95, %cst_47 [1] : vector<64x64xf32> to vector<64xf32>
    %97 = vector.shape_cast %96 : vector<64xf32> to vector<64x1xf32>
    %98 = vector.broadcast %97 : vector<64x1xf32> to vector<64x64xf32>
    %99 = arith.divf %95, %98 : vector<64x64xf32>
    %100 = arith.truncf %99 : vector<64x64xf32> to vector<64x64xbf16>
    %cst_48 = arith.constant dense<0.000000e+00> : vector<64x64xf32>
    %101 = tpu.matmul %100, %89, %cst_48 {dimension_numbers = #tpu.dot_dimension_numbers<[1], [0], [0], [1], [0, 0, 1, 1], [], []>} : vector<64x64xbf16>, vector<64x64xbf16>, vector<64x64xf32> -> vector<64x64xf32>
    %102 = arith.truncf %101 : vector<64x64xf32> to vector<64x64xbf16>
    %c0_49 = arith.constant 0 : index
    %c384 = arith.constant 384 : index
    %103 = vector.load %arg6[%c0_49, %c384] : memref<64x1536xbf16, #tpu.memory_space<vmem>>, vector<64x64xbf16>
    %c0_50 = arith.constant 0 : index
    %c896 = arith.constant 896 : index
    %104 = vector.load %arg6[%c0_50, %c896] : memref<64x1536xbf16, #tpu.memory_space<vmem>>, vector<64x64xbf16>
    %c0_51 = arith.constant 0 : index
    %c1408 = arith.constant 1408 : index
    %105 = vector.load %arg6[%c0_51, %c1408] : memref<64x1536xbf16, #tpu.memory_space<vmem>>, vector<64x64xbf16>
    %cst_52 = arith.constant dense<0.000000e+00> : vector<64x64xf32>
    %106 = tpu.matmul %103, %104, %cst_52 {dimension_numbers = #tpu.dot_dimension_numbers<[1], [1], [0], [0], [0, 0, 1, 0], [], []>} : vector<64x64xbf16>, vector<64x64xbf16>, vector<64x64xf32> -> vector<64x64xf32>
    %cst_53 = arith.constant dense<0xFF800000> : vector<64xf32>
    %107 = vector.multi_reduction <maximumf>, %106, %cst_53 [1] : vector<64x64xf32> to vector<64xf32>
    %108 = vector.shape_cast %107 : vector<64xf32> to vector<64x1xf32>
    %109 = vector.broadcast %108 : vector<64x1xf32> to vector<64x64xf32>
    %110 = arith.subf %106, %109 : vector<64x64xf32>
    %111 = math.exp %110 : vector<64x64xf32>
    %cst_54 = arith.constant dense<0.000000e+00> : vector<64xf32>
    %112 = vector.multi_reduction <add>, %111, %cst_54 [1] : vector<64x64xf32> to vector<64xf32>
    %113 = vector.shape_cast %112 : vector<64xf32> to vector<64x1xf32>
    %114 = vector.broadcast %113 : vector<64x1xf32> to vector<64x64xf32>
    %115 = arith.divf %111, %114 : vector<64x64xf32>
    %116 = arith.truncf %115 : vector<64x64xf32> to vector<64x64xbf16>
    %cst_55 = arith.constant dense<0.000000e+00> : vector<64x64xf32>
    %117 = tpu.matmul %116, %105, %cst_55 {dimension_numbers = #tpu.dot_dimension_numbers<[1], [0], [0], [1], [0, 0, 1, 1], [], []>} : vector<64x64xbf16>, vector<64x64xbf16>, vector<64x64xf32> -> vector<64x64xf32>
    %118 = arith.truncf %117 : vector<64x64xf32> to vector<64x64xbf16>
    %c0_56 = arith.constant 0 : index
    %c448 = arith.constant 448 : index
    %119 = vector.load %arg6[%c0_56, %c448] : memref<64x1536xbf16, #tpu.memory_space<vmem>>, vector<64x64xbf16>
    %c0_57 = arith.constant 0 : index
    %c960 = arith.constant 960 : index
    %120 = vector.load %arg6[%c0_57, %c960] : memref<64x1536xbf16, #tpu.memory_space<vmem>>, vector<64x64xbf16>
    %c0_58 = arith.constant 0 : index
    %c1472 = arith.constant 1472 : index
    %121 = vector.load %arg6[%c0_58, %c1472] : memref<64x1536xbf16, #tpu.memory_space<vmem>>, vector<64x64xbf16>
    %cst_59 = arith.constant dense<0.000000e+00> : vector<64x64xf32>
    %122 = tpu.matmul %119, %120, %cst_59 {dimension_numbers = #tpu.dot_dimension_numbers<[1], [1], [0], [0], [0, 0, 1, 0], [], []>} : vector<64x64xbf16>, vector<64x64xbf16>, vector<64x64xf32> -> vector<64x64xf32>
    %cst_60 = arith.constant dense<0xFF800000> : vector<64xf32>
    %123 = vector.multi_reduction <maximumf>, %122, %cst_60 [1] : vector<64x64xf32> to vector<64xf32>
    %124 = vector.shape_cast %123 : vector<64xf32> to vector<64x1xf32>
    %125 = vector.broadcast %124 : vector<64x1xf32> to vector<64x64xf32>
    %126 = arith.subf %122, %125 : vector<64x64xf32>
    %127 = math.exp %126 : vector<64x64xf32>
    %cst_61 = arith.constant dense<0.000000e+00> : vector<64xf32>
    %128 = vector.multi_reduction <add>, %127, %cst_61 [1] : vector<64x64xf32> to vector<64xf32>
    %129 = vector.shape_cast %128 : vector<64xf32> to vector<64x1xf32>
    %130 = vector.broadcast %129 : vector<64x1xf32> to vector<64x64xf32>
    %131 = arith.divf %127, %130 : vector<64x64xf32>
    %132 = arith.truncf %131 : vector<64x64xf32> to vector<64x64xbf16>
    %cst_62 = arith.constant dense<0.000000e+00> : vector<64x64xf32>
    %133 = tpu.matmul %132, %121, %cst_62 {dimension_numbers = #tpu.dot_dimension_numbers<[1], [0], [0], [1], [0, 0, 1, 1], [], []>} : vector<64x64xbf16>, vector<64x64xbf16>, vector<64x64xf32> -> vector<64x64xf32>
    %134 = arith.truncf %133 : vector<64x64xf32> to vector<64x64xbf16>
    %135 = tpu.concatenate %22, %38, %54, %70, %86, %102, %118, %134 in 1 : vector<64x64xbf16>, vector<64x64xbf16>, vector<64x64xbf16>, vector<64x64xbf16>, vector<64x64xbf16>, vector<64x64xbf16>, vector<64x64xbf16>, vector<64x64xbf16> -> vector<64x512xbf16>
    %c0_63 = arith.constant 0 : index
    %c0_64 = arith.constant 0 : index
    %136 = vector.load %arg3[%c0_63, %c0_64] : memref<512x128xbf16, #tpu.memory_space<vmem>>, vector<512x128xbf16>
    %cst_65 = arith.constant dense<0.000000e+00> : vector<64x128xf32>
    %137 = tpu.matmul %135, %136, %cst_65 {dimension_numbers = #tpu.dot_dimension_numbers<[1], [0], [0], [1], [0, 0, 1, 1], [], []>} : vector<64x512xbf16>, vector<512x128xbf16>, vector<64x128xf32> -> vector<64x128xf32>
    %c0_66 = arith.constant 0 : index
    %c0_67 = arith.constant 0 : index
    %138 = vector.load %arg4[%c0_66, %c0_67] : memref<1x128xf32, #tpu.memory_space<vmem>>, vector<1x128xf32>
    %139 = vector.broadcast %138 : vector<1x128xf32> to vector<64x128xf32>
    %140 = arith.addf %137, %139 : vector<64x128xf32>
    %c0_68 = arith.constant 0 : index
    %c0_69 = arith.constant 0 : index
    %c0_70 = arith.constant 0 : index
    %141 = vector.load %arg5[%c0_68, %c0_69, %c0_70] : memref<1x64x128xf32, #tpu.memory_space<vmem>>, vector<1x64x128xf32>
    %142 = vector.shape_cast %141 : vector<1x64x128xf32> to vector<64x128xf32>
    %143 = vector.shape_cast %140 : vector<64x128xf32> to vector<1x64x128xf32>
    tpu.vector_store %arg5[%c0_68, %c0_69, %c0_70], %143 {strides = array<i32>} : memref<1x64x128xf32, #tpu.memory_space<vmem>>, vector<1x64x128xf32>,
    return
  }
  func.func @transform_0(%arg0: i32) -> (i32, i32, i32) {
    %c0_i32 = arith.constant 0 : i32
    %c0_i32_0 = arith.constant 0 : i32
    %c0_i32_1 = arith.constant 0 : i32
    return %arg0, %c0_i32, %c0_i32_0 : i32, i32, i32
  }
  func.func @transform_1(%arg0: i32) -> (i32, i32) {
    %c0_i32 = arith.constant 0 : i32
    %c0_i32_0 = arith.constant 0 : i32
    %c0_i32_1 = arith.constant 0 : i32
    return %c0_i32, %c0_i32_0 : i32, i32
  }
  func.func @transform_2(%arg0: i32) -> (i32, i32) {
    %c0_i32 = arith.constant 0 : i32
    %c0_i32_0 = arith.constant 0 : i32
    %c0_i32_1 = arith.constant 0 : i32
    return %c0_i32, %c0_i32_0 : i32, i32
  }
  func.func @transform_3(%arg0: i32) -> (i32, i32) {
    %c0_i32 = arith.constant 0 : i32
    %c0_i32_0 = arith.constant 0 : i32
    %c0_i32_1 = arith.constant 0 : i32
    return %c0_i32, %c0_i32_0 : i32, i32
  }
  func.func @transform_4(%arg0: i32) -> (i32, i32, i32) {
    %c0_i32 = arith.constant 0 : i32
    %c0_i32_0 = arith.constant 0 : i32
    %c0_i32_1 = arith.constant 0 : i32
    return %arg0, %c0_i32, %c0_i32_0 : i32, i32, i32
  }
}

</mosaic_0001>

<llo_original>
// kernel: attention_forward.1
$region0: #{attention_forward.1}
  #allocation0 [shape = 'u32[]', space=smem, size = 0x4, offset = 0x4, fixed_abs, tag = 'smem constant byte address 0x4 - core index']
  #allocation1 [shape = 'u32[144,128]{1,0:T(1,128)}', space=vmem, size = 0x12000, scoped, tag = 'internal scratch']
  #allocation2 [shape = 'bf16[64,1536]{1,0:T(16,128)(2,1)}', space=vmem, size = 0x30000, scoped, tag = 'scratch operand']
  %s0 = inlined_call_operand.hbm [shape: f32[2,64,128], index: 0, kind: input, shape index: {}]
  %s1 = inlined_call_operand.hbm [shape: bf16[128,1536], index: 1, kind: input, shape index: {}]
  %s2 = inlined_call_operand.hbm [shape: bf16[512,128], index: 2, kind: input, shape index: {}]
  %s3 = inlined_call_operand.vmem [shape: f32[1,128], index: 3, kind: input, shape index: {}]
  %s4 = inlined_call_operand.hbm [shape: f32[2,64,128], index: 4, kind: output, shape index: {}]
  %s5 = sld [smem:[#allocation0]]
  $region61: #{attention_forward.1} parent=0
    _
  %s7 = ssub.s32 1, %s5
  %s8 = scalar_select 0, %s7, %s5
  $region1: #{attention_forward.1} parent=0
    #allocation3 [shape = 'u8[65536]{0}', space=vmem, size = 0x10000, scoped, tag = 'input window, operand 0']
    #allocation4 [shape = 's32[2]{0}', space=sflag, size = 0x8, scoped, tag = 'scoped memory for attention_forward.1']
    #allocation5 [shape = 's32[2]{0}', space=sflag, size = 0x8, scoped, tag = 'scoped memory for attention_forward.1']
    #allocation6 [shape = 'u8[393216]{0}', space=vmem, size = 0x60000, scoped, tag = 'input window, operand 1, single buffered']
    #allocation7 [shape = 's32[1]{0}', space=sflag, size = 0x4, scoped, tag = 'scoped memory for attention_forward.1']
    #allocation8 [shape = 'u8[131072]{0}', space=vmem, size = 0x20000, scoped, tag = 'input window, operand 2, single buffered']
    #allocation9 [shape = 'u8[65536]{0}', space=vmem, size = 0x10000, scoped, tag = 'output window, operand 0']
    %9 = vsyncpa [#allocation4], 0
    %s10 = scalar_lea.sflag [#allocation4], 1
    %11 = vsyncpa %s10, 0
    %12 = vsyncpa [#allocation7], 0
    %13 = vsyncpa [#allocation5], 0
    %s14 = scalar_lea.sflag [#allocation5], 1
    %15 = vsyncpa %s14, 0
    loop: start=0, step=1, limit=4
    $region2: #{attention_forward.1} parent=1 // loop_pre_header
      _
    $region3: #{attention_forward.1} parent=1 // loop_header
      %s17 = sphi 0, %s21
      %p18 = scmp.ge.s32.totalorder %s17, 4
      %s27 = sphi 0, %s29
      %s30 = sphi 0, %s27
      %s31 = sphi 0, %s30
      %s47 = sphi 0, %s31
      %s51 = sphi 0, %s51
      %s53 = sphi 0, %s51
      %s54 = sphi 0, %s53
      %s68 = sphi 0, %s54
      %s72 = sphi 0, %s72
      %s74 = sphi 0, %s72
      %s75 = sphi 0, %s74
      %s89 = sphi 0, %s75
      %s93 = sphi 0, %s93
      %s95 = sphi 0, %s93
      %s96 = sphi 0, %s95
      %s110 = sphi 0, %s96
      %s116 = sphi 0, %s118
      %s119 = sphi 0, %s116
      %s120 = sphi 0, %s119
      %s136 = sphi 0, %s120
    $region4: #{attention_forward.1} parent=1 // loop_header_branch
      %20 = sbr.rel (%p18) target = $region8
    $region5: #{attention_forward.1} parent=1 // loop_body
      %s22 = ssub.s32 %s17, 1
      %s23 = ssub.s32 %s17, 2
      %s24 = sadd.s32 %s17, 1
      %s25 = ssub.s32 %s17, %s24
      %p26 = scmp.eq.s32.totalorder %s25, 0
      %s28 = sadd.s32 %s27, 1
      %s29 = scalar_select %p26, %s27, %s28
      %p32 = pneg %p26
      %p33 = scmp.eq.s32.totalorder %s17, 1
      %p34 = por %p32, %p33
      %p35 = scmp.ne.s32.totalorder %s27, %s30
      %p36 = scmp.eq.s32.totalorder %s17, 0
      %p37 = por %p35, %p36
      %p38 = scmp.ne.s32.totalorder %s27, %s30
      %p39 = scmp.eq.s32.totalorder %s22, 1
      %p40 = por %p38, %p39
      %p41 = scmp.ne.s32.totalorder %s30, %s31
      %p42 = scmp.eq.s32.totalorder %s22, 0
      %p43 = por %p41, %p42
      %p44 = scmp.ne.s32.totalorder %s30, %s31
      %p45 = scmp.eq.s32.totalorder %s23, 1
      %p46 = por %p44, %p45
      %p48 = scmp.ne.s32.totalorder %s31, %s47
      %p49 = scmp.eq.s32.totalorder %s23, 0
      %p50 = por %p48, %p49
      %s52 = sadd.s32 %s51, 1
      %p55 = scmp.eq.s32.totalorder %s17, 1
      %p56 = scmp.ne.s32.totalorder %s51, %s53
      %p57 = scmp.eq.s32.totalorder %s17, 0
      %p58 = por %p56, %p57
      %p59 = scmp.ne.s32.totalorder %s51, %s53
      %p60 = scmp.eq.s32.totalorder %s22, 1
      %p61 = por %p59, %p60
      %p62 = scmp.ne.s32.totalorder %s53, %s54
      %p63 = scmp.eq.s32.totalorder %s22, 0
      %p64 = por %p62, %p63
      %p65 = scmp.ne.s32.totalorder %s53, %s54
      %p66 = scmp.eq.s32.totalorder %s23, 1
      %p67 = por %p65, %p66
      %p69 = scmp.ne.s32.totalorder %s54, %s68
      %p70 = scmp.eq.s32.totalorder %s23, 0
      %p71 = por %p69, %p70
      %s73 = sadd.s32 %s72, 1
      %p76 = scmp.eq.s32.totalorder %s17, 1
      %p77 = scmp.ne.s32.totalorder %s72, %s74
      %p78 = scmp.eq.s32.totalorder %s17, 0
      %p79 = por %p77, %p78
      %p80 = scmp.ne.s32.totalorder %s72, %s74
      %p81 = scmp.eq.s32.totalorder %s22, 1
      %p82 = por %p80, %p81
      %p83 = scmp.ne.s32.totalorder %s74, %s75
      %p84 = scmp.eq.s32.totalorder %s22, 0
      %p85 = por %p83, %p84
      %p86 = scmp.ne.s32.totalorder %s74, %s75
      %p87 = scmp.eq.s32.totalorder %s23, 1
      %p88 = por %p86, %p87
      %p90 = scmp.ne.s32.totalorder %s75, %s89
      %p91 = scmp.eq.s32.totalorder %s23, 0
      %p92 = por %p90, %p91
      %s94 = sadd.s32 %s93, 1
      %p97 = scmp.eq.s32.totalorder %s17, 1
      %p98 = scmp.ne.s32.totalorder %s93, %s95
      %p99 = scmp.eq.s32.totalorder %s17, 0
      %p100 = por %p98, %p99
      %p101 = scmp.ne.s32.totalorder %s93, %s95
      %p102 = scmp.eq.s32.totalorder %s22, 1
      %p103 = por %p101, %p102
      %p104 = scmp.ne.s32.totalorder %s95, %s96
      %p105 = scmp.eq.s32.totalorder %s22, 0
      %p106 = por %p104, %p105
      %p107 = scmp.ne.s32.totalorder %s95, %s96
      %p108 = scmp.eq.s32.totalorder %s23, 1
      %p109 = por %p107, %p108
      %p111 = scmp.ne.s32.totalorder %s96, %s110
      %p112 = scmp.eq.s32.totalorder %s23, 0
      %p113 = por %p111, %p112
      %s114 = ssub.s32 %s17, %s24
      %p115 = scmp.eq.s32.totalorder %s114, 0
      %s117 = sadd.s32 %s116, 1
      %s118 = scalar_select %p115, %s116, %s117
      %p121 = pneg %p115
      %p122 = scmp.eq.s32.totalorder %s17, 1
      %p123 = por %p121, %p122
      %p124 = scmp.ne.s32.totalorder %s116, %s119
      %p125 = scmp.eq.s32.totalorder %s17, 0
      %p126 = por %p124, %p125
      %p127 = scmp.ne.s32.totalorder %s116, %s119
      %p128 = scmp.eq.s32.totalorder %s22, 1
      %p129 = por %p127, %p128
      %p130 = scmp.ne.s32.totalorder %s119, %s120
      %p131 = scmp.eq.s32.totalorder %s22, 0
      %p132 = por %p130, %p131
      %p133 = scmp.ne.s32.totalorder %s119, %s120
      %p134 = scmp.eq.s32.totalorder %s23, 1
      %p135 = por %p133, %p134
      %p137 = scmp.ne.s32.totalorder %s120, %s136
      %p138 = scmp.eq.s32.totalorder %s23, 0
      %p139 = por %p137, %p138
      %p140 = scmp.le.s32.totalorder 1, %s17
      %p141 = scmp.lt.s32.totalorder %s17, 3
      %p142 = pnand %p140, %p141
      %p143 = pneg %p142
      // Predicated region
      $region9: #{attention_forward.1} parent=5 // pred_check
        _
      $region10: #{attention_forward.1} parent=5 // pred_check_branch
        %145 = sbr.rel (%p142) target = $region12
      $region11: #{attention_forward.1} parent=5 // pred_region
        %s146 = ssub.s32 %s17, 1
        // Predicated region
        $region13: #{attention_forward.1} parent=11 // pred_check
          %p147 = pneg %p64
        $region14: #{attention_forward.1} parent=11 // pred_check_branch
          %149 = sbr.rel (%p147) target = $region16
        $region15: #{attention_forward.1} parent=11 // pred_region
          %s151 = ssub.s32 12288, 12288
          %152 = vsyncadd [#allocation7], %s151
          %s153 = sshll.u32 [#allocation6], 4
          %s154 = int_to_ptr.vmem [resolvable:$true] %s153
          %159 = dma.hbm_to_vmem [thread:$0]  %s1, 12288, %s154, [#allocation7], 768, 768, 48
        $region16: #{attention_forward.1} parent=11 // pred_fallthru
          _
        // Predicated region
        $region17: #{attention_forward.1} parent=11 // pred_check
          %p160 = pneg %p85
        $region18: #{attention_forward.1} parent=11 // pred_check_branch
          %162 = sbr.rel (%p160) target = $region20
        $region19: #{attention_forward.1} parent=11 // pred_region
          %s164 = ssub.s32 4096, 4096
          %165 = vsyncadd [#allocation7], %s164
          %s166 = sshll.u32 [#allocation8], 4
          %s167 = int_to_ptr.vmem [resolvable:$true] %s166
          %172 = dma.hbm_to_vmem [thread:$0]  %s2, 4096, %s167, [#allocation7], 64, 64, 4
        $region20: #{attention_forward.1} parent=11 // pred_fallthru
          _
        // Predicated region
        $region21: #{attention_forward.1} parent=11 // pred_check
          %p173 = pneg %p106
        $region22: #{attention_forward.1} parent=11 // pred_check_branch
          %175 = sbr.rel (%p173) target = $region24
        $region23: #{attention_forward.1} parent=11 // pred_region
          _
        $region24: #{attention_forward.1} parent=11 // pred_fallthru
          _
      $region12: #{attention_forward.1} parent=5 // pred_fallthru
        _
      %p176 = scmp.lt.s32.totalorder %s17, 2
      // Predicated region
      $region25: #{attention_forward.1} parent=5 // pred_check
        %p177 = pneg %p176
      $region26: #{attention_forward.1} parent=5 // pred_check_branch
        %179 = sbr.rel (%p177) target = $region28
      $region27: #{attention_forward.1} parent=5 // pred_region
        // Predicated region
        $region29: #{attention_forward.1} parent=27 // pred_check
          %p180 = pneg %p37
        $region30: #{attention_forward.1} parent=27 // pred_check_branch
          %182 = sbr.rel (%p180) target = $region32
        $region31: #{attention_forward.1} parent=27 // pred_region
          %s183 = sand.u32 %s27, 1
          %s184 = scalar_lea.sflag [#allocation4], %s183
          %s185 = sand.u32 %s27, 1
          %s186 = smul.addr %s185, 64
          %s187 = scalar_lea.vmem [#allocation3], %s186
          %s189 = ssub.s32 1024, 1024
          %190 = vsyncadd %s184, %s189
          %s191 = smul.addr %s17, 8
          %s192 = smul.addr %s191, 128
          %s193 = scalar_lea.hbm %s0, %s192
          %s194 = sshll.u32 %s187, 4
          %s195 = int_to_ptr.vmem [resolvable:$true] %s194
          %200 = dma.hbm_to_vmem [thread:$0]  %s193, 1024, %s195, %s184, 128, 128, 8
        $region32: #{attention_forward.1} parent=27 // pred_fallthru
          _
      $region28: #{attention_forward.1} parent=5 // pred_fallthru
        _
      %p201 = scmp.le.s32.totalorder 1, %s17
      %p202 = scmp.lt.s32.totalorder %s17, 3
      %p203 = pnand %p201, %p202
      %p204 = pneg %p203
      // Predicated region
      $region33: #{attention_forward.1} parent=5 // pred_check
        _
      $region34: #{attention_forward.1} parent=5 // pred_check_branch
        %206 = sbr.rel (%p203) target = $region36
      $region35: #{attention_forward.1} parent=5 // pred_region
        %s207 = ssub.s32 %s17, 1
        %s208 = sand.u32 %s30, 1
        %s209 = scalar_lea.sflag [#allocation4], %s208
        %s210 = sand.u32 %s30, 1
        %s211 = smul.addr %s210, 64
        %s212 = scalar_lea.vmem [#allocation3], %s211
        // Predicated region
        $region37: #{attention_forward.1} parent=35 // pred_check
          %p213 = pneg %p43
        $region38: #{attention_forward.1} parent=35 // pred_check_branch
          %215 = sbr.rel (%p213) target = $region40
        $region39: #{attention_forward.1} parent=35 // pred_region
          %216 = dma.done %s209, 1024
        $region40: #{attention_forward.1} parent=35 // pred_fallthru
          _
        // Predicated region
        $region41: #{attention_forward.1} parent=35 // pred_check
          %p217 = pneg %p64
        $region42: #{attention_forward.1} parent=35 // pred_check_branch
          %219 = sbr.rel (%p217) target = $region44
        $region43: #{attention_forward.1} parent=35 // pred_region
          %220 = dma.done [#allocation7], 12288
        $region44: #{attention_forward.1} parent=35 // pred_fallthru
          _
        // Predicated region
        $region45: #{attention_forward.1} parent=35 // pred_check
          %p221 = pneg %p85
        $region46: #{attention_forward.1} parent=35 // pred_check_branch
          %223 = sbr.rel (%p221) target = $region48
        $region47: #{attention_forward.1} parent=35 // pred_region
          %224 = dma.done [#allocation7], 4096
        $region48: #{attention_forward.1} parent=35 // pred_fallthru
          _
        %s225 = sand.u32 %s30, 1
        %s226 = scalar_lea.sflag [#allocation4], %s225
        %s227 = sand.u32 %s30, 1
        %s228 = smul.addr %s227, 64
        %s229 = scalar_lea.vmem [#allocation3], %s228
        %p230 = pneg %p43
        %p231 = pneg %p40
        %p232 = pneg %p64
        %p233 = pneg %p61
        %p234 = pneg %p85
        %p235 = pneg %p82
        %p236 = pneg %p106
        %p237 = pneg %p103
        %p238 = pneg %p132
        %p239 = pneg %p129
        %s240 = sand.u32 %s119, 1
        %s241 = scalar_lea.sflag [#allocation5], %s240
        %s242 = sand.u32 %s119, 1
        %s243 = smul.addr %s242, 64
        %s244 = scalar_lea.vmem [#allocation9], %s243
        %v246 = vld [vmem:[%s212] sm:$0xff]
        %v247 = vld [vmem:[%s212 + $0x8] sm:$0xff]
        %v248 = vld [vmem:[%s212 + $0x10] sm:$0xff]
        %v249 = vld [vmem:[%s212 + $0x18] sm:$0xff]
        %v250 = vld [vmem:[%s212 + $0x20] sm:$0xff]
        %v251 = vld [vmem:[%s212 + $0x28] sm:$0xff]
        %v252 = vld [vmem:[%s212 + $0x30] sm:$0xff]
        %v253 = vld [vmem:[%s212 + $0x38] sm:$0xff]
        %v254 = vpack.c.bf16 %v247, %v246
        %v255 = vpack.c.bf16 %v249, %v248
        %v256 = vpack.c.bf16 %v251, %v250
        %v257 = vpack.c.bf16 %v253, %v252
        %v258 = vld [vmem:[#allocation6] sm:$0xff]
        %v259 = vld [vmem:[#allocation6 + $0x8] sm:$0xff]
        %v260 = vld [vmem:[#allocation6 + $0x10] sm:$0xff]
        %v261 = vld [vmem:[#allocation6 + $0x18] sm:$0xff]
        %v262 = vld [vmem:[#allocation6 + $0x20] sm:$0xff]
        %v263 = vld [vmem:[#allocation6 + $0x28] sm:$0xff]
        %v264 = vld [vmem:[#allocation6 + $0x30] sm:$0xff]
        %v265 = vld [vmem:[#allocation6 + $0x38] sm:$0xff]
        %v266 = vld [vmem:[#allocation6 + $0x40] sm:$0xff]
        %v267 = vld [vmem:[#allocation6 + $0x48] sm:$0xff]
        %v268 = vld [vmem:[#allocation6 + $0x50] sm:$0xff]
        %v269 = vld [vmem:[#allocation6 + $0x58] sm:$0xff]
        %v270 = vld [vmem:[#allocation6 + $0x60] sm:$0xff]
        %v271 = vld [vmem:[#allocation6 + $0x68] sm:$0xff]
        %v272 = vld [vmem:[#allocation6 + $0x70] sm:$0xff]
        %v273 = vld [vmem:[#allocation6 + $0x78] sm:$0xff]
        %v274 = vld [vmem:[#allocation6 + $0x80] sm:$0xff]
        %v275 = vld [vmem:[#allocation6 + $0x88] sm:$0xff]
        %v276 = vld [vmem:[#allocation6 + $0x90] sm:$0xff]
        %v277 = vld [vmem:[#allocation6 + $0x98] sm:$0xff]
        %v278 = vld [vmem:[#allocation6 + $0xa0] sm:$0xff]
        %v279 = vld [vmem:[#allocation6 + $0xa8] sm:$0xff]
        %v280 = vld [vmem:[#allocation6 + $0xb0] sm:$0xff]
        %v281 = vld [vmem:[#allocation6 + $0xb8] sm:$0xff]
        %v282 = vld [vmem:[#allocation6 + $0xc0] sm:$0xff]
        %v283 = vld [vmem:[#allocation6 + $0xc8] sm:$0xff]
        %v284 = vld [vmem:[#allocation6 + $0xd0] sm:$0xff]
        %v285 = vld [vmem:[#allocation6 + $0xd8] sm:$0xff]
        %v286 = vld [vmem:[#allocation6 + $0xe0] sm:$0xff]
        %v287 = vld [vmem:[#allocation6 + $0xe8] sm:$0xff]
        %v288 = vld [vmem:[#allocation6 + $0xf0] sm:$0xff]
        %v289 = vld [vmem:[#allocation6 + $0xf8] sm:$0xff]
        %v290 = vld [vmem:[#allocation6 + $0x100] sm:$0xff]
        %v291 = vld [vmem:[#allocation6 + $0x108] sm:$0xff]
        %v292 = vld [vmem:[#allocation6 + $0x110] sm:$0xff]
        %v293 = vld [vmem:[#allocation6 + $0x118] sm:$0xff]
        %v294 = vld [vmem:[#allocation6 + $0x120] sm:$0xff]
        %v295 = vld [vmem:[#allocation6 + $0x128] sm:$0xff]
        %v296 = vld [vmem:[#allocation6 + $0x130] sm:$0xff]
        %v297 = vld [vmem:[#allocation6 + $0x138] sm:$0xff]
        %v298 = vld [vmem:[#allocation6 + $0x140] sm:$0xff]
        %v299 = vld [vmem:[#allocation6 + $0x148] sm:$0xff]
        %v300 = vld [vmem:[#allocation6 + $0x150] sm:$0xff]
        %v301 = vld [vmem:[#allocation6 + $0x158] sm:$0xff]
        %v302 = vld [vmem:[#allocation6 + $0x160] sm:$0xff]
        %v303 = vld [vmem:[#allocation6 + $0x168] sm:$0xff]
        %v304 = vld [vmem:[#allocation6 + $0x170] sm:$0xff]
        %v305 = vld [vmem:[#allocation6 + $0x178] sm:$0xff]
        %v306 = vld [vmem:[#allocation6 + $0x180] sm:$0xff]
        %v307 = vld [vmem:[#allocation6 + $0x188] sm:$0xff]
        %v308 = vld [vmem:[#allocation6 + $0x190] sm:$0xff]
        %v309 = vld [vmem:[#allocation6 + $0x198] sm:$0xff]
        %v310 = vld [vmem:[#allocation6 + $0x1a0] sm:$0xff]
        %v311 = vld [vmem:[#allocation6 + $0x1a8] sm:$0xff]
        %v312 = vld [vmem:[#allocation6 + $0x1b0] sm:$0xff]
        %v313 = vld [vmem:[#allocation6 + $0x1b8] sm:$0xff]
        %v314 = vld [vmem:[#allocation6 + $0x1c0] sm:$0xff]
        %v315 = vld [vmem:[#allocation6 + $0x1c8] sm:$0xff]
        %v316 = vld [vmem:[#allocation6 + $0x1d0] sm:$0xff]
        %v317 = vld [vmem:[#allocation6 + $0x1d8] sm:$0xff]
        %v318 = vld [vmem:[#allocation6 + $0x1e0] sm:$0xff]
        %v319 = vld [vmem:[#allocation6 + $0x1e8] sm:$0xff]
        %v320 = vld [vmem:[#allocation6 + $0x1f0] sm:$0xff]
        %v321 = vld [vmem:[#allocation6 + $0x1f8] sm:$0xff]
        %v322 = vld [vmem:[#allocation6 + $0x200] sm:$0xff]
        %v323 = vld [vmem:[#allocation6 + $0x208] sm:$0xff]
        %v324 = vld [vmem:[#allocation6 + $0x210] sm:$0xff]
        %v325 = vld [vmem:[#allocation6 + $0x218] sm:$0xff]
        %v326 = vld [vmem:[#allocation6 + $0x220] sm:$0xff]
        %v327 = vld [vmem:[#allocation6 + $0x228] sm:$0xff]
        %v328 = vld [vmem:[#allocation6 + $0x230] sm:$0xff]
        %v329 = vld [vmem:[#allocation6 + $0x238] sm:$0xff]
        %v330 = vld [vmem:[#allocation6 + $0x240] sm:$0xff]
        %v331 = vld [vmem:[#allocation6 + $0x248] sm:$0xff]
        %v332 = vld [vmem:[#allocation6 + $0x250] sm:$0xff]
        %v333 = vld [vmem:[#allocation6 + $0x258] sm:$0xff]
        %v334 = vld [vmem:[#allocation6 + $0x260] sm:$0xff]
        %v335 = vld [vmem:[#allocation6 + $0x268] sm:$0xff]
        %v336 = vld [vmem:[#allocation6 + $0x270] sm:$0xff]
        %v337 = vld [vmem:[#allocation6 + $0x278] sm:$0xff]
        %v338 = vld [vmem:[#allocation6 + $0x280] sm:$0xff]
        %v339 = vld [vmem:[#allocation6 + $0x288] sm:$0xff]
        %v340 = vld [vmem:[#allocation6 + $0x290] sm:$0xff]
        %v341 = vld [vmem:[#allocation6 + $0x298] sm:$0xff]
        %v342 = vld [vmem:[#allocation6 + $0x2a0] sm:$0xff]
        %v343 = vld [vmem:[#allocation6 + $0x2a8] sm:$0xff]
        %v344 = vld [vmem:[#allocation6 + $0x2b0] sm:$0xff]
        %v345 = vld [vmem:[#allocation6 + $0x2b8] sm:$0xff]
        %v346 = vld [vmem:[#allocation6 + $0x2c0] sm:$0xff]
        %v347 = vld [vmem:[#allocation6 + $0x2c8] sm:$0xff]
        %v348 = vld [vmem:[#allocation6 + $0x2d0] sm:$0xff]
        %v349 = vld [vmem:[#allocation6 + $0x2d8] sm:$0xff]
        %v350 = vld [vmem:[#allocation6 + $0x2e0] sm:$0xff]
        %v351 = vld [vmem:[#allocation6 + $0x2e8] sm:$0xff]
        %v352 = vld [vmem:[#allocation6 + $0x2f0] sm:$0xff]
        %v353 = vld [vmem:[#allocation6 + $0x2f8] sm:$0xff]
        %v450 = vunpack.c.l.b16 %v258
        %v451 = vunpack.c.h.b16 %v258
        %v452 = vunpack.c.l.b16 %v259
        %v453 = vunpack.c.h.b16 %v259
        %v454 = vunpack.c.l.b16 %v260
        %v455 = vunpack.c.h.b16 %v260
        %v456 = vunpack.c.l.b16 %v261
        %v457 = vunpack.c.h.b16 %v261
        %v458 = vunpack.c.l.b16 %v262
        %v459 = vunpack.c.h.b16 %v262
        %v460 = vunpack.c.l.b16 %v263
        %v461 = vunpack.c.h.b16 %v263
        %v462 = vunpack.c.l.b16 %v264
        %v463 = vunpack.c.h.b16 %v264
        %v464 = vunpack.c.l.b16 %v265
        %v465 = vunpack.c.h.b16 %v265
        %v466 = vunpack.c.l.b16 %v266
        %v467 = vunpack.c.h.b16 %v266
        %v468 = vunpack.c.l.b16 %v267
        %v469 = vunpack.c.h.b16 %v267
        %v470 = vunpack.c.l.b16 %v268
        %v471 = vunpack.c.h.b16 %v268
        %v472 = vunpack.c.l.b16 %v269
        %v473 = vunpack.c.h.b16 %v269
        %v474 = vunpack.c.l.b16 %v270
        %v475 = vunpack.c.h.b16 %v270
        %v476 = vunpack.c.l.b16 %v271
        %v477 = vunpack.c.h.b16 %v271
        %v478 = vunpack.c.l.b16 %v272
        %v479 = vunpack.c.h.b16 %v272
        %v480 = vunpack.c.l.b16 %v273
        %v481 = vunpack.c.h.b16 %v273
        %v482 = vunpack.c.l.b16 %v274
        %v483 = vunpack.c.h.b16 %v274
        %v484 = vunpack.c.l.b16 %v275
        %v485 = vunpack.c.h.b16 %v275
        %v486 = vunpack.c.l.b16 %v276
        %v487 = vunpack.c.h.b16 %v276
        %v488 = vunpack.c.l.b16 %v277
        %v489 = vunpack.c.h.b16 %v277
        %v490 = vunpack.c.l.b16 %v278
        %v491 = vunpack.c.h.b16 %v278
        %v492 = vunpack.c.l.b16 %v279
        %v493 = vunpack.c.h.b16 %v279
        %v494 = vunpack.c.l.b16 %v280
        %v495 = vunpack.c.h.b16 %v280
        %v496 = vunpack.c.l.b16 %v281
        %v497 = vunpack.c.h.b16 %v281
        %v498 = vunpack.c.l.b16 %v282
        %v499 = vunpack.c.h.b16 %v282
        %v500 = vunpack.c.l.b16 %v283
        %v501 = vunpack.c.h.b16 %v283
        %v502 = vunpack.c.l.b16 %v284
        %v503 = vunpack.c.h.b16 %v284
        %v504 = vunpack.c.l.b16 %v285
        %v505 = vunpack.c.h.b16 %v285
        %v506 = vunpack.c.l.b16 %v286
        %v507 = vunpack.c.h.b16 %v286
        %v508 = vunpack.c.l.b16 %v287
        %v509 = vunpack.c.h.b16 %v287
        %v510 = vunpack.c.l.b16 %v288
        %v511 = vunpack.c.h.b16 %v288
        %v512 = vunpack.c.l.b16 %v289
        %v513 = vunpack.c.h.b16 %v289
        %v514 = vunpack.c.l.b16 %v290
        %v515 = vunpack.c.h.b16 %v290
        %v516 = vunpack.c.l.b16 %v291
        %v517 = vunpack.c.h.b16 %v291
        %v518 = vunpack.c.l.b16 %v292
        %v519 = vunpack.c.h.b16 %v292
        %v520 = vunpack.c.l.b16 %v293
        %v521 = vunpack.c.h.b16 %v293
        %v522 = vunpack.c.l.b16 %v294
        %v523 = vunpack.c.h.b16 %v294
        %v524 = vunpack.c.l.b16 %v295
        %v525 = vunpack.c.h.b16 %v295
        %v526 = vunpack.c.l.b16 %v296
        %v527 = vunpack.c.h.b16 %v296
        %v528 = vunpack.c.l.b16 %v297
        %v529 = vunpack.c.h.b16 %v297
        %v530 = vunpack.c.l.b16 %v298
        %v531 = vunpack.c.h.b16 %v298
        %v532 = vunpack.c.l.b16 %v299
        %v533 = vunpack.c.h.b16 %v299
        %v534 = vunpack.c.l.b16 %v300
        %v535 = vunpack.c.h.b16 %v300
        %v536 = vunpack.c.l.b16 %v301
        %v537 = vunpack.c.h.b16 %v301
        %v538 = vunpack.c.l.b16 %v302
        %v539 = vunpack.c.h.b16 %v302
        %v540 = vunpack.c.l.b16 %v303
        %v541 = vunpack.c.h.b16 %v303
        %v542 = vunpack.c.l.b16 %v304
        %v543 = vunpack.c.h.b16 %v304
        %v544 = vunpack.c.l.b16 %v305
        %v545 = vunpack.c.h.b16 %v305
        %v546 = vunpack.c.l.b16 %v306
        %v547 = vunpack.c.h.b16 %v306
        %v548 = vunpack.c.l.b16 %v307
        %v549 = vunpack.c.h.b16 %v307
        %v550 = vunpack.c.l.b16 %v308
        %v551 = vunpack.c.h.b16 %v308
        %v552 = vunpack.c.l.b16 %v309
        %v553 = vunpack.c.h.b16 %v309
        %v554 = vunpack.c.l.b16 %v310
        %v555 = vunpack.c.h.b16 %v310
        %v556 = vunpack.c.l.b16 %v311
        %v557 = vunpack.c.h.b16 %v311
        %v558 = vunpack.c.l.b16 %v312
        %v559 = vunpack.c.h.b16 %v312
        %v560 = vunpack.c.l.b16 %v313
        %v561 = vunpack.c.h.b16 %v313
        %v562 = vunpack.c.l.b16 %v314
        %v563 = vunpack.c.h.b16 %v314
        %v564 = vunpack.c.l.b16 %v315
        %v565 = vunpack.c.h.b16 %v315
        %v566 = vunpack.c.l.b16 %v316
        %v567 = vunpack.c.h.b16 %v316
        %v568 = vunpack.c.l.b16 %v317
        %v569 = vunpack.c.h.b16 %v317
        %v570 = vunpack.c.l.b16 %v318
        %v571 = vunpack.c.h.b16 %v318
        %v572 = vunpack.c.l.b16 %v319
        %v573 = vunpack.c.h.b16 %v319
        %v574 = vunpack.c.l.b16 %v320
        %v575 = vunpack.c.h.b16 %v320
        %v576 = vunpack.c.l.b16 %v321
        %v577 = vunpack.c.h.b16 %v321
        %v578 = vunpack.c.l.b16 %v322
        %v579 = vunpack.c.h.b16 %v322
        %v580 = vunpack.c.l.b16 %v323
        %v581 = vunpack.c.h.b16 %v323
        %v582 = vunpack.c.l.b16 %v324
        %v583 = vunpack.c.h.b16 %v324
        %v584 = vunpack.c.l.b16 %v325
        %v585 = vunpack.c.h.b16 %v325
        %v586 = vunpack.c.l.b16 %v326
        %v587 = vunpack.c.h.b16 %v326
        %v588 = vunpack.c.l.b16 %v327
        %v589 = vunpack.c.h.b16 %v327
        %v590 = vunpack.c.l.b16 %v328
        %v591 = vunpack.c.h.b16 %v328
        %v592 = vunpack.c.l.b16 %v329
        %v593 = vunpack.c.h.b16 %v329
        %v594 = vunpack.c.l.b16 %v330
        %v595 = vunpack.c.h.b16 %v330
        %v596 = vunpack.c.l.b16 %v331
        %v597 = vunpack.c.h.b16 %v331
        %v598 = vunpack.c.l.b16 %v332
        %v599 = vunpack.c.h.b16 %v332
        %v600 = vunpack.c.l.b16 %v333
        %v601 = vunpack.c.h.b16 %v333
        %v602 = vunpack.c.l.b16 %v334
        %v603 = vunpack.c.h.b16 %v334
        %v604 = vunpack.c.l.b16 %v335
        %v605 = vunpack.c.h.b16 %v335
        %v606 = vunpack.c.l.b16 %v336
        %v607 = vunpack.c.h.b16 %v336
        %v608 = vunpack.c.l.b16 %v337
        %v609 = vunpack.c.h.b16 %v337
        %v610 = vunpack.c.l.b16 %v338
        %v611 = vunpack.c.h.b16 %v338
        %v612 = vunpack.c.l.b16 %v339
        %v613 = vunpack.c.h.b16 %v339
        %v614 = vunpack.c.l.b16 %v340
        %v615 = vunpack.c.h.b16 %v340
        %v616 = vunpack.c.l.b16 %v341
        %v617 = vunpack.c.h.b16 %v341
        %v618 = vunpack.c.l.b16 %v342
        %v619 = vunpack.c.h.b16 %v342
        %v620 = vunpack.c.l.b16 %v343
        %v621 = vunpack.c.h.b16 %v343
        %v622 = vunpack.c.l.b16 %v344
        %v623 = vunpack.c.h.b16 %v344
        %v624 = vunpack.c.l.b16 %v345
        %v625 = vunpack.c.h.b16 %v345
        %v626 = vunpack.c.l.b16 %v346
        %v627 = vunpack.c.h.b16 %v346
        %v628 = vunpack.c.l.b16 %v347
        %v629 = vunpack.c.h.b16 %v347
        %v630 = vunpack.c.l.b16 %v348
        %v631 = vunpack.c.h.b16 %v348
        %v632 = vunpack.c.l.b16 %v349
        %v633 = vunpack.c.h.b16 %v349
        %v634 = vunpack.c.l.b16 %v350
        %v635 = vunpack.c.h.b16 %v350
        %v636 = vunpack.c.l.b16 %v351
        %v637 = vunpack.c.h.b16 %v351
        %v638 = vunpack.c.l.b16 %v352
        %v639 = vunpack.c.h.b16 %v352
        %v640 = vunpack.c.l.b16 %v353
        %v641 = vunpack.c.h.b16 %v353
        %v642 = vpack.c.b16 %v462, %v450
        %v643 = vpack.c.b16 %v463, %v451
        %v644 = vpack.c.b16 %v464, %v452
        %v645 = vpack.c.b16 %v465, %v453
        %v646 = vpack.c.b16 %v466, %v454
        %v647 = vpack.c.b16 %v467, %v455
        %v648 = vpack.c.b16 %v468, %v456
        %v649 = vpack.c.b16 %v469, %v457
        %v650 = vpack.c.b16 %v470, %v458
        %v651 = vpack.c.b16 %v471, %v459
        %v652 = vpack.c.b16 %v472, %v460
        %v653 = vpack.c.b16 %v473, %v461
        %v654 = vpack.c.b16 %v486, %v474
        %v655 = vpack.c.b16 %v487, %v475
        %v656 = vpack.c.b16 %v488, %v476
        %v657 = vpack.c.b16 %v489, %v477
        %v658 = vpack.c.b16 %v490, %v478
        %v659 = vpack.c.b16 %v491, %v479
        %v660 = vpack.c.b16 %v492, %v480
        %v661 = vpack.c.b16 %v493, %v481
        %v662 = vpack.c.b16 %v494, %v482
        %v663 = vpack.c.b16 %v495, %v483
        %v664 = vpack.c.b16 %v496, %v484
        %v665 = vpack.c.b16 %v497, %v485
        %v666 = vpack.c.b16 %v510, %v498
        %v667 = vpack.c.b16 %v511, %v499
        %v668 = vpack.c.b16 %v512, %v500
        %v669 = vpack.c.b16 %v513, %v501
        %v670 = vpack.c.b16 %v514, %v502
        %v671 = vpack.c.b16 %v515, %v503
        %v672 = vpack.c.b16 %v516, %v504
        %v673 = vpack.c.b16 %v517, %v505
        %v674 = vpack.c.b16 %v518, %v506
        %v675 = vpack.c.b16 %v519, %v507
        %v676 = vpack.c.b16 %v520, %v508
        %v677 = vpack.c.b16 %v521, %v509
        %v678 = vpack.c.b16 %v534, %v522
        %v679 = vpack.c.b16 %v535, %v523
        %v680 = vpack.c.b16 %v536, %v524
        %v681 = vpack.c.b16 %v537, %v525
        %v682 = vpack.c.b16 %v538, %v526
        %v683 = vpack.c.b16 %v539, %v527
        %v684 = vpack.c.b16 %v540, %v528
        %v685 = vpack.c.b16 %v541, %v529
        %v686 = vpack.c.b16 %v542, %v530
        %v687 = vpack.c.b16 %v543, %v531
        %v688 = vpack.c.b16 %v544, %v532
        %v689 = vpack.c.b16 %v545, %v533
        %v690 = vpack.c.b16 %v558, %v546
        %v691 = vpack.c.b16 %v559, %v547
        %v692 = vpack.c.b16 %v560, %v548
        %v693 = vpack.c.b16 %v561, %v549
        %v694 = vpack.c.b16 %v562, %v550
        %v695 = vpack.c.b16 %v563, %v551
        %v696 = vpack.c.b16 %v564, %v552
        %v697 = vpack.c.b16 %v565, %v553
        %v698 = vpack.c.b16 %v566, %v554
        %v699 = vpack.c.b16 %v567, %v555
        %v700 = vpack.c.b16 %v568, %v556
        %v701 = vpack.c.b16 %v569, %v557
        %v702 = vpack.c.b16 %v582, %v570
        %v703 = vpack.c.b16 %v583, %v571
        %v704 = vpack.c.b16 %v584, %v572
        %v705 = vpack.c.b16 %v585, %v573
        %v706 = vpack.c.b16 %v586, %v574
        %v707 = vpack.c.b16 %v587, %v575
        %v708 = vpack.c.b16 %v588, %v576
        %v709 = vpack.c.b16 %v589, %v577
        %v710 = vpack.c.b16 %v590, %v578
        %v711 = vpack.c.b16 %v591, %v579
        %v712 = vpack.c.b16 %v592, %v580
        %v713 = vpack.c.b16 %v593, %v581
        %v714 = vpack.c.b16 %v606, %v594
        %v715 = vpack.c.b16 %v607, %v595
        %v716 = vpack.c.b16 %v608, %v596
        %v717 = vpack.c.b16 %v609, %v597
        %v718 = vpack.c.b16 %v610, %v598
        %v719 = vpack.c.b16 %v611, %v599
        %v720 = vpack.c.b16 %v612, %v600
        %v721 = vpack.c.b16 %v613, %v601
        %v722 = vpack.c.b16 %v614, %v602
        %v723 = vpack.c.b16 %v615, %v603
        %v724 = vpack.c.b16 %v616, %v604
        %v725 = vpack.c.b16 %v617, %v605
        %v726 = vpack.c.b16 %v630, %v618
        %v727 = vpack.c.b16 %v631, %v619
        %v728 = vpack.c.b16 %v632, %v620
        %v729 = vpack.c.b16 %v633, %v621
        %v730 = vpack.c.b16 %v634, %v622
        %v731 = vpack.c.b16 %v635, %v623
        %v732 = vpack.c.b16 %v636, %v624
        %v733 = vpack.c.b16 %v637, %v625
        %v734 = vpack.c.b16 %v638, %v626
        %v735 = vpack.c.b16 %v639, %v627
        %v736 = vpack.c.b16 %v640, %v628
        %v737 = vpack.c.b16 %v641, %v629
        %834 = vmatprep.subr.bf16.mxu0 %v643
        %835 = vmatpush1.bf16.msra.mxu0 %v642
        %836 = vmatprep.subr.bf16.mxu0 %v655
        %837 = vmatpush1.bf16.msra.mxu0 %v654
        %838 = vmatprep.subr.bf16.mxu0 %v667
        %839 = vmatpush1.bf16.msra.mxu0 %v666
        %840 = vmatprep.subr.bf16.mxu0 %v679
        %841 = vmatpush1.bf16.msra.mxu0 %v678
        %842 = vmatprep.subr.bf16.mxu0 %v691
        %843 = vmatpush1.bf16.msra.mxu0 %v690
        %844 = vmatprep.subr.bf16.mxu0 %v703
        %845 = vmatpush1.bf16.msra.mxu0 %v702
        %846 = vmatprep.subr.bf16.mxu0 %v715
        %847 = vmatpush1.bf16.msra.mxu0 %v714
        %848 = vmatprep.subr.bf16.mxu0 %v727
        %849 = vmatpush1.bf16.msra.mxu0 %v726
        %850 = vmatprep.subr.bf16.mxu0 0
        %851 = vmatpush1.bf16.msra.mxu0 0
        %852 = vmatprep.subr.bf16.mxu0 0
        %853 = vmatpush1.bf16.msra.mxu0 0
        %854 = vmatprep.subr.bf16.mxu0 0
        %855 = vmatpush1.bf16.msra.mxu0 0
        %856 = vmatprep.subr.bf16.mxu0 0
        %857 = vmatpush1.bf16.msra.mxu0 0
        %858 = vmatprep.subr.bf16.mxu0 0
        %859 = vmatpush1.bf16.msra.mxu0 0
        %860 = vmatprep.subr.bf16.mxu0 0
        %861 = vmatpush1.bf16.msra.mxu0 0
        %862 = vmatprep.subr.bf16.mxu0 0
        %863 = vmatpush1.bf16.msra.mxu0 0
        %864 = vmatprep.subr.bf16.mxu0 0
        %865 = vmatpush1.bf16.msra.mxu0 0
        %866 = vmatprep.mubr.bf16.mxu0 0
        %867 = vmatmul.mubr.bf16.gmra.mrb[0].mxu0 %v254
        %v868 = vpop.f32.mrb[0].mxu0
        %v869 = vadd.f32 0.0, %v868
        %v870 = vpop.f32.mrb[0].mxu0
        %v871 = vadd.f32 0.0, %v870
        %v872 = vpop.f32.mrb[0].mxu0
        %v873 = vadd.f32 0.0, %v872
        %v874 = vpop.f32.mrb[0].mxu0
        %v875 = vadd.f32 0.0, %v874
        %876 = vmatprep.mubr.bf16.mxu0 0
        %877 = vmatmul.mubr.bf16.gmra.mrb[0].mxu0 %v255
        %v878 = vpop.f32.mrb[0].mxu0
        %v879 = vadd.f32 0.0, %v878
        %v880 = vpop.f32.mrb[0].mxu0
        %v881 = vadd.f32 0.0, %v880
        %v882 = vpop.f32.mrb[0].mxu0
        %v883 = vadd.f32 0.0, %v882
        %v884 = vpop.f32.mrb[0].mxu0
        %v885 = vadd.f32 0.0, %v884
        %886 = vmatprep.mubr.bf16.mxu0 0
        %887 = vmatmul.mubr.bf16.gmra.mrb[0].mxu0 %v256
        %v888 = vpop.f32.mrb[0].mxu0
        %v889 = vadd.f32 0.0, %v888
        %v890 = vpop.f32.mrb[0].mxu0
        %v891 = vadd.f32 0.0, %v890
        %v892 = vpop.f32.mrb[0].mxu0
        %v893 = vadd.f32 0.0, %v892
        %v894 = vpop.f32.mrb[0].mxu0
        %v895 = vadd.f32 0.0, %v894
        %896 = vmatprep.mubr.bf16.mxu0 0
        %897 = vmatmul.mubr.bf16.gmra.mrb[0].mxu0 %v257
        %v898 = vpop.f32.mrb[0].mxu0
        %v899 = vadd.f32 0.0, %v898
        %v900 = vpop.f32.mrb[0].mxu0
        %v901 = vadd.f32 0.0, %v900
        %v902 = vpop.f32.mrb[0].mxu0
        %v903 = vadd.f32 0.0, %v902
        %v904 = vpop.f32.mrb[0].mxu0
        %v905 = vadd.f32 0.0, %v904
        %906 = vdwg.mxu0
        %907 = vmatprep.subr.bf16.mxu0 %v645
        %908 = vmatpush1.bf16.msra.mxu0 %v644
        %909 = vmatprep.subr.bf16.mxu0 %v657
        %910 = vmatpush1.bf16.msra.mxu0 %v656
        %911 = vmatprep.subr.bf16.mxu0 %v669
        %912 = vmatpush1.bf16.msra.mxu0 %v668
        %913 = vmatprep.subr.bf16.mxu0 %v681
        %914 = vmatpush1.bf16.msra.mxu0 %v680
        %915 = vmatprep.subr.bf16.mxu0 %v693
        %916 = vmatpush1.bf16.msra.mxu0 %v692
        %917 = vmatprep.subr.bf16.mxu0 %v705
        %918 = vmatpush1.bf16.msra.mxu0 %v704
        %919 = vmatprep.subr.bf16.mxu0 %v717
        %920 = vmatpush1.bf16.msra.mxu0 %v716
        %921 = vmatprep.subr.bf16.mxu0 %v729
        %922 = vmatpush1.bf16.msra.mxu0 %v728
        %923 = vmatprep.subr.bf16.mxu0 0
        %924 = vmatpush1.bf16.msra.mxu0 0
        %925 = vmatprep.subr.bf16.mxu0 0
        %926 = vmatpush1.bf16.msra.mxu0 0
        %927 = vmatprep.subr.bf16.mxu0 0
        %928 = vmatpush1.bf16.msra.mxu0 0
        %929 = vmatprep.subr.bf16.mxu0 0
        %930 = vmatpush1.bf16.msra.mxu0 0
        %931 = vmatprep.subr.bf16.mxu0 0
        %932 = vmatpush1.bf16.msra.mxu0 0
        %933 = vmatprep.subr.bf16.mxu0 0
        %934 = vmatpush1.bf16.msra.mxu0 0
        %935 = vmatprep.subr.bf16.mxu0 0
        %936 = vmatpush1.bf16.msra.mxu0 0
        %937 = vmatprep.subr.bf16.mxu0 0
        %938 = vmatpush1.bf16.msra.mxu0 0
        %939 = vmatprep.mubr.bf16.mxu0 0
        %940 = vmatmul.mubr.bf16.gmra.mrb[0].mxu0 %v254
        %v941 = vpop.f32.mrb[0].mxu0
        %v942 = vadd.f32 0.0, %v941
        %v943 = vpop.f32.mrb[0].mxu0
        %v944 = vadd.f32 0.0, %v943
        %v945 = vpop.f32.mrb[0].mxu0
        %v946 = vadd.f32 0.0, %v945
        %v947 = vpop.f32.mrb[0].mxu0
        %v948 = vadd.f32 0.0, %v947
        %949 = vmatprep.mubr.bf16.mxu0 0
        %950 = vmatmul.mubr.bf16.gmra.mrb[0].mxu0 %v255
        %v951 = vpop.f32.mrb[0].mxu0
        %v952 = vadd.f32 0.0, %v951
        %v953 = vpop.f32.mrb[0].mxu0
        %v954 = vadd.f32 0.0, %v953
        %v955 = vpop.f32.mrb[0].mxu0
        %v956 = vadd.f32 0.0, %v955
        %v957 = vpop.f32.mrb[0].mxu0
        %v958 = vadd.f32 0.0, %v957
        %959 = vmatprep.mubr.bf16.mxu0 0
        %960 = vmatmul.mubr.bf16.gmra.mrb[0].mxu0 %v256
        %v961 = vpop.f32.mrb[0].mxu0
        %v962 = vadd.f32 0.0, %v961
        %v963 = vpop.f32.mrb[0].mxu0
        %v964 = vadd.f32 0.0, %v963
        %v965 = vpop.f32.mrb[0].mxu0
        %v966 = vadd.f32 0.0, %v965
        %v967 = vpop.f32.mrb[0].mxu0
        %v968 = vadd.f32 0.0, %v967
        %969 = vmatprep.mubr.bf16.mxu0 0
        %970 = vmatmul.mubr.bf16.gmra.mrb[0].mxu0 %v257
        %v971 = vpop.f32.mrb[0].mxu0
        %v972 = vadd.f32 0.0, %v971
        %v973 = vpop.f32.mrb[0].mxu0
        %v974 = vadd.f32 0.0, %v973
        %v975 = vpop.f32.mrb[0].mxu0
        %v976 = vadd.f32 0.0, %v975
        %v977 = vpop.f32.mrb[0].mxu0
        %v978 = vadd.f32 0.0, %v977
        %979 = vdwg.mxu0
        %980 = vmatprep.subr.bf16.mxu0 %v647
        %981 = vmatpush1.bf16.msra.mxu0 %v646
        %982 = vmatprep.subr.bf16.mxu0 %v659
        %983 = vmatpush1.bf16.msra.mxu0 %v658
        %984 = vmatprep.subr.bf16.mxu0 %v671
        %985 = vmatpush1.bf16.msra.mxu0 %v670
        %986 = vmatprep.subr.bf16.mxu0 %v683
        %987 = vmatpush1.bf16.msra.mxu0 %v682
        %988 = vmatprep.subr.bf16.mxu0 %v695
        %989 = vmatpush1.bf16.msra.mxu0 %v694
        %990 = vmatprep.subr.bf16.mxu0 %v707
        %991 = vmatpush1.bf16.msra.mxu0 %v706
        %992 = vmatprep.subr.bf16.mxu0 %v719
        %993 = vmatpush1.bf16.msra.mxu0 %v718
        %994 = vmatprep.subr.bf16.mxu0 %v731
        %995 = vmatpush1.bf16.msra.mxu0 %v730
        %996 = vmatprep.subr.bf16.mxu0 0
        %997 = vmatpush1.bf16.msra.mxu0 0
        %998 = vmatprep.subr.bf16.mxu0 0
        %999 = vmatpush1.bf16.msra.mxu0 0
        %1000 = vmatprep.subr.bf16.mxu0 0
        %1001 = vmatpush1.bf16.msra.mxu0 0
        %1002 = vmatprep.subr.bf16.mxu0 0
        %1003 = vmatpush1.bf16.msra.mxu0 0
        %1004 = vmatprep.subr.bf16.mxu0 0
        %1005 = vmatpush1.bf16.msra.mxu0 0
        %1006 = vmatprep.subr.bf16.mxu0 0
        %1007 = vmatpush1.bf16.msra.mxu0 0
        %1008 = vmatprep.subr.bf16.mxu0 0
        %1009 = vmatpush1.bf16.msra.mxu0 0
        %1010 = vmatprep.subr.bf16.mxu0 0
        %1011 = vmatpush1.bf16.msra.mxu0 0
        %1012 = vmatprep.mubr.bf16.mxu0 0
        %1013 = vmatmul.mubr.bf16.gmra.mrb[0].mxu0 %v254
        %v1014 = vpop.f32.mrb[0].mxu0
        %v1015 = vadd.f32 0.0, %v1014
        %v1016 = vpop.f32.mrb[0].mxu0
        %v1017 = vadd.f32 0.0, %v1016
        %v1018 = vpop.f32.mrb[0].mxu0
        %v1019 = vadd.f32 0.0, %v1018
        %v1020 = vpop.f32.mrb[0].mxu0
        %v1021 = vadd.f32 0.0, %v1020
        %1022 = vmatprep.mubr.bf16.mxu0 0
        %1023 = vmatmul.mubr.bf16.gmra.mrb[0].mxu0 %v255
        %v1024 = vpop.f32.mrb[0].mxu0
        %v1025 = vadd.f32 0.0, %v1024
        %v1026 = vpop.f32.mrb[0].mxu0
        %v1027 = vadd.f32 0.0, %v1026
        %v1028 = vpop.f32.mrb[0].mxu0
        %v1029 = vadd.f32 0.0, %v1028
        %v1030 = vpop.f32.mrb[0].mxu0
        %v1031 = vadd.f32 0.0, %v1030
        %1032 = vmatprep.mubr.bf16.mxu0 0
        %1033 = vmatmul.mubr.bf16.gmra.mrb[0].mxu0 %v256
        %v1034 = vpop.f32.mrb[0].mxu0
        %v1035 = vadd.f32 0.0, %v1034
        %v1036 = vpop.f32.mrb[0].mxu0
        %v1037 = vadd.f32 0.0, %v1036
        %v1038 = vpop.f32.mrb[0].mxu0
        %v1039 = vadd.f32 0.0, %v1038
        %v1040 = vpop.f32.mrb[0].mxu0
        %v1041 = vadd.f32 0.0, %v1040
        %1042 = vmatprep.mubr.bf16.mxu0 0
        %1043 = vmatmul.mubr.bf16.gmra.mrb[0].mxu0 %v257
        %v1044 = vpop.f32.mrb[0].mxu0
        %v1045 = vadd.f32 0.0, %v1044
        %v1046 = vpop.f32.mrb[0].mxu0
        %v1047 = vadd.f32 0.0, %v1046
        %v1048 = vpop.f32.mrb[0].mxu0
        %v1049 = vadd.f32 0.0, %v1048
        %v1050 = vpop.f32.mrb[0].mxu0
        %v1051 = vadd.f32 0.0, %v1050
        %1052 = vdwg.mxu0
        %1053 = vmatprep.subr.bf16.mxu0 %v649
        %1054 = vmatpush1.bf16.msra.mxu0 %v648
        %1055 = vmatprep.subr.bf16.mxu0 %v661
        %1056 = vmatpush1.bf16.msra.mxu0 %v660
        %1057 = vmatprep.subr.bf16.mxu0 %v673
        %1058 = vmatpush1.bf16.msra.mxu0 %v672
        %1059 = vmatprep.subr.bf16.mxu0 %v685
        %1060 = vmatpush1.bf16.msra.mxu0 %v684
        %1061 = vmatprep.subr.bf16.mxu0 %v697
        %1062 = vmatpush1.bf16.msra.mxu0 %v696
        %1063 = vmatprep.subr.bf16.mxu0 %v709
        %1064 = vmatpush1.bf16.msra.mxu0 %v708
        %1065 = vmatprep.subr.bf16.mxu0 %v721
        %1066 = vmatpush1.bf16.msra.mxu0 %v720
        %1067 = vmatprep.subr.bf16.mxu0 %v733
        %1068 = vmatpush1.bf16.msra.mxu0 %v732
        %1069 = vmatprep.subr.bf16.mxu0 0
        %1070 = vmatpush1.bf16.msra.mxu0 0
        %1071 = vmatprep.subr.bf16.mxu0 0
        %1072 = vmatpush1.bf16.msra.mxu0 0
        %1073 = vmatprep.subr.bf16.mxu0 0
        %1074 = vmatpush1.bf16.msra.mxu0 0
        %1075 = vmatprep.subr.bf16.mxu0 0
        %1076 = vmatpush1.bf16.msra.mxu0 0
        %1077 = vmatprep.subr.bf16.mxu0 0
        %1078 = vmatpush1.bf16.msra.mxu0 0
        %1079 = vmatprep.subr.bf16.mxu0 0
        %1080 = vmatpush1.bf16.msra.mxu0 0
        %1081 = vmatprep.subr.bf16.mxu0 0
        %1082 = vmatpush1.bf16.msra.mxu0 0
        %1083 = vmatprep.subr.bf16.mxu0 0
        %1084 = vmatpush1.bf16.msra.mxu0 0
        %1085 = vmatprep.mubr.bf16.mxu0 0
        %1086 = vmatmul.mubr.bf16.gmra.mrb[0].mxu0 %v254
        %v1087 = vpop.f32.mrb[0].mxu0
        %v1088 = vadd.f32 0.0, %v1087
        %v1089 = vpop.f32.mrb[0].mxu0
        %v1090 = vadd.f32 0.0, %v1089
        %v1091 = vpop.f32.mrb[0].mxu0
        %v1092 = vadd.f32 0.0, %v1091
        %v1093 = vpop.f32.mrb[0].mxu0
        %v1094 = vadd.f32 0.0, %v1093
        %1095 = vmatprep.mubr.bf16.mxu0 0
        %1096 = vmatmul.mubr.bf16.gmra.mrb[0].mxu0 %v255
        %v1097 = vpop.f32.mrb[0].mxu0
        %v1098 = vadd.f32 0.0, %v1097
        %v1099 = vpop.f32.mrb[0].mxu0
        %v1100 = vadd.f32 0.0, %v1099
        %v1101 = vpop.f32.mrb[0].mxu0
        %v1102 = vadd.f32 0.0, %v1101
        %v1103 = vpop.f32.mrb[0].mxu0
        %v1104 = vadd.f32 0.0, %v1103
        %1105 = vmatprep.mubr.bf16.mxu0 0
        %1106 = vmatmul.mubr.bf16.gmra.mrb[0].mxu0 %v256
        %v1107 = vpop.f32.mrb[0].mxu0
        %v1108 = vadd.f32 0.0, %v1107
        %v1109 = vpop.f32.mrb[0].mxu0
        %v1110 = vadd.f32 0.0, %v1109
        %v1111 = vpop.f32.mrb[0].mxu0
        %v1112 = vadd.f32 0.0, %v1111
        %v1113 = vpop.f32.mrb[0].mxu0
        %v1114 = vadd.f32 0.0, %v1113
        %1115 = vmatprep.mubr.bf16.mxu0 0
        %1116 = vmatmul.mubr.bf16.gmra.mrb[0].mxu0 %v257
        %v1117 = vpop.f32.mrb[0].mxu0
        %v1118 = vadd.f32 0.0, %v1117
        %v1119 = vpop.f32.mrb[0].mxu0
        %v1120 = vadd.f32 0.0, %v1119
        %v1121 = vpop.f32.mrb[0].mxu0
        %v1122 = vadd.f32 0.0, %v1121
        %v1123 = vpop.f32.mrb[0].mxu0
        %v1124 = vadd.f32 0.0, %v1123
        %1125 = vdwg.mxu0
        %1126 = vmatprep.subr.bf16.mxu0 %v651
        %1127 = vmatpush1.bf16.msra.mxu0 %v650
        %1128 = vmatprep.subr.bf16.mxu0 %v663
        %1129 = vmatpush1.bf16.msra.mxu0 %v662
        %1130 = vmatprep.subr.bf16.mxu0 %v675
        %1131 = vmatpush1.bf16.msra.mxu0 %v674
        %1132 = vmatprep.subr.bf16.mxu0 %v687
        %1133 = vmatpush1.bf16.msra.mxu0 %v686
        %1134 = vmatprep.subr.bf16.mxu0 %v699
        %1135 = vmatpush1.bf16.msra.mxu0 %v698
        %1136 = vmatprep.subr.bf16.mxu0 %v711
        %1137 = vmatpush1.bf16.msra.mxu0 %v710
        %1138 = vmatprep.subr.bf16.mxu0 %v723
        %1139 = vmatpush1.bf16.msra.mxu0 %v722
        %1140 = vmatprep.subr.bf16.mxu0 %v735
        %1141 = vmatpush1.bf16.msra.mxu0 %v734
        %1142 = vmatprep.subr.bf16.mxu0 0
        %1143 = vmatpush1.bf16.msra.mxu0 0
        %1144 = vmatprep.subr.bf16.mxu0 0
        %1145 = vmatpush1.bf16.msra.mxu0 0
        %1146 = vmatprep.subr.bf16.mxu0 0
        %1147 = vmatpush1.bf16.msra.mxu0 0
        %1148 = vmatprep.subr.bf16.mxu0 0
        %1149 = vmatpush1.bf16.msra.mxu0 0
        %1150 = vmatprep.subr.bf16.mxu0 0
        %1151 = vmatpush1.bf16.msra.mxu0 0
        %1152 = vmatprep.subr.bf16.mxu0 0
        %1153 = vmatpush1.bf16.msra.mxu0 0
        %1154 = vmatprep.subr.bf16.mxu0 0
        %1155 = vmatpush1.bf16.msra.mxu0 0
        %1156 = vmatprep.subr.bf16.mxu0 0
        %1157 = vmatpush1.bf16.msra.mxu0 0
        %1158 = vmatprep.mubr.bf16.mxu0 0
        %1159 = vmatmul.mubr.bf16.gmra.mrb[0].mxu0 %v254
        %v1160 = vpop.f32.mrb[0].mxu0
        %v1161 = vadd.f32 0.0, %v1160
        %v1162 = vpop.f32.mrb[0].mxu0
        %v1163 = vadd.f32 0.0, %v1162
        %v1164 = vpop.f32.mrb[0].mxu0
        %v1165 = vadd.f32 0.0, %v1164
        %v1166 = vpop.f32.mrb[0].mxu0
        %v1167 = vadd.f32 0.0, %v1166
        %1168 = vmatprep.mubr.bf16.mxu0 0
        %1169 = vmatmul.mubr.bf16.gmra.mrb[0].mxu0 %v255
        %v1170 = vpop.f32.mrb[0].mxu0
        %v1171 = vadd.f32 0.0, %v1170
        %v1172 = vpop.f32.mrb[0].mxu0
        %v1173 = vadd.f32 0.0, %v1172
        %v1174 = vpop.f32.mrb[0].mxu0
        %v1175 = vadd.f32 0.0, %v1174
        %v1176 = vpop.f32.mrb[0].mxu0
        %v1177 = vadd.f32 0.0, %v1176
        %1178 = vmatprep.mubr.bf16.mxu0 0
        %1179 = vmatmul.mubr.bf16.gmra.mrb[0].mxu0 %v256
        %v1180 = vpop.f32.mrb[0].mxu0
        %v1181 = vadd.f32 0.0, %v1180
        %v1182 = vpop.f32.mrb[0].mxu0
        %v1183 = vadd.f32 0.0, %v1182
        %v1184 = vpop.f32.mrb[0].mxu0
        %v1185 = vadd.f32 0.0, %v1184
        %v1186 = vpop.f32.mrb[0].mxu0
        %v1187 = vadd.f32 0.0, %v1186
        %1188 = vmatprep.mubr.bf16.mxu0 0
        %1189 = vmatmul.mubr.bf16.gmra.mrb[0].mxu0 %v257
        %v1190 = vpop.f32.mrb[0].mxu0
        %v1191 = vadd.f32 0.0, %v1190
        %v1192 = vpop.f32.mrb[0].mxu0
        %v1193 = vadd.f32 0.0, %v1192
        %v1194 = vpop.f32.mrb[0].mxu0
        %v1195 = vadd.f32 0.0, %v1194
        %v1196 = vpop.f32.mrb[0].mxu0
        %v1197 = vadd.f32 0.0, %v1196
        %1198 = vdwg.mxu0
        %1199 = vmatprep.subr.bf16.mxu0 %v653
        %1200 = vmatpush1.bf16.msra.mxu0 %v652
        %1201 = vmatprep.subr.bf16.mxu0 %v665
        %1202 = vmatpush1.bf16.msra.mxu0 %v664
        %1203 = vmatprep.subr.bf16.mxu0 %v677
        %1204 = vmatpush1.bf16.msra.mxu0 %v676
        %1205 = vmatprep.subr.bf16.mxu0 %v689
        %1206 = vmatpush1.bf16.msra.mxu0 %v688
        %1207 = vmatprep.subr.bf16.mxu0 %v701
        %1208 = vmatpush1.bf16.msra.mxu0 %v700
        %1209 = vmatprep.subr.bf16.mxu0 %v713
        %1210 = vmatpush1.bf16.msra.mxu0 %v712
        %1211 = vmatprep.subr.bf16.mxu0 %v725
        %1212 = vmatpush1.bf16.msra.mxu0 %v724
        %1213 = vmatprep.subr.bf16.mxu0 %v737
        %1214 = vmatpush1.bf16.msra.mxu0 %v736
        %1215 = vmatprep.subr.bf16.mxu0 0
        %1216 = vmatpush1.bf16.msra.mxu0 0
        %1217 = vmatprep.subr.bf16.mxu0 0
        %1218 = vmatpush1.bf16.msra.mxu0 0
        %1219 = vmatprep.subr.bf16.mxu0 0
        %1220 = vmatpush1.bf16.msra.mxu0 0
        %1221 = vmatprep.subr.bf16.mxu0 0
        %1222 = vmatpush1.bf16.msra.mxu0 0
        %1223 = vmatprep.subr.bf16.mxu0 0
        %1224 = vmatpush1.bf16.msra.mxu0 0
        %1225 = vmatprep.subr.bf16.mxu0 0
        %1226 = vmatpush1.bf16.msra.mxu0 0
        %1227 = vmatprep.subr.bf16.mxu0 0
        %1228 = vmatpush1.bf16.msra.mxu0 0
        %1229 = vmatprep.subr.bf16.mxu0 0
        %1230 = vmatpush1.bf16.msra.mxu0 0
        %1231 = vmatprep.mubr.bf16.mxu0 0
        %1232 = vmatmul.mubr.bf16.gmra.mrb[0].mxu0 %v254
        %v1233 = vpop.f32.mrb[0].mxu0
        %v1234 = vadd.f32 0.0, %v1233
        %v1235 = vpop.f32.mrb[0].mxu0
        %v1236 = vadd.f32 0.0, %v1235
        %v1237 = vpop.f32.mrb[0].mxu0
        %v1238 = vadd.f32 0.0, %v1237
        %v1239 = vpop.f32.mrb[0].mxu0
        %v1240 = vadd.f32 0.0, %v1239
        %1241 = vmatprep.mubr.bf16.mxu0 0
        %1242 = vmatmul.mubr.bf16.gmra.mrb[0].mxu0 %v255
        %v1243 = vpop.f32.mrb[0].mxu0
        %v1244 = vadd.f32 0.0, %v1243
        %v1245 = vpop.f32.mrb[0].mxu0
        %v1246 = vadd.f32 0.0, %v1245
        %v1247 = vpop.f32.mrb[0].mxu0
        %v1248 = vadd.f32 0.0, %v1247
        %v1249 = vpop.f32.mrb[0].mxu0
        %v1250 = vadd.f32 0.0, %v1249
        %1251 = vmatprep.mubr.bf16.mxu0 0
        %1252 = vmatmul.mubr.bf16.gmra.mrb[0].mxu0 %v256
        %v1253 = vpop.f32.mrb[0].mxu0
        %v1254 = vadd.f32 0.0, %v1253
        %v1255 = vpop.f32.mrb[0].mxu0
        %v1256 = vadd.f32 0.0, %v1255
        %v1257 = vpop.f32.mrb[0].mxu0
        %v1258 = vadd.f32 0.0, %v1257
        %v1259 = vpop.f32.mrb[0].mxu0
        %v1260 = vadd.f32 0.0, %v1259
        %1261 = vmatprep.mubr.bf16.mxu0 0
        %1262 = vmatmul.mubr.bf16.gmra.mrb[0].mxu0 %v257
        %v1263 = vpop.f32.mrb[0].mxu0
        %v1264 = vadd.f32 0.0, %v1263
        %v1265 = vpop.f32.mrb[0].mxu0
        %v1266 = vadd.f32 0.0, %v1265
        %v1267 = vpop.f32.mrb[0].mxu0
        %v1268 = vadd.f32 0.0, %v1267
        %v1269 = vpop.f32.mrb[0].mxu0
        %v1270 = vadd.f32 0.0, %v1269
        %1271 = vdwg.mxu0
        %v1272 = vpack.c.bf16 %v873, %v869
        %v1273 = vpack.c.bf16 %v875, %v871
        %v1274 = vpack.c.bf16 %v946, %v942
        %v1275 = vpack.c.bf16 %v948, %v944
        %v1276 = vpack.c.bf16 %v1019, %v1015
        %v1277 = vpack.c.bf16 %v1021, %v1017
        %v1278 = vpack.c.bf16 %v1092, %v1088
        %v1279 = vpack.c.bf16 %v1094, %v1090
        %v1280 = vpack.c.bf16 %v1165, %v1161
        %v1281 = vpack.c.bf16 %v1167, %v1163
        %v1282 = vpack.c.bf16 %v1238, %v1234
        %v1283 = vpack.c.bf16 %v1240, %v1236
        %v1284 = vpack.c.bf16 %v883, %v879
        %v1285 = vpack.c.bf16 %v885, %v881
        %v1286 = vpack.c.bf16 %v956, %v952
        %v1287 = vpack.c.bf16 %v958, %v954
        %v1288 = vpack.c.bf16 %v1029, %v1025
        %v1289 = vpack.c.bf16 %v1031, %v1027
        %v1290 = vpack.c.bf16 %v1102, %v1098
        %v1291 = vpack.c.bf16 %v1104, %v1100
        %v1292 = vpack.c.bf16 %v1175, %v1171
        %v1293 = vpack.c.bf16 %v1177, %v1173
        %v1294 = vpack.c.bf16 %v1248, %v1244
        %v1295 = vpack.c.bf16 %v1250, %v1246
        %v1296 = vpack.c.bf16 %v893, %v889
        %v1297 = vpack.c.bf16 %v895, %v891
        %v1298 = vpack.c.bf16 %v966, %v962
        %v1299 = vpack.c.bf16 %v968, %v964
        %v1300 = vpack.c.bf16 %v1039, %v1035
        %v1301 = vpack.c.bf16 %v1041, %v1037
        %v1302 = vpack.c.bf16 %v1112, %v1108
        %v1303 = vpack.c.bf16 %v1114, %v1110
        %v1304 = vpack.c.bf16 %v1185, %v1181
        %v1305 = vpack.c.bf16 %v1187, %v1183
        %v1306 = vpack.c.bf16 %v1258, %v1254
        %v1307 = vpack.c.bf16 %v1260, %v1256
        %v1308 = vpack.c.bf16 %v903, %v899
        %v1309 = vpack.c.bf16 %v905, %v901
        %v1310 = vpack.c.bf16 %v976, %v972
        %v1311 = vpack.c.bf16 %v978, %v974
        %v1312 = vpack.c.bf16 %v1049, %v1045
        %v1313 = vpack.c.bf16 %v1051, %v1047
        %v1314 = vpack.c.bf16 %v1122, %v1118
        %v1315 = vpack.c.bf16 %v1124, %v1120
        %v1316 = vpack.c.bf16 %v1195, %v1191
        %v1317 = vpack.c.bf16 %v1197, %v1193
        %v1318 = vpack.c.bf16 %v1268, %v1264
        %v1319 = vpack.c.bf16 %v1270, %v1266
        %1320 = vst [vmem:[#allocation2] sm:$0xff] %v1272
        %1321 = vst [vmem:[#allocation2 + $0x8] sm:$0xff] %v1273
        %1322 = vst [vmem:[#allocation2 + $0x10] sm:$0xff] %v1274
        %1323 = vst [vmem:[#allocation2 + $0x18] sm:$0xff] %v1275
        %1324 = vst [vmem:[#allocation2 + $0x20] sm:$0xff] %v1276
        %1325 = vst [vmem:[#allocation2 + $0x28] sm:$0xff] %v1277
        %1326 = vst [vmem:[#allocation2 + $0x30] sm:$0xff] %v1278
        %1327 = vst [vmem:[#allocation2 + $0x38] sm:$0xff] %v1279
        %1328 = vst [vmem:[#allocation2 + $0x40] sm:$0xff] %v1280
        %1329 = vst [vmem:[#allocation2 + $0x48] sm:$0xff] %v1281
        %1330 = vst [vmem:[#allocation2 + $0x50] sm:$0xff] %v1282
        %1331 = vst [vmem:[#allocation2 + $0x58] sm:$0xff] %v1283
        %1332 = vst [vmem:[#allocation2 + $0x60] sm:$0xff] %v1284
        %1333 = vst [vmem:[#allocation2 + $0x68] sm:$0xff] %v1285
        %1334 = vst [vmem:[#allocation2 + $0x70] sm:$0xff] %v1286
        %1335 = vst [vmem:[#allocation2 + $0x78] sm:$0xff] %v1287
        %1336 = vst [vmem:[#allocation2 + $0x80] sm:$0xff] %v1288
        %1337 = vst [vmem:[#allocation2 + $0x88] sm:$0xff] %v1289
        %1338 = vst [vmem:[#allocation2 + $0x90] sm:$0xff] %v1290
        %1339 = vst [vmem:[#allocation2 + $0x98] sm:$0xff] %v1291
        %1340 = vst [vmem:[#allocation2 + $0xa0] sm:$0xff] %v1292
        %1341 = vst [vmem:[#allocation2 + $0xa8] sm:$0xff] %v1293
        %1342 = vst [vmem:[#allocation2 + $0xb0] sm:$0xff] %v1294
        %1343 = vst [vmem:[#allocation2 + $0xb8] sm:$0xff] %v1295
        %1344 = vst [vmem:[#allocation2 + $0xc0] sm:$0xff] %v1296
        %1345 = vst [vmem:[#allocation2 + $0xc8] sm:$0xff] %v1297
        %1346 = vst [vmem:[#allocation2 + $0xd0] sm:$0xff] %v1298
        %1347 = vst [vmem:[#allocation2 + $0xd8] sm:$0xff] %v1299
        %1348 = vst [vmem:[#allocation2 + $0xe0] sm:$0xff] %v1300
        %1349 = vst [vmem:[#allocation2 + $0xe8] sm:$0xff] %v1301
        %1350 = vst [vmem:[#allocation2 + $0xf0] sm:$0xff] %v1302
        %1351 = vst [vmem:[#allocation2 + $0xf8] sm:$0xff] %v1303
        %1352 = vst [vmem:[#allocation2 + $0x100] sm:$0xff] %v1304
        %1353 = vst [vmem:[#allocation2 + $0x108] sm:$0xff] %v1305
        %1354 = vst [vmem:[#allocation2 + $0x110] sm:$0xff] %v1306
        %1355 = vst [vmem:[#allocation2 + $0x118] sm:$0xff] %v1307
        %1356 = vst [vmem:[#allocation2 + $0x120] sm:$0xff] %v1308
        %1357 = vst [vmem:[#allocation2 + $0x128] sm:$0xff] %v1309
        %1358 = vst [vmem:[#allocation2 + $0x130] sm:$0xff] %v1310
        %1359 = vst [vmem:[#allocation2 + $0x138] sm:$0xff] %v1311
        %1360 = vst [vmem:[#allocation2 + $0x140] sm:$0xff] %v1312
        %1361 = vst [vmem:[#allocation2 + $0x148] sm:$0xff] %v1313
        %1362 = vst [vmem:[#allocation2 + $0x150] sm:$0xff] %v1314
        %1363 = vst [vmem:[#allocation2 + $0x158] sm:$0xff] %v1315
        %1364 = vst [vmem:[#allocation2 + $0x160] sm:$0xff] %v1316
        %1365 = vst [vmem:[#allocation2 + $0x168] sm:$0xff] %v1317
        %1366 = vst [vmem:[#allocation2 + $0x170] sm:$0xff] %v1318
        %1367 = vst [vmem:[#allocation2 + $0x178] sm:$0xff] %v1319
        %v1368 = vld [vmem:[#allocation2] sm:$0xff]
        %v1369 = vld [vmem:[#allocation2 + $0x60] sm:$0xff]
        %v1370 = vld [vmem:[#allocation2 + $0xc0] sm:$0xff]
        %v1371 = vld [vmem:[#allocation2 + $0x120] sm:$0xff]
        %v1372 = vld [vmem:[#allocation2 + $0x20] sm:$0xff]
        %v1373 = vld [vmem:[#allocation2 + $0x80] sm:$0xff]
        %v1374 = vld [vmem:[#allocation2 + $0xe0] sm:$0xff]
        %v1375 = vld [vmem:[#allocation2 + $0x140] sm:$0xff]
        %v1376 = vld [vmem:[#allocation2 + $0x40] sm:$0xff]
        %v1377 = vld [vmem:[#allocation2 + $0xa0] sm:$0xff]
        %v1378 = vld [vmem:[#allocation2 + $0x100] sm:$0xff]
        %v1379 = vld [vmem:[#allocation2 + $0x160] sm:$0xff]
        %vm1380 = vcmask 523264
        %v1382 = vsel %vm1380, %v1368, 0
        %v1385 = vsel %vm1380, %v1369, 0
        %v1388 = vsel %vm1380, %v1370, 0
        %v1391 = vsel %vm1380, %v1371, 0
        %v1394 = vsel %vm1380, %v1372, 0
        %v1397 = vsel %vm1380, %v1373, 0
        %v1400 = vsel %vm1380, %v1374, 0
        %v1403 = vsel %vm1380, %v1375, 0
        %1405 = vmatprep.subr.bf16.mxu0 0
        %1406 = vmatpush1.bf16.xpose.msra.mxu0 %v1394
        %1407 = vmatprep.subr.bf16.mxu0 0
        %1408 = vmatpush1.bf16.xpose.msra.mxu0 %v1397
        %1409 = vmatprep.subr.bf16.mxu0 0
        %1410 = vmatpush1.bf16.xpose.msra.mxu0 %v1400
        %1411 = vmatprep.subr.bf16.mxu0 0
        %1412 = vmatpush1.bf16.xpose.msra.mxu0 %v1403
        %1413 = vmatprep.subr.bf16.mxu0 0
        %1414 = vmatpush1.bf16.xpose.msra.mxu0 0
        %1415 = vmatprep.subr.bf16.mxu0 0
        %1416 = vmatpush1.bf16.xpose.msra.mxu0 0
        %1417 = vmatprep.subr.bf16.mxu0 0
        %1418 = vmatpush1.bf16.xpose.msra.mxu0 0
        %1419 = vmatprep.subr.bf16.mxu0 0
        %1420 = vmatpush1.bf16.xpose.msra.mxu0 0
        %1421 = vmatprep.subr.bf16.mxu0 0
        %1422 = vmatpush1.bf16.xpose.msra.mxu0 0
        %1423 = vmatprep.subr.bf16.mxu0 0
        %1424 = vmatpush1.bf16.xpose.msra.mxu0 0
        %1425 = vmatprep.subr.bf16.mxu0 0
        %1426 = vmatpush1.bf16.xpose.msra.mxu0 0
        %1427 = vmatprep.subr.bf16.mxu0 0
        %1428 = vmatpush1.bf16.xpose.msra.mxu0 0
        %1429 = vmatprep.subr.bf16.mxu0 0
        %1430 = vmatpush1.bf16.xpose.msra.mxu0 0
        %1431 = vmatprep.subr.bf16.mxu0 0
        %1432 = vmatpush1.bf16.xpose.msra.mxu0 0
        %1433 = vmatprep.subr.bf16.mxu0 0
        %1434 = vmatpush1.bf16.xpose.msra.mxu0 0
        %1435 = vmatprep.subr.bf16.mxu0 0
        %1436 = vmatpush1.bf16.xpose.msra.mxu0 0
        %1437 = vmatprep.mubr.bf16.mxu0 0
        %1438 = vmatmul.mubr.bf16.gmra.mrb[0].mxu0 %v1382
        %v1439 = vpop.f32.mrb[0].mxu0
        %v1440 = vadd.f32 0.0, %v1439
        %v1441 = vpop.f32.mrb[0].mxu0
        %v1442 = vpop.f32.mrb[0].mxu0
        %v1443 = vadd.f32 0.0, %v1442
        %v1444 = vpop.f32.mrb[0].mxu0
        %1445 = vmatprep.mubr.bf16.mxu0 0
        %1446 = vmatmul.mubr.bf16.gmra.mrb[0].mxu0 %v1385
        %v1447 = vpop.f32.mrb[0].mxu0
        %v1448 = vadd.f32 0.0, %v1447
        %v1449 = vpop.f32.mrb[0].mxu0
        %v1450 = vpop.f32.mrb[0].mxu0
        %v1451 = vadd.f32 0.0, %v1450
        %v1452 = vpop.f32.mrb[0].mxu0
        %1453 = vmatprep.mubr.bf16.mxu0 0
        %1454 = vmatmul.mubr.bf16.gmra.mrb[0].mxu0 %v1388
        %v1455 = vpop.f32.mrb[0].mxu0
        %v1456 = vadd.f32 0.0, %v1455
        %v1457 = vpop.f32.mrb[0].mxu0
        %v1458 = vpop.f32.mrb[0].mxu0
        %v1459 = vadd.f32 0.0, %v1458
        %v1460 = vpop.f32.mrb[0].mxu0
        %1461 = vmatprep.mubr.bf16.mxu0 0
        %1462 = vmatmul.mubr.bf16.gmra.mrb[0].mxu0 %v1391
        %v1463 = vpop.f32.mrb[0].mxu0
        %v1464 = vadd.f32 0.0, %v1463
        %v1465 = vpop.f32.mrb[0].mxu0
        %v1466 = vpop.f32.mrb[0].mxu0
        %v1467 = vadd.f32 0.0, %v1466
        %v1468 = vpop.f32.mrb[0].mxu0
        %1469 = vdwg.mxu0
        %v1470 = vsel %vm1380, %v1440, -inf
        %1471 = vmax.xlane.f32.xlu0 %v1470
        %v1472 = vpop.xlane.xlu0 %1471
        %v1473 = vsel %vm1380, %v1443, -inf
        %1474 = vmax.xlane.f32.xlu0 %v1473
        %v1475 = vpop.xlane.xlu0 %1474
        %v1476 = vsel %vm1380, %v1448, -inf
        %1477 = vmax.xlane.f32.xlu0 %v1476
        %v1478 = vpop.xlane.xlu0 %1477
        %v1479 = vsel %vm1380, %v1451, -inf
        %1480 = vmax.xlane.f32.xlu0 %v1479
        %v1481 = vpop.xlane.xlu0 %1480
        %v1482 = vsel %vm1380, %v1456, -inf
        %1483 = vmax.xlane.f32.xlu0 %v1482
        %v1484 = vpop.xlane.xlu0 %1483
        %v1485 = vsel %vm1380, %v1459, -inf
        %1486 = vmax.xlane.f32.xlu0 %v1485
        %v1487 = vpop.xlane.xlu0 %1486
        %v1488 = vsel %vm1380, %v1464, -inf
        %1489 = vmax.xlane.f32.xlu0 %v1488
        %v1490 = vpop.xlane.xlu0 %1489
        %v1491 = vsel %vm1380, %v1467, -inf
        %1492 = vmax.xlane.f32.xlu0 %v1491
        %v1493 = vpop.xlane.xlu0 %1492
        %v1494 = vsub.f32 %v1440, %v1472
        %v1495 = vsub.f32 %v1443, %v1475
        %v1496 = vsub.f32 %v1448, %v1478
        %v1497 = vsub.f32 %v1451, %v1481
        %v1498 = vsub.f32 %v1456, %v1484
        %v1499 = vsub.f32 %v1459, %v1487
        %v1500 = vsub.f32 %v1464, %v1490
        %v1501 = vsub.f32 %v1467, %v1493
        %v1502 = vmul.f32 %v1494, 1.442695
        %v1503 = vpow.pop %v1502
        %v1504 = vmul.f32 %v1495, 1.442695
        %v1505 = vpow.pop %v1504
        %v1506 = vmul.f32 %v1496, 1.442695
        %v1507 = vpow.pop %v1506
        %v1508 = vmul.f32 %v1497, 1.442695
        %v1509 = vpow.pop %v1508
        %v1510 = vmul.f32 %v1498, 1.442695
        %v1511 = vpow.pop %v1510
        %v1512 = vmul.f32 %v1499, 1.442695
        %v1513 = vpow.pop %v1512
        %v1514 = vmul.f32 %v1500, 1.442695
        %v1515 = vpow.pop %v1514
        %v1516 = vmul.f32 %v1501, 1.442695
        %v1517 = vpow.pop %v1516
        %v1518 = vsel %vm1380, %v1503, 0.0
        %1519 = vadd.xlane.f32.xlu0 %v1518
        %v1520 = vpop.xlane.xlu0 %1519
        %v1521 = vsel %vm1380, %v1505, 0.0
        %1522 = vadd.xlane.f32.xlu0 %v1521
        %v1523 = vpop.xlane.xlu0 %1522
        %v1524 = vsel %vm1380, %v1507, 0.0
        %1525 = vadd.xlane.f32.xlu0 %v1524
        %v1526 = vpop.xlane.xlu0 %1525
        %v1527 = vsel %vm1380, %v1509, 0.0
        %1528 = vadd.xlane.f32.xlu0 %v1527
        %v1529 = vpop.xlane.xlu0 %1528
        %v1530 = vsel %vm1380, %v1511, 0.0
        %1531 = vadd.xlane.f32.xlu0 %v1530
        %v1532 = vpop.xlane.xlu0 %1531
        %v1533 = vsel %vm1380, %v1513, 0.0
        %1534 = vadd.xlane.f32.xlu0 %v1533
        %v1535 = vpop.xlane.xlu0 %1534
        %v1536 = vsel %vm1380, %v1515, 0.0
        %1537 = vadd.xlane.f32.xlu0 %v1536
        %v1538 = vpop.xlane.xlu0 %1537
        %v1539 = vsel %vm1380, %v1517, 0.0
        %1540 = vadd.xlane.f32.xlu0 %v1539
        %v1541 = vpop.xlane.xlu0 %1540
        %v1542 = vrcp.pop %v1520
        %v1543 = vmul.f32 %v1503, %v1542
        %v1544 = vrcp.pop %v1523
        %v1545 = vmul.f32 %v1505, %v1544
        %v1546 = vrcp.pop %v1526
        %v1547 = vmul.f32 %v1507, %v1546
        %v1548 = vrcp.pop %v1529
        %v1549 = vmul.f32 %v1509, %v1548
        %v1550 = vrcp.pop %v1532
        %v1551 = vmul.f32 %v1511, %v1550
        %v1552 = vrcp.pop %v1535
        %v1553 = vmul.f32 %v1513, %v1552
        %v1554 = vrcp.pop %v1538
        %v1555 = vmul.f32 %v1515, %v1554
        %v1556 = vrcp.pop %v1541
        %v1557 = vmul.f32 %v1517, %v1556
        %v1558 = vpack.c.bf16 %v1545, %v1543
        %v1559 = vpack.c.bf16 %v1549, %v1547
        %v1560 = vpack.c.bf16 %v1553, %v1551
        %v1561 = vpack.c.bf16 %v1557, %v1555
        %v1563 = vsel %vm1380, %v1558, 0
        %v1566 = vsel %vm1380, %v1559, 0
        %v1569 = vsel %vm1380, %v1560, 0
        %v1572 = vsel %vm1380, %v1561, 0
        %1574 = vmatprep.subr.bf16.mxu0 0
        %1575 = vmatpush1.bf16.msra.mxu0 %v1376
        %1576 = vmatprep.subr.bf16.mxu0 0
        %1577 = vmatpush1.bf16.msra.mxu0 %v1377
        %1578 = vmatprep.subr.bf16.mxu0 0
        %1579 = vmatpush1.bf16.msra.mxu0 %v1378
        %1580 = vmatprep.subr.bf16.mxu0 0
        %1581 = vmatpush1.bf16.msra.mxu0 %v1379
        %1582 = vmatprep.subr.bf16.mxu0 0
        %1583 = vmatpush1.bf16.msra.mxu0 0
        %1584 = vmatprep.subr.bf16.mxu0 0
        %1585 = vmatpush1.bf16.msra.mxu0 0
        %1586 = vmatprep.subr.bf16.mxu0 0
        %1587 = vmatpush1.bf16.msra.mxu0 0
        %1588 = vmatprep.subr.bf16.mxu0 0
        %1589 = vmatpush1.bf16.msra.mxu0 0
        %1590 = vmatprep.subr.bf16.mxu0 0
        %1591 = vmatpush1.bf16.msra.mxu0 0
        %1592 = vmatprep.subr.bf16.mxu0 0
        %1593 = vmatpush1.bf16.msra.mxu0 0
        %1594 = vmatprep.subr.bf16.mxu0 0
        %1595 = vmatpush1.bf16.msra.mxu0 0
        %1596 = vmatprep.subr.bf16.mxu0 0
        %1597 = vmatpush1.bf16.msra.mxu0 0
        %1598 = vmatprep.subr.bf16.mxu0 0
        %1599 = vmatpush1.bf16.msra.mxu0 0
        %1600 = vmatprep.subr.bf16.mxu0 0
        %1601 = vmatpush1.bf16.msra.mxu0 0
        %1602 = vmatprep.subr.bf16.mxu0 0
        %1603 = vmatpush1.bf16.msra.mxu0 0
        %1604 = vmatprep.subr.bf16.mxu0 0
        %1605 = vmatpush1.bf16.msra.mxu0 0
        %1606 = vmatprep.mubr.bf16.mxu0 0
        %1607 = vmatmul.mubr.bf16.gmra.mrb[0].mxu0 %v1563
        %v1608 = vpop.f32.mrb[0].mxu0
        %v1609 = vadd.f32 0.0, %v1608
        %v1610 = vpop.f32.mrb[0].mxu0
        %v1611 = vpop.f32.mrb[0].mxu0
        %v1612 = vadd.f32 0.0, %v1611
        %v1613 = vpop.f32.mrb[0].mxu0
        %1614 = vmatprep.mubr.bf16.mxu0 0
        %1615 = vmatmul.mubr.bf16.gmra.mrb[0].mxu0 %v1566
        %v1616 = vpop.f32.mrb[0].mxu0
        %v1617 = vadd.f32 0.0, %v1616
        %v1618 = vpop.f32.mrb[0].mxu0
        %v1619 = vpop.f32.mrb[0].mxu0
        %v1620 = vadd.f32 0.0, %v1619
        %v1621 = vpop.f32.mrb[0].mxu0
        %1622 = vmatprep.mubr.bf16.mxu0 0
        %1623 = vmatmul.mubr.bf16.gmra.mrb[0].mxu0 %v1569
        %v1624 = vpop.f32.mrb[0].mxu0
        %v1625 = vadd.f32 0.0, %v1624
        %v1626 = vpop.f32.mrb[0].mxu0
        %v1627 = vpop.f32.mrb[0].mxu0
        %v1628 = vadd.f32 0.0, %v1627
        %v1629 = vpop.f32.mrb[0].mxu0
        %1630 = vmatprep.mubr.bf16.mxu0 0
        %1631 = vmatmul.mubr.bf16.gmra.mrb[0].mxu0 %v1572
        %v1632 = vpop.f32.mrb[0].mxu0
        %v1633 = vadd.f32 0.0, %v1632
        %v1634 = vpop.f32.mrb[0].mxu0
        %v1635 = vpop.f32.mrb[0].mxu0
        %v1636 = vadd.f32 0.0, %v1635
        %v1637 = vpop.f32.mrb[0].mxu0
        %1638 = vdwg.mxu0
        %v1639 = vpack.c.bf16 %v1612, %v1609
        %v1640 = vpack.c.bf16 %v1620, %v1617
        %v1641 = vpack.c.bf16 %v1628, %v1625
        %v1642 = vpack.c.bf16 %v1636, %v1633
        %1647 = vrot.lane.b32.xlu0 %v1368, 64
        %v1648 = vpop.permute.xlu0 %1647
        %1649 = vrot.lane.b32.xlu0 %v1369, 64
        %v1650 = vpop.permute.xlu0 %1649
        %1651 = vrot.lane.b32.xlu0 %v1370, 64
        %v1652 = vpop.permute.xlu0 %1651
        %1653 = vrot.lane.b32.xlu0 %v1371, 64
        %v1654 = vpop.permute.xlu0 %1653
        %1659 = vrot.lane.b32.xlu0 %v1372, 64
        %v1660 = vpop.permute.xlu0 %1659
        %1661 = vrot.lane.b32.xlu0 %v1373, 64
        %v1662 = vpop.permute.xlu0 %1661
        %1663 = vrot.lane.b32.xlu0 %v1374, 64
        %v1664 = vpop.permute.xlu0 %1663
        %1665 = vrot.lane.b32.xlu0 %v1375, 64
        %v1666 = vpop.permute.xlu0 %1665
        %v1668 = vsel %vm1380, %v1648, 0
        %v1671 = vsel %vm1380, %v1650, 0
        %v1674 = vsel %vm1380, %v1652, 0
        %v1677 = vsel %vm1380, %v1654, 0
        %v1680 = vsel %vm1380, %v1660, 0
        %v1683 = vsel %vm1380, %v1662, 0
        %v1686 = vsel %vm1380, %v1664, 0
        %v1689 = vsel %vm1380, %v1666, 0
        %1691 = vmatprep.subr.bf16.mxu0 0
        %1692 = vmatpush1.bf16.xpose.msra.mxu0 %v1680
        %1693 = vmatprep.subr.bf16.mxu0 0
        %1694 = vmatpush1.bf16.xpose.msra.mxu0 %v1683
        %1695 = vmatprep.subr.bf16.mxu0 0
        %1696 = vmatpush1.bf16.xpose.msra.mxu0 %v1686
        %1697 = vmatprep.subr.bf16.mxu0 0
        %1698 = vmatpush1.bf16.xpose.msra.mxu0 %v1689
        %1699 = vmatprep.subr.bf16.mxu0 0
        %1700 = vmatpush1.bf16.xpose.msra.mxu0 0
        %1701 = vmatprep.subr.bf16.mxu0 0
        %1702 = vmatpush1.bf16.xpose.msra.mxu0 0
        %1703 = vmatprep.subr.bf16.mxu0 0
        %1704 = vmatpush1.bf16.xpose.msra.mxu0 0
        %1705 = vmatprep.subr.bf16.mxu0 0
        %1706 = vmatpush1.bf16.xpose.msra.mxu0 0
        %1707 = vmatprep.subr.bf16.mxu0 0
        %1708 = vmatpush1.bf16.xpose.msra.mxu0 0
        %1709 = vmatprep.subr.bf16.mxu0 0
        %1710 = vmatpush1.bf16.xpose.msra.mxu0 0
        %1711 = vmatprep.subr.bf16.mxu0 0
        %1712 = vmatpush1.bf16.xpose.msra.mxu0 0
        %1713 = vmatprep.subr.bf16.mxu0 0
        %1714 = vmatpush1.bf16.xpose.msra.mxu0 0
        %1715 = vmatprep.subr.bf16.mxu0 0
        %1716 = vmatpush1.bf16.xpose.msra.mxu0 0
        %1717 = vmatprep.subr.bf16.mxu0 0
        %1718 = vmatpush1.bf16.xpose.msra.mxu0 0
        %1719 = vmatprep.subr.bf16.mxu0 0
        %1720 = vmatpush1.bf16.xpose.msra.mxu0 0
        %1721 = vmatprep.subr.bf16.mxu0 0
        %1722 = vmatpush1.bf16.xpose.msra.mxu0 0
        %1723 = vmatprep.mubr.bf16.mxu0 0
        %1724 = vmatmul.mubr.bf16.gmra.mrb[0].mxu0 %v1668
        %v1725 = vpop.f32.mrb[0].mxu0
        %v1726 = vadd.f32 0.0, %v1725
        %v1727 = vpop.f32.mrb[0].mxu0
        %v1728 = vpop.f32.mrb[0].mxu0
        %v1729 = vadd.f32 0.0, %v1728
        %v1730 = vpop.f32.mrb[0].mxu0
        %1731 = vmatprep.mubr.bf16.mxu0 0
        %1732 = vmatmul.mubr.bf16.gmra.mrb[0].mxu0 %v1671
        %v1733 = vpop.f32.mrb[0].mxu0
        %v1734 = vadd.f32 0.0, %v1733
        %v1735 = vpop.f32.mrb[0].mxu0
        %v1736 = vpop.f32.mrb[0].mxu0
        %v1737 = vadd.f32 0.0, %v1736
        %v1738 = vpop.f32.mrb[0].mxu0
        %1739 = vmatprep.mubr.bf16.mxu0 0
        %1740 = vmatmul.mubr.bf16.gmra.mrb[0].mxu0 %v1674
        %v1741 = vpop.f32.mrb[0].mxu0
        %v1742 = vadd.f32 0.0, %v1741
        %v1743 = vpop.f32.mrb[0].mxu0
        %v1744 = vpop.f32.mrb[0].mxu0
        %v1745 = vadd.f32 0.0, %v1744
        %v1746 = vpop.f32.mrb[0].mxu0
        %1747 = vmatprep.mubr.bf16.mxu0 0
        %1748 = vmatmul.mubr.bf16.gmra.mrb[0].mxu0 %v1677
        %v1749 = vpop.f32.mrb[0].mxu0
        %v1750 = vadd.f32 0.0, %v1749
        %v1751 = vpop.f32.mrb[0].mxu0
        %v1752 = vpop.f32.mrb[0].mxu0
        %v1753 = vadd.f32 0.0, %v1752
        %v1754 = vpop.f32.mrb[0].mxu0
        %1755 = vdwg.mxu0
        %v1756 = vsel %vm1380, %v1726, -inf
        %1757 = vmax.xlane.f32.xlu0 %v1756
        %v1758 = vpop.xlane.xlu0 %1757
        %v1759 = vsel %vm1380, %v1729, -inf
        %1760 = vmax.xlane.f32.xlu0 %v1759
        %v1761 = vpop.xlane.xlu0 %1760
        %v1762 = vsel %vm1380, %v1734, -inf
        %1763 = vmax.xlane.f32.xlu0 %v1762
        %v1764 = vpop.xlane.xlu0 %1763
        %v1765 = vsel %vm1380, %v1737, -inf
        %1766 = vmax.xlane.f32.xlu0 %v1765
        %v1767 = vpop.xlane.xlu0 %1766
        %v1768 = vsel %vm1380, %v1742, -inf
        %1769 = vmax.xlane.f32.xlu0 %v1768
        %v1770 = vpop.xlane.xlu0 %1769
        %v1771 = vsel %vm1380, %v1745, -inf
        %1772 = vmax.xlane.f32.xlu0 %v1771
        %v1773 = vpop.xlane.xlu0 %1772
        %v1774 = vsel %vm1380, %v1750, -inf
        %1775 = vmax.xlane.f32.xlu0 %v1774
        %v1776 = vpop.xlane.xlu0 %1775
        %v1777 = vsel %vm1380, %v1753, -inf
        %1778 = vmax.xlane.f32.xlu0 %v1777
        %v1779 = vpop.xlane.xlu0 %1778
        %v1780 = vsub.f32 %v1726, %v1758
        %v1781 = vsub.f32 %v1729, %v1761
        %v1782 = vsub.f32 %v1734, %v1764
        %v1783 = vsub.f32 %v1737, %v1767
        %v1784 = vsub.f32 %v1742, %v1770
        %v1785 = vsub.f32 %v1745, %v1773
        %v1786 = vsub.f32 %v1750, %v1776
        %v1787 = vsub.f32 %v1753, %v1779
        %v1788 = vmul.f32 %v1780, 1.442695
        %v1789 = vpow.pop %v1788
        %v1790 = vmul.f32 %v1781, 1.442695
        %v1791 = vpow.pop %v1790
        %v1792 = vmul.f32 %v1782, 1.442695
        %v1793 = vpow.pop %v1792
        %v1794 = vmul.f32 %v1783, 1.442695
        %v1795 = vpow.pop %v1794
        %v1796 = vmul.f32 %v1784, 1.442695
        %v1797 = vpow.pop %v1796
        %v1798 = vmul.f32 %v1785, 1.442695
        %v1799 = vpow.pop %v1798
        %v1800 = vmul.f32 %v1786, 1.442695
        %v1801 = vpow.pop %v1800
        %v1802 = vmul.f32 %v1787, 1.442695
        %v1803 = vpow.pop %v1802
        %v1804 = vsel %vm1380, %v1789, 0.0
        %1805 = vadd.xlane.f32.xlu0 %v1804
        %v1806 = vpop.xlane.xlu0 %1805
        %v1807 = vsel %vm1380, %v1791, 0.0
        %1808 = vadd.xlane.f32.xlu0 %v1807
        %v1809 = vpop.xlane.xlu0 %1808
        %v1810 = vsel %vm1380, %v1793, 0.0
        %1811 = vadd.xlane.f32.xlu0 %v1810
        %v1812 = vpop.xlane.xlu0 %1811
        %v1813 = vsel %vm1380, %v1795, 0.0
        %1814 = vadd.xlane.f32.xlu0 %v1813
        %v1815 = vpop.xlane.xlu0 %1814
        %v1816 = vsel %vm1380, %v1797, 0.0
        %1817 = vadd.xlane.f32.xlu0 %v1816
        %v1818 = vpop.xlane.xlu0 %1817
        %v1819 = vsel %vm1380, %v1799, 0.0
        %1820 = vadd.xlane.f32.xlu0 %v1819
        %v1821 = vpop.xlane.xlu0 %1820
        %v1822 = vsel %vm1380, %v1801, 0.0
        %1823 = vadd.xlane.f32.xlu0 %v1822
        %v1824 = vpop.xlane.xlu0 %1823
        %v1825 = vsel %vm1380, %v1803, 0.0
        %1826 = vadd.xlane.f32.xlu0 %v1825
        %v1827 = vpop.xlane.xlu0 %1826
        %v1828 = vrcp.pop %v1806
        %v1829 = vmul.f32 %v1789, %v1828
        %v1830 = vrcp.pop %v1809
        %v1831 = vmul.f32 %v1791, %v1830
        %v1832 = vrcp.pop %v1812
        %v1833 = vmul.f32 %v1793, %v1832
        %v1834 = vrcp.pop %v1815
        %v1835 = vmul.f32 %v1795, %v1834
        %v1836 = vrcp.pop %v1818
        %v1837 = vmul.f32 %v1797, %v1836
        %v1838 = vrcp.pop %v1821
        %v1839 = vmul.f32 %v1799, %v1838
        %v1840 = vrcp.pop %v1824
        %v1841 = vmul.f32 %v1801, %v1840
        %v1842 = vrcp.pop %v1827
        %v1843 = vmul.f32 %v1803, %v1842
        %v1844 = vpack.c.bf16 %v1831, %v1829
        %v1845 = vpack.c.bf16 %v1835, %v1833
        %v1846 = vpack.c.bf16 %v1839, %v1837
        %v1847 = vpack.c.bf16 %v1843, %v1841
        %1852 = vrot.lane.b32.xlu0 %v1376, 64
        %v1853 = vpop.permute.xlu0 %1852
        %1854 = vrot.lane.b32.xlu0 %v1377, 64
        %v1855 = vpop.permute.xlu0 %1854
        %1856 = vrot.lane.b32.xlu0 %v1378, 64
        %v1857 = vpop.permute.xlu0 %1856
        %1858 = vrot.lane.b32.xlu0 %v1379, 64
        %v1859 = vpop.permute.xlu0 %1858
        %v1865 = vsel %vm1380, %v1844, 0
        %v1868 = vsel %vm1380, %v1845, 0
        %v1871 = vsel %vm1380, %v1846, 0
        %v1874 = vsel %vm1380, %v1847, 0
        %1876 = vmatprep.subr.bf16.mxu0 0
        %1877 = vmatpush1.bf16.msra.mxu0 %v1853
        %1878 = vmatprep.subr.bf16.mxu0 0
        %1879 = vmatpush1.bf16.msra.mxu0 %v1855
        %1880 = vmatprep.subr.bf16.mxu0 0
        %1881 = vmatpush1.bf16.msra.mxu0 %v1857
        %1882 = vmatprep.subr.bf16.mxu0 0
        %1883 = vmatpush1.bf16.msra.mxu0 %v1859
        %1884 = vmatprep.subr.bf16.mxu0 0
        %1885 = vmatpush1.bf16.msra.mxu0 0
        %1886 = vmatprep.subr.bf16.mxu0 0
        %1887 = vmatpush1.bf16.msra.mxu0 0
        %1888 = vmatprep.subr.bf16.mxu0 0
        %1889 = vmatpush1.bf16.msra.mxu0 0
        %1890 = vmatprep.subr.bf16.mxu0 0
        %1891 = vmatpush1.bf16.msra.mxu0 0
        %1892 = vmatprep.subr.bf16.mxu0 0
        %1893 = vmatpush1.bf16.msra.mxu0 0
        %1894 = vmatprep.subr.bf16.mxu0 0
        %1895 = vmatpush1.bf16.msra.mxu0 0
        %1896 = vmatprep.subr.bf16.mxu0 0
        %1897 = vmatpush1.bf16.msra.mxu0 0
        %1898 = vmatprep.subr.bf16.mxu0 0
        %1899 = vmatpush1.bf16.msra.mxu0 0
        %1900 = vmatprep.subr.bf16.mxu0 0
        %1901 = vmatpush1.bf16.msra.mxu0 0
        %1902 = vmatprep.subr.bf16.mxu0 0
        %1903 = vmatpush1.bf16.msra.mxu0 0
        %1904 = vmatprep.subr.bf16.mxu0 0
        %1905 = vmatpush1.bf16.msra.mxu0 0
        %1906 = vmatprep.subr.bf16.mxu0 0
        %1907 = vmatpush1.bf16.msra.mxu0 0
        %1908 = vmatprep.mubr.bf16.mxu0 0
        %1909 = vmatmul.mubr.bf16.gmra.mrb[0].mxu0 %v1865
        %v1910 = vpop.f32.mrb[0].mxu0
        %v1911 = vadd.f32 0.0, %v1910
        %v1912 = vpop.f32.mrb[0].mxu0
        %v1913 = vpop.f32.mrb[0].mxu0
        %v1914 = vadd.f32 0.0, %v1913
        %v1915 = vpop.f32.mrb[0].mxu0
        %1916 = vmatprep.mubr.bf16.mxu0 0
        %1917 = vmatmul.mubr.bf16.gmra.mrb[0].mxu0 %v1868
        %v1918 = vpop.f32.mrb[0].mxu0
        %v1919 = vadd.f32 0.0, %v1918
        %v1920 = vpop.f32.mrb[0].mxu0
        %v1921 = vpop.f32.mrb[0].mxu0
        %v1922 = vadd.f32 0.0, %v1921
        %v1923 = vpop.f32.mrb[0].mxu0
        %1924 = vmatprep.mubr.bf16.mxu0 0
        %1925 = vmatmul.mubr.bf16.gmra.mrb[0].mxu0 %v1871
        %v1926 = vpop.f32.mrb[0].mxu0
        %v1927 = vadd.f32 0.0, %v1926
        %v1928 = vpop.f32.mrb[0].mxu0
        %v1929 = vpop.f32.mrb[0].mxu0
        %v1930 = vadd.f32 0.0, %v1929
        %v1931 = vpop.f32.mrb[0].mxu0
        %1932 = vmatprep.mubr.bf16.mxu0 0
        %1933 = vmatmul.mubr.bf16.gmra.mrb[0].mxu0 %v1874
        %v1934 = vpop.f32.mrb[0].mxu0
        %v1935 = vadd.f32 0.0, %v1934
        %v1936 = vpop.f32.mrb[0].mxu0
        %v1937 = vpop.f32.mrb[0].mxu0
        %v1938 = vadd.f32 0.0, %v1937
        %v1939 = vpop.f32.mrb[0].mxu0
        %1940 = vdwg.mxu0
        %v1941 = vpack.c.bf16 %v1914, %v1911
        %v1942 = vpack.c.bf16 %v1922, %v1919
        %v1943 = vpack.c.bf16 %v1930, %v1927
        %v1944 = vpack.c.bf16 %v1938, %v1935
        %v1945 = vld [vmem:[#allocation2 + $0x8] sm:$0xff]
        %v1946 = vld [vmem:[#allocation2 + $0x68] sm:$0xff]
        %v1947 = vld [vmem:[#allocation2 + $0xc8] sm:$0xff]
        %v1948 = vld [vmem:[#allocation2 + $0x128] sm:$0xff]
        %v1949 = vld [vmem:[#allocation2 + $0x28] sm:$0xff]
        %v1950 = vld [vmem:[#allocation2 + $0x88] sm:$0xff]
        %v1951 = vld [vmem:[#allocation2 + $0xe8] sm:$0xff]
        %v1952 = vld [vmem:[#allocation2 + $0x148] sm:$0xff]
        %v1953 = vld [vmem:[#allocation2 + $0x48] sm:$0xff]
        %v1954 = vld [vmem:[#allocation2 + $0xa8] sm:$0xff]
        %v1955 = vld [vmem:[#allocation2 + $0x108] sm:$0xff]
        %v1956 = vld [vmem:[#allocation2 + $0x168] sm:$0xff]
        %v1958 = vsel %vm1380, %v1945, 0
        %v1961 = vsel %vm1380, %v1946, 0
        %v1964 = vsel %vm1380, %v1947, 0
        %v1967 = vsel %vm1380, %v1948, 0
        %v1970 = vsel %vm1380, %v1949, 0
        %v1973 = vsel %vm1380, %v1950, 0
        %v1976 = vsel %vm1380, %v1951, 0
        %v1979 = vsel %vm1380, %v1952, 0
        %1981 = vmatprep.subr.bf16.mxu0 0
        %1982 = vmatpush1.bf16.xpose.msra.mxu0 %v1970
        %1983 = vmatprep.subr.bf16.mxu0 0
        %1984 = vmatpush1.bf16.xpose.msra.mxu0 %v1973
        %1985 = vmatprep.subr.bf16.mxu0 0
        %1986 = vmatpush1.bf16.xpose.msra.mxu0 %v1976
        %1987 = vmatprep.subr.bf16.mxu0 0
        %1988 = vmatpush1.bf16.xpose.msra.mxu0 %v1979
        %1989 = vmatprep.subr.bf16.mxu0 0
        %1990 = vmatpush1.bf16.xpose.msra.mxu0 0
        %1991 = vmatprep.subr.bf16.mxu0 0
        %1992 = vmatpush1.bf16.xpose.msra.mxu0 0
        %1993 = vmatprep.subr.bf16.mxu0 0
        %1994 = vmatpush1.bf16.xpose.msra.mxu0 0
        %1995 = vmatprep.subr.bf16.mxu0 0
        %1996 = vmatpush1.bf16.xpose.msra.mxu0 0
        %1997 = vmatprep.subr.bf16.mxu0 0
        %1998 = vmatpush1.bf16.xpose.msra.mxu0 0
        %1999 = vmatprep.subr.bf16.mxu0 0
        %2000 = vmatpush1.bf16.xpose.msra.mxu0 0
        %2001 = vmatprep.subr.bf16.mxu0 0
        %2002 = vmatpush1.bf16.xpose.msra.mxu0 0
        %2003 = vmatprep.subr.bf16.mxu0 0
        %2004 = vmatpush1.bf16.xpose.msra.mxu0 0
        %2005 = vmatprep.subr.bf16.mxu0 0
        %2006 = vmatpush1.bf16.xpose.msra.mxu0 0
        %2007 = vmatprep.subr.bf16.mxu0 0
        %2008 = vmatpush1.bf16.xpose.msra.mxu0 0
        %2009 = vmatprep.subr.bf16.mxu0 0
        %2010 = vmatpush1.bf16.xpose.msra.mxu0 0
        %2011 = vmatprep.subr.bf16.mxu0 0
        %2012 = vmatpush1.bf16.xpose.msra.mxu0 0
        %2013 = vmatprep.mubr.bf16.mxu0 0
        %2014 = vmatmul.mubr.bf16.gmra.mrb[0].mxu0 %v1958
        %v2015 = vpop.f32.mrb[0].mxu0
        %v2016 = vadd.f32 0.0, %v2015
        %v2017 = vpop.f32.mrb[0].mxu0
        %v2018 = vpop.f32.mrb[0].mxu0
        %v2019 = vadd.f32 0.0, %v2018
        %v2020 = vpop.f32.mrb[0].mxu0
        %2021 = vmatprep.mubr.bf16.mxu0 0
        %2022 = vmatmul.mubr.bf16.gmra.mrb[0].mxu0 %v1961
        %v2023 = vpop.f32.mrb[0].mxu0
        %v2024 = vadd.f32 0.0, %v2023
        %v2025 = vpop.f32.mrb[0].mxu0
        %v2026 = vpop.f32.mrb[0].mxu0
        %v2027 = vadd.f32 0.0, %v2026
        %v2028 = vpop.f32.mrb[0].mxu0
        %2029 = vmatprep.mubr.bf16.mxu0 0
        %2030 = vmatmul.mubr.bf16.gmra.mrb[0].mxu0 %v1964
        %v2031 = vpop.f32.mrb[0].mxu0
        %v2032 = vadd.f32 0.0, %v2031
        %v2033 = vpop.f32.mrb[0].mxu0
        %v2034 = vpop.f32.mrb[0].mxu0
        %v2035 = vadd.f32 0.0, %v2034
        %v2036 = vpop.f32.mrb[0].mxu0
        %2037 = vmatprep.mubr.bf16.mxu0 0
        %2038 = vmatmul.mubr.bf16.gmra.mrb[0].mxu0 %v1967
        %v2039 = vpop.f32.mrb[0].mxu0
        %v2040 = vadd.f32 0.0, %v2039
        %v2041 = vpop.f32.mrb[0].mxu0
        %v2042 = vpop.f32.mrb[0].mxu0
        %v2043 = vadd.f32 0.0, %v2042
        %v2044 = vpop.f32.mrb[0].mxu0
        %2045 = vdwg.mxu0
        %v2046 = vsel %vm1380, %v2016, -inf
        %2047 = vmax.xlane.f32.xlu0 %v2046
        %v2048 = vpop.xlane.xlu0 %2047
        %v2049 = vsel %vm1380, %v2019, -inf
        %2050 = vmax.xlane.f32.xlu0 %v2049
        %v2051 = vpop.xlane.xlu0 %2050
        %v2052 = vsel %vm1380, %v2024, -inf
        %2053 = vmax.xlane.f32.xlu0 %v2052
        %v2054 = vpop.xlane.xlu0 %2053
        %v2055 = vsel %vm1380, %v2027, -inf
        %2056 = vmax.xlane.f32.xlu0 %v2055
        %v2057 = vpop.xlane.xlu0 %2056
        %v2058 = vsel %vm1380, %v2032, -inf
        %2059 = vmax.xlane.f32.xlu0 %v2058
        %v2060 = vpop.xlane.xlu0 %2059
        %v2061 = vsel %vm1380, %v2035, -inf
        %2062 = vmax.xlane.f32.xlu0 %v2061
        %v2063 = vpop.xlane.xlu0 %2062
        %v2064 = vsel %vm1380, %v2040, -inf
        %2065 = vmax.xlane.f32.xlu0 %v2064
        %v2066 = vpop.xlane.xlu0 %2065
        %v2067 = vsel %vm1380, %v2043, -inf
        %2068 = vmax.xlane.f32.xlu0 %v2067
        %v2069 = vpop.xlane.xlu0 %2068
        %v2070 = vsub.f32 %v2016, %v2048
        %v2071 = vsub.f32 %v2019, %v2051
        %v2072 = vsub.f32 %v2024, %v2054
        %v2073 = vsub.f32 %v2027, %v2057
        %v2074 = vsub.f32 %v2032, %v2060
        %v2075 = vsub.f32 %v2035, %v2063
        %v2076 = vsub.f32 %v2040, %v2066
        %v2077 = vsub.f32 %v2043, %v2069
        %v2078 = vmul.f32 %v2070, 1.442695
        %v2079 = vpow.pop %v2078
        %v2080 = vmul.f32 %v2071, 1.442695
        %v2081 = vpow.pop %v2080
        %v2082 = vmul.f32 %v2072, 1.442695
        %v2083 = vpow.pop %v2082
        %v2084 = vmul.f32 %v2073, 1.442695
        %v2085 = vpow.pop %v2084
        %v2086 = vmul.f32 %v2074, 1.442695
        %v2087 = vpow.pop %v2086
        %v2088 = vmul.f32 %v2075, 1.442695
        %v2089 = vpow.pop %v2088
        %v2090 = vmul.f32 %v2076, 1.442695
        %v2091 = vpow.pop %v2090
        %v2092 = vmul.f32 %v2077, 1.442695
        %v2093 = vpow.pop %v2092
        %v2094 = vsel %vm1380, %v2079, 0.0
        %2095 = vadd.xlane.f32.xlu0 %v2094
        %v2096 = vpop.xlane.xlu0 %2095
        %v2097 = vsel %vm1380, %v2081, 0.0
        %2098 = vadd.xlane.f32.xlu0 %v2097
        %v2099 = vpop.xlane.xlu0 %2098
        %v2100 = vsel %vm1380, %v2083, 0.0
        %2101 = vadd.xlane.f32.xlu0 %v2100
        %v2102 = vpop.xlane.xlu0 %2101
        %v2103 = vsel %vm1380, %v2085, 0.0
        %2104 = vadd.xlane.f32.xlu0 %v2103
        %v2105 = vpop.xlane.xlu0 %2104
        %v2106 = vsel %vm1380, %v2087, 0.0
        %2107 = vadd.xlane.f32.xlu0 %v2106
        %v2108 = vpop.xlane.xlu0 %2107
        %v2109 = vsel %vm1380, %v2089, 0.0
        %2110 = vadd.xlane.f32.xlu0 %v2109
        %v2111 = vpop.xlane.xlu0 %2110
        %v2112 = vsel %vm1380, %v2091, 0.0
        %2113 = vadd.xlane.f32.xlu0 %v2112
        %v2114 = vpop.xlane.xlu0 %2113
        %v2115 = vsel %vm1380, %v2093, 0.0
        %2116 = vadd.xlane.f32.xlu0 %v2115
        %v2117 = vpop.xlane.xlu0 %2116
        %v2118 = vrcp.pop %v2096
        %v2119 = vmul.f32 %v2079, %v2118
        %v2120 = vrcp.pop %v2099
        %v2121 = vmul.f32 %v2081, %v2120
        %v2122 = vrcp.pop %v2102
        %v2123 = vmul.f32 %v2083, %v2122
        %v2124 = vrcp.pop %v2105
        %v2125 = vmul.f32 %v2085, %v2124
        %v2126 = vrcp.pop %v2108
        %v2127 = vmul.f32 %v2087, %v2126
        %v2128 = vrcp.pop %v2111
        %v2129 = vmul.f32 %v2089, %v2128
        %v2130 = vrcp.pop %v2114
        %v2131 = vmul.f32 %v2091, %v2130
        %v2132 = vrcp.pop %v2117
        %v2133 = vmul.f32 %v2093, %v2132
        %v2134 = vpack.c.bf16 %v2121, %v2119
        %v2135 = vpack.c.bf16 %v2125, %v2123
        %v2136 = vpack.c.bf16 %v2129, %v2127
        %v2137 = vpack.c.bf16 %v2133, %v2131
        %v2139 = vsel %vm1380, %v2134, 0
        %v2142 = vsel %vm1380, %v2135, 0
        %v2145 = vsel %vm1380, %v2136, 0
        %v2148 = vsel %vm1380, %v2137, 0
        %2150 = vmatprep.subr.bf16.mxu0 0
        %2151 = vmatpush1.bf16.msra.mxu0 %v1953
        %2152 = vmatprep.subr.bf16.mxu0 0
        %2153 = vmatpush1.bf16.msra.mxu0 %v1954
        %2154 = vmatprep.subr.bf16.mxu0 0
        %2155 = vmatpush1.bf16.msra.mxu0 %v1955
        %2156 = vmatprep.subr.bf16.mxu0 0
        %2157 = vmatpush1.bf16.msra.mxu0 %v1956
        %2158 = vmatprep.subr.bf16.mxu0 0
        %2159 = vmatpush1.bf16.msra.mxu0 0
        %2160 = vmatprep.subr.bf16.mxu0 0
        %2161 = vmatpush1.bf16.msra.mxu0 0
        %2162 = vmatprep.subr.bf16.mxu0 0
        %2163 = vmatpush1.bf16.msra.mxu0 0
        %2164 = vmatprep.subr.bf16.mxu0 0
        %2165 = vmatpush1.bf16.msra.mxu0 0
        %2166 = vmatprep.subr.bf16.mxu0 0
        %2167 = vmatpush1.bf16.msra.mxu0 0
        %2168 = vmatprep.subr.bf16.mxu0 0
        %2169 = vmatpush1.bf16.msra.mxu0 0
        %2170 = vmatprep.subr.bf16.mxu0 0
        %2171 = vmatpush1.bf16.msra.mxu0 0
        %2172 = vmatprep.subr.bf16.mxu0 0
        %2173 = vmatpush1.bf16.msra.mxu0 0
        %2174 = vmatprep.subr.bf16.mxu0 0
        %2175 = vmatpush1.bf16.msra.mxu0 0
        %2176 = vmatprep.subr.bf16.mxu0 0
        %2177 = vmatpush1.bf16.msra.mxu0 0
        %2178 = vmatprep.subr.bf16.mxu0 0
        %2179 = vmatpush1.bf16.msra.mxu0 0
        %2180 = vmatprep.subr.bf16.mxu0 0
        %2181 = vmatpush1.bf16.msra.mxu0 0
        %2182 = vmatprep.mubr.bf16.mxu0 0
        %2183 = vmatmul.mubr.bf16.gmra.mrb[0].mxu0 %v2139
        %v2184 = vpop.f32.mrb[0].mxu0
        %v2185 = vadd.f32 0.0, %v2184
        %v2186 = vpop.f32.mrb[0].mxu0
        %v2187 = vpop.f32.mrb[0].mxu0
        %v2188 = vadd.f32 0.0, %v2187
        %v2189 = vpop.f32.mrb[0].mxu0
        %2190 = vmatprep.mubr.bf16.mxu0 0
        %2191 = vmatmul.mubr.bf16.gmra.mrb[0].mxu0 %v2142
        %v2192 = vpop.f32.mrb[0].mxu0
        %v2193 = vadd.f32 0.0, %v2192
        %v2194 = vpop.f32.mrb[0].mxu0
        %v2195 = vpop.f32.mrb[0].mxu0
        %v2196 = vadd.f32 0.0, %v2195
        %v2197 = vpop.f32.mrb[0].mxu0
        %2198 = vmatprep.mubr.bf16.mxu0 0
        %2199 = vmatmul.mubr.bf16.gmra.mrb[0].mxu0 %v2145
        %v2200 = vpop.f32.mrb[0].mxu0
        %v2201 = vadd.f32 0.0, %v2200
        %v2202 = vpop.f32.mrb[0].mxu0
        %v2203 = vpop.f32.mrb[0].mxu0
        %v2204 = vadd.f32 0.0, %v2203
        %v2205 = vpop.f32.mrb[0].mxu0
        %2206 = vmatprep.mubr.bf16.mxu0 0
        %2207 = vmatmul.mubr.bf16.gmra.mrb[0].mxu0 %v2148
        %v2208 = vpop.f32.mrb[0].mxu0
        %v2209 = vadd.f32 0.0, %v2208
        %v2210 = vpop.f32.mrb[0].mxu0
        %v2211 = vpop.f32.mrb[0].mxu0
        %v2212 = vadd.f32 0.0, %v2211
        %v2213 = vpop.f32.mrb[0].mxu0
        %2214 = vdwg.mxu0
        %v2215 = vpack.c.bf16 %v2188, %v2185
        %v2216 = vpack.c.bf16 %v2196, %v2193
        %v2217 = vpack.c.bf16 %v2204, %v2201
        %v2218 = vpack.c.bf16 %v2212, %v2209
        %2223 = vrot.lane.b32.xlu0 %v1945, 64
        %v2224 = vpop.permute.xlu0 %2223
        %2225 = vrot.lane.b32.xlu0 %v1946, 64
        %v2226 = vpop.permute.xlu0 %2225
        %2227 = vrot.lane.b32.xlu0 %v1947, 64
        %v2228 = vpop.permute.xlu0 %2227
        %2229 = vrot.lane.b32.xlu0 %v1948, 64
        %v2230 = vpop.permute.xlu0 %2229
        %2235 = vrot.lane.b32.xlu0 %v1949, 64
        %v2236 = vpop.permute.xlu0 %2235
        %2237 = vrot.lane.b32.xlu0 %v1950, 64
        %v2238 = vpop.permute.xlu0 %2237
        %2239 = vrot.lane.b32.xlu0 %v1951, 64
        %v2240 = vpop.permute.xlu0 %2239
        %2241 = vrot.lane.b32.xlu0 %v1952, 64
        %v2242 = vpop.permute.xlu0 %2241
        %v2244 = vsel %vm1380, %v2224, 0
        %v2247 = vsel %vm1380, %v2226, 0
        %v2250 = vsel %vm1380, %v2228, 0
        %v2253 = vsel %vm1380, %v2230, 0
        %v2256 = vsel %vm1380, %v2236, 0
        %v2259 = vsel %vm1380, %v2238, 0
        %v2262 = vsel %vm1380, %v2240, 0
        %v2265 = vsel %vm1380, %v2242, 0
        %2267 = vmatprep.subr.bf16.mxu0 0
        %2268 = vmatpush1.bf16.xpose.msra.mxu0 %v2256
        %2269 = vmatprep.subr.bf16.mxu0 0
        %2270 = vmatpush1.bf16.xpose.msra.mxu0 %v2259
        %2271 = vmatprep.subr.bf16.mxu0 0
        %2272 = vmatpush1.bf16.xpose.msra.mxu0 %v2262
        %2273 = vmatprep.subr.bf16.mxu0 0
        %2274 = vmatpush1.bf16.xpose.msra.mxu0 %v2265
        %2275 = vmatprep.subr.bf16.mxu0 0
        %2276 = vmatpush1.bf16.xpose.msra.mxu0 0
        %2277 = vmatprep.subr.bf16.mxu0 0
        %2278 = vmatpush1.bf16.xpose.msra.mxu0 0
        %2279 = vmatprep.subr.bf16.mxu0 0
        %2280 = vmatpush1.bf16.xpose.msra.mxu0 0
        %2281 = vmatprep.subr.bf16.mxu0 0
        %2282 = vmatpush1.bf16.xpose.msra.mxu0 0
        %2283 = vmatprep.subr.bf16.mxu0 0
        %2284 = vmatpush1.bf16.xpose.msra.mxu0 0
        %2285 = vmatprep.subr.bf16.mxu0 0
        %2286 = vmatpush1.bf16.xpose.msra.mxu0 0
        %2287 = vmatprep.subr.bf16.mxu0 0
        %2288 = vmatpush1.bf16.xpose.msra.mxu0 0
        %2289 = vmatprep.subr.bf16.mxu0 0
        %2290 = vmatpush1.bf16.xpose.msra.mxu0 0
        %2291 = vmatprep.subr.bf16.mxu0 0
        %2292 = vmatpush1.bf16.xpose.msra.mxu0 0
        %2293 = vmatprep.subr.bf16.mxu0 0
        %2294 = vmatpush1.bf16.xpose.msra.mxu0 0
        %2295 = vmatprep.subr.bf16.mxu0 0
        %2296 = vmatpush1.bf16.xpose.msra.mxu0 0
        %2297 = vmatprep.subr.bf16.mxu0 0
        %2298 = vmatpush1.bf16.xpose.msra.mxu0 0
        %2299 = vmatprep.mubr.bf16.mxu0 0
        %2300 = vmatmul.mubr.bf16.gmra.mrb[0].mxu0 %v2244
        %v2301 = vpop.f32.mrb[0].mxu0
        %v2302 = vadd.f32 0.0, %v2301
        %v2303 = vpop.f32.mrb[0].mxu0
        %v2304 = vpop.f32.mrb[0].mxu0
        %v2305 = vadd.f32 0.0, %v2304
        %v2306 = vpop.f32.mrb[0].mxu0
        %2307 = vmatprep.mubr.bf16.mxu0 0
        %2308 = vmatmul.mubr.bf16.gmra.mrb[0].mxu0 %v2247
        %v2309 = vpop.f32.mrb[0].mxu0
        %v2310 = vadd.f32 0.0, %v2309
        %v2311 = vpop.f32.mrb[0].mxu0
        %v2312 = vpop.f32.mrb[0].mxu0
        %v2313 = vadd.f32 0.0, %v2312
        %v2314 = vpop.f32.mrb[0].mxu0
        %2315 = vmatprep.mubr.bf16.mxu0 0
        %2316 = vmatmul.mubr.bf16.gmra.mrb[0].mxu0 %v2250
        %v2317 = vpop.f32.mrb[0].mxu0
        %v2318 = vadd.f32 0.0, %v2317
        %v2319 = vpop.f32.mrb[0].mxu0
        %v2320 = vpop.f32.mrb[0].mxu0
        %v2321 = vadd.f32 0.0, %v2320
        %v2322 = vpop.f32.mrb[0].mxu0
        %2323 = vmatprep.mubr.bf16.mxu0 0
        %2324 = vmatmul.mubr.bf16.gmra.mrb[0].mxu0 %v2253
        %v2325 = vpop.f32.mrb[0].mxu0
        %v2326 = vadd.f32 0.0, %v2325
        %v2327 = vpop.f32.mrb[0].mxu0
        %v2328 = vpop.f32.mrb[0].mxu0
        %v2329 = vadd.f32 0.0, %v2328
        %v2330 = vpop.f32.mrb[0].mxu0
        %2331 = vdwg.mxu0
        %v2332 = vsel %vm1380, %v2302, -inf
        %2333 = vmax.xlane.f32.xlu0 %v2332
        %v2334 = vpop.xlane.xlu0 %2333
        %v2335 = vsel %vm1380, %v2305, -inf
        %2336 = vmax.xlane.f32.xlu0 %v2335
        %v2337 = vpop.xlane.xlu0 %2336
        %v2338 = vsel %vm1380, %v2310, -inf
        %2339 = vmax.xlane.f32.xlu0 %v2338
        %v2340 = vpop.xlane.xlu0 %2339
        %v2341 = vsel %vm1380, %v2313, -inf
        %2342 = vmax.xlane.f32.xlu0 %v2341
        %v2343 = vpop.xlane.xlu0 %2342
        %v2344 = vsel %vm1380, %v2318, -inf
        %2345 = vmax.xlane.f32.xlu0 %v2344
        %v2346 = vpop.xlane.xlu0 %2345
        %v2347 = vsel %vm1380, %v2321, -inf
        %2348 = vmax.xlane.f32.xlu0 %v2347
        %v2349 = vpop.xlane.xlu0 %2348
        %v2350 = vsel %vm1380, %v2326, -inf
        %2351 = vmax.xlane.f32.xlu0 %v2350
        %v2352 = vpop.xlane.xlu0 %2351
        %v2353 = vsel %vm1380, %v2329, -inf
        %2354 = vmax.xlane.f32.xlu0 %v2353
        %v2355 = vpop.xlane.xlu0 %2354
        %v2356 = vsub.f32 %v2302, %v2334
        %v2357 = vsub.f32 %v2305, %v2337
        %v2358 = vsub.f32 %v2310, %v2340
        %v2359 = vsub.f32 %v2313, %v2343
        %v2360 = vsub.f32 %v2318, %v2346
        %v2361 = vsub.f32 %v2321, %v2349
        %v2362 = vsub.f32 %v2326, %v2352
        %v2363 = vsub.f32 %v2329, %v2355
        %v2364 = vmul.f32 %v2356, 1.442695
        %v2365 = vpow.pop %v2364
        %v2366 = vmul.f32 %v2357, 1.442695
        %v2367 = vpow.pop %v2366
        %v2368 = vmul.f32 %v2358, 1.442695
        %v2369 = vpow.pop %v2368
        %v2370 = vmul.f32 %v2359, 1.442695
        %v2371 = vpow.pop %v2370
        %v2372 = vmul.f32 %v2360, 1.442695
        %v2373 = vpow.pop %v2372
        %v2374 = vmul.f32 %v2361, 1.442695
        %v2375 = vpow.pop %v2374
        %v2376 = vmul.f32 %v2362, 1.442695
        %v2377 = vpow.pop %v2376
        %v2378 = vmul.f32 %v2363, 1.442695
        %v2379 = vpow.pop %v2378
        %v2380 = vsel %vm1380, %v2365, 0.0
        %2381 = vadd.xlane.f32.xlu0 %v2380
        %v2382 = vpop.xlane.xlu0 %2381
        %v2383 = vsel %vm1380, %v2367, 0.0
        %2384 = vadd.xlane.f32.xlu0 %v2383
        %v2385 = vpop.xlane.xlu0 %2384
        %v2386 = vsel %vm1380, %v2369, 0.0
        %2387 = vadd.xlane.f32.xlu0 %v2386
        %v2388 = vpop.xlane.xlu0 %2387
        %v2389 = vsel %vm1380, %v2371, 0.0
        %2390 = vadd.xlane.f32.xlu0 %v2389
        %v2391 = vpop.xlane.xlu0 %2390
        %v2392 = vsel %vm1380, %v2373, 0.0
        %2393 = vadd.xlane.f32.xlu0 %v2392
        %v2394 = vpop.xlane.xlu0 %2393
        %v2395 = vsel %vm1380, %v2375, 0.0
        %2396 = vadd.xlane.f32.xlu0 %v2395
        %v2397 = vpop.xlane.xlu0 %2396
        %v2398 = vsel %vm1380, %v2377, 0.0
        %2399 = vadd.xlane.f32.xlu0 %v2398
        %v2400 = vpop.xlane.xlu0 %2399
        %v2401 = vsel %vm1380, %v2379, 0.0
        %2402 = vadd.xlane.f32.xlu0 %v2401
        %v2403 = vpop.xlane.xlu0 %2402
        %v2404 = vrcp.pop %v2382
        %v2405 = vmul.f32 %v2365, %v2404
        %v2406 = vrcp.pop %v2385
        %v2407 = vmul.f32 %v2367, %v2406
        %v2408 = vrcp.pop %v2388
        %v2409 = vmul.f32 %v2369, %v2408
        %v2410 = vrcp.pop %v2391
        %v2411 = vmul.f32 %v2371, %v2410
        %v2412 = vrcp.pop %v2394
        %v2413 = vmul.f32 %v2373, %v2412
        %v2414 = vrcp.pop %v2397
        %v2415 = vmul.f32 %v2375, %v2414
        %v2416 = vrcp.pop %v2400
        %v2417 = vmul.f32 %v2377, %v2416
        %v2418 = vrcp.pop %v2403
        %v2419 = vmul.f32 %v2379, %v2418
        %v2420 = vpack.c.bf16 %v2407, %v2405
        %v2421 = vpack.c.bf16 %v2411, %v2409
        %v2422 = vpack.c.bf16 %v2415, %v2413
        %v2423 = vpack.c.bf16 %v2419, %v2417
        %2428 = vrot.lane.b32.xlu0 %v1953, 64
        %v2429 = vpop.permute.xlu0 %2428
        %2430 = vrot.lane.b32.xlu0 %v1954, 64
        %v2431 = vpop.permute.xlu0 %2430
        %2432 = vrot.lane.b32.xlu0 %v1955, 64
        %v2433 = vpop.permute.xlu0 %2432
        %2434 = vrot.lane.b32.xlu0 %v1956, 64
        %v2435 = vpop.permute.xlu0 %2434
        %v2441 = vsel %vm1380, %v2420, 0
        %v2444 = vsel %vm1380, %v2421, 0
        %v2447 = vsel %vm1380, %v2422, 0
        %v2450 = vsel %vm1380, %v2423, 0
        %2452 = vmatprep.subr.bf16.mxu0 0
        %2453 = vmatpush1.bf16.msra.mxu0 %v2429
        %2454 = vmatprep.subr.bf16.mxu0 0
        %2455 = vmatpush1.bf16.msra.mxu0 %v2431
        %2456 = vmatprep.subr.bf16.mxu0 0
        %2457 = vmatpush1.bf16.msra.mxu0 %v2433
        %2458 = vmatprep.subr.bf16.mxu0 0
        %2459 = vmatpush1.bf16.msra.mxu0 %v2435
        %2460 = vmatprep.subr.bf16.mxu0 0
        %2461 = vmatpush1.bf16.msra.mxu0 0
        %2462 = vmatprep.subr.bf16.mxu0 0
        %2463 = vmatpush1.bf16.msra.mxu0 0
        %2464 = vmatprep.subr.bf16.mxu0 0
        %2465 = vmatpush1.bf16.msra.mxu0 0
        %2466 = vmatprep.subr.bf16.mxu0 0
        %2467 = vmatpush1.bf16.msra.mxu0 0
        %2468 = vmatprep.subr.bf16.mxu0 0
        %2469 = vmatpush1.bf16.msra.mxu0 0
        %2470 = vmatprep.subr.bf16.mxu0 0
        %2471 = vmatpush1.bf16.msra.mxu0 0
        %2472 = vmatprep.subr.bf16.mxu0 0
        %2473 = vmatpush1.bf16.msra.mxu0 0
        %2474 = vmatprep.subr.bf16.mxu0 0
        %2475 = vmatpush1.bf16.msra.mxu0 0
        %2476 = vmatprep.subr.bf16.mxu0 0
        %2477 = vmatpush1.bf16.msra.mxu0 0
        %2478 = vmatprep.subr.bf16.mxu0 0
        %2479 = vmatpush1.bf16.msra.mxu0 0
        %2480 = vmatprep.subr.bf16.mxu0 0
        %2481 = vmatpush1.bf16.msra.mxu0 0
        %2482 = vmatprep.subr.bf16.mxu0 0
        %2483 = vmatpush1.bf16.msra.mxu0 0
        %2484 = vmatprep.mubr.bf16.mxu0 0
        %2485 = vmatmul.mubr.bf16.gmra.mrb[0].mxu0 %v2441
        %v2486 = vpop.f32.mrb[0].mxu0
        %v2487 = vadd.f32 0.0, %v2486
        %v2488 = vpop.f32.mrb[0].mxu0
        %v2489 = vpop.f32.mrb[0].mxu0
        %v2490 = vadd.f32 0.0, %v2489
        %v2491 = vpop.f32.mrb[0].mxu0
        %2492 = vmatprep.mubr.bf16.mxu0 0
        %2493 = vmatmul.mubr.bf16.gmra.mrb[0].mxu0 %v2444
        %v2494 = vpop.f32.mrb[0].mxu0
        %v2495 = vadd.f32 0.0, %v2494
        %v2496 = vpop.f32.mrb[0].mxu0
        %v2497 = vpop.f32.mrb[0].mxu0
        %v2498 = vadd.f32 0.0, %v2497
        %v2499 = vpop.f32.mrb[0].mxu0
        %2500 = vmatprep.mubr.bf16.mxu0 0
        %2501 = vmatmul.mubr.bf16.gmra.mrb[0].mxu0 %v2447
        %v2502 = vpop.f32.mrb[0].mxu0
        %v2503 = vadd.f32 0.0, %v2502
        %v2504 = vpop.f32.mrb[0].mxu0
        %v2505 = vpop.f32.mrb[0].mxu0
        %v2506 = vadd.f32 0.0, %v2505
        %v2507 = vpop.f32.mrb[0].mxu0
        %2508 = vmatprep.mubr.bf16.mxu0 0
        %2509 = vmatmul.mubr.bf16.gmra.mrb[0].mxu0 %v2450
        %v2510 = vpop.f32.mrb[0].mxu0
        %v2511 = vadd.f32 0.0, %v2510
        %v2512 = vpop.f32.mrb[0].mxu0
        %v2513 = vpop.f32.mrb[0].mxu0
        %v2514 = vadd.f32 0.0, %v2513
        %v2515 = vpop.f32.mrb[0].mxu0
        %2516 = vdwg.mxu0
        %v2517 = vpack.c.bf16 %v2490, %v2487
        %v2518 = vpack.c.bf16 %v2498, %v2495
        %v2519 = vpack.c.bf16 %v2506, %v2503
        %v2520 = vpack.c.bf16 %v2514, %v2511
        %v2521 = vld [vmem:[#allocation2 + $0x10] sm:$0xff]
        %v2522 = vld [vmem:[#allocation2 + $0x70] sm:$0xff]
        %v2523 = vld [vmem:[#allocation2 + $0xd0] sm:$0xff]
        %v2524 = vld [vmem:[#allocation2 + $0x130] sm:$0xff]
        %v2525 = vld [vmem:[#allocation2 + $0x30] sm:$0xff]
        %v2526 = vld [vmem:[#allocation2 + $0x90] sm:$0xff]
        %v2527 = vld [vmem:[#allocation2 + $0xf0] sm:$0xff]
        %v2528 = vld [vmem:[#allocation2 + $0x150] sm:$0xff]
        %v2529 = vld [vmem:[#allocation2 + $0x50] sm:$0xff]
        %v2530 = vld [vmem:[#allocation2 + $0xb0] sm:$0xff]
        %v2531 = vld [vmem:[#allocation2 + $0x110] sm:$0xff]
        %v2532 = vld [vmem:[#allocation2 + $0x170] sm:$0xff]
        %v2534 = vsel %vm1380, %v2521, 0
        %v2537 = vsel %vm1380, %v2522, 0
        %v2540 = vsel %vm1380, %v2523, 0
        %v2543 = vsel %vm1380, %v2524, 0
        %v2546 = vsel %vm1380, %v2525, 0
        %v2549 = vsel %vm1380, %v2526, 0
        %v2552 = vsel %vm1380, %v2527, 0
        %v2555 = vsel %vm1380, %v2528, 0
        %2557 = vmatprep.subr.bf16.mxu0 0
        %2558 = vmatpush1.bf16.xpose.msra.mxu0 %v2546
        %2559 = vmatprep.subr.bf16.mxu0 0
        %2560 = vmatpush1.bf16.xpose.msra.mxu0 %v2549
        %2561 = vmatprep.subr.bf16.mxu0 0
        %2562 = vmatpush1.bf16.xpose.msra.mxu0 %v2552
        %2563 = vmatprep.subr.bf16.mxu0 0
        %2564 = vmatpush1.bf16.xpose.msra.mxu0 %v2555
        %2565 = vmatprep.subr.bf16.mxu0 0
        %2566 = vmatpush1.bf16.xpose.msra.mxu0 0
        %2567 = vmatprep.subr.bf16.mxu0 0
        %2568 = vmatpush1.bf16.xpose.msra.mxu0 0
        %2569 = vmatprep.subr.bf16.mxu0 0
        %2570 = vmatpush1.bf16.xpose.msra.mxu0 0
        %2571 = vmatprep.subr.bf16.mxu0 0
        %2572 = vmatpush1.bf16.xpose.msra.mxu0 0
        %2573 = vmatprep.subr.bf16.mxu0 0
        %2574 = vmatpush1.bf16.xpose.msra.mxu0 0
        %2575 = vmatprep.subr.bf16.mxu0 0
        %2576 = vmatpush1.bf16.xpose.msra.mxu0 0
        %2577 = vmatprep.subr.bf16.mxu0 0
        %2578 = vmatpush1.bf16.xpose.msra.mxu0 0
        %2579 = vmatprep.subr.bf16.mxu0 0
        %2580 = vmatpush1.bf16.xpose.msra.mxu0 0
        %2581 = vmatprep.subr.bf16.mxu0 0
        %2582 = vmatpush1.bf16.xpose.msra.mxu0 0
        %2583 = vmatprep.subr.bf16.mxu0 0
        %2584 = vmatpush1.bf16.xpose.msra.mxu0 0
        %2585 = vmatprep.subr.bf16.mxu0 0
        %2586 = vmatpush1.bf16.xpose.msra.mxu0 0
        %2587 = vmatprep.subr.bf16.mxu0 0
        %2588 = vmatpush1.bf16.xpose.msra.mxu0 0
        %2589 = vmatprep.mubr.bf16.mxu0 0
        %2590 = vmatmul.mubr.bf16.gmra.mrb[0].mxu0 %v2534
        %v2591 = vpop.f32.mrb[0].mxu0
        %v2592 = vadd.f32 0.0, %v2591
        %v2593 = vpop.f32.mrb[0].mxu0
        %v2594 = vpop.f32.mrb[0].mxu0
        %v2595 = vadd.f32 0.0, %v2594
        %v2596 = vpop.f32.mrb[0].mxu0
        %2597 = vmatprep.mubr.bf16.mxu0 0
        %2598 = vmatmul.mubr.bf16.gmra.mrb[0].mxu0 %v2537
        %v2599 = vpop.f32.mrb[0].mxu0
        %v2600 = vadd.f32 0.0, %v2599
        %v2601 = vpop.f32.mrb[0].mxu0
        %v2602 = vpop.f32.mrb[0].mxu0
        %v2603 = vadd.f32 0.0, %v2602
        %v2604 = vpop.f32.mrb[0].mxu0
        %2605 = vmatprep.mubr.bf16.mxu0 0
        %2606 = vmatmul.mubr.bf16.gmra.mrb[0].mxu0 %v2540
        %v2607 = vpop.f32.mrb[0].mxu0
        %v2608 = vadd.f32 0.0, %v2607
        %v2609 = vpop.f32.mrb[0].mxu0
        %v2610 = vpop.f32.mrb[0].mxu0
        %v2611 = vadd.f32 0.0, %v2610
        %v2612 = vpop.f32.mrb[0].mxu0
        %2613 = vmatprep.mubr.bf16.mxu0 0
        %2614 = vmatmul.mubr.bf16.gmra.mrb[0].mxu0 %v2543
        %v2615 = vpop.f32.mrb[0].mxu0
        %v2616 = vadd.f32 0.0, %v2615
        %v2617 = vpop.f32.mrb[0].mxu0
        %v2618 = vpop.f32.mrb[0].mxu0
        %v2619 = vadd.f32 0.0, %v2618
        %v2620 = vpop.f32.mrb[0].mxu0
        %2621 = vdwg.mxu0
        %v2622 = vsel %vm1380, %v2592, -inf
        %2623 = vmax.xlane.f32.xlu0 %v2622
        %v2624 = vpop.xlane.xlu0 %2623
        %v2625 = vsel %vm1380, %v2595, -inf
        %2626 = vmax.xlane.f32.xlu0 %v2625
        %v2627 = vpop.xlane.xlu0 %2626
        %v2628 = vsel %vm1380, %v2600, -inf
        %2629 = vmax.xlane.f32.xlu0 %v2628
        %v2630 = vpop.xlane.xlu0 %2629
        %v2631 = vsel %vm1380, %v2603, -inf
        %2632 = vmax.xlane.f32.xlu0 %v2631
        %v2633 = vpop.xlane.xlu0 %2632
        %v2634 = vsel %vm1380, %v2608, -inf
        %2635 = vmax.xlane.f32.xlu0 %v2634
        %v2636 = vpop.xlane.xlu0 %2635
        %v2637 = vsel %vm1380, %v2611, -inf
        %2638 = vmax.xlane.f32.xlu0 %v2637
        %v2639 = vpop.xlane.xlu0 %2638
        %v2640 = vsel %vm1380, %v2616, -inf
        %2641 = vmax.xlane.f32.xlu0 %v2640
        %v2642 = vpop.xlane.xlu0 %2641
        %v2643 = vsel %vm1380, %v2619, -inf
        %2644 = vmax.xlane.f32.xlu0 %v2643
        %v2645 = vpop.xlane.xlu0 %2644
        %v2646 = vsub.f32 %v2592, %v2624
        %v2647 = vsub.f32 %v2595, %v2627
        %v2648 = vsub.f32 %v2600, %v2630
        %v2649 = vsub.f32 %v2603, %v2633
        %v2650 = vsub.f32 %v2608, %v2636
        %v2651 = vsub.f32 %v2611, %v2639
        %v2652 = vsub.f32 %v2616, %v2642
        %v2653 = vsub.f32 %v2619, %v2645
        %v2654 = vmul.f32 %v2646, 1.442695
        %v2655 = vpow.pop %v2654
        %v2656 = vmul.f32 %v2647, 1.442695
        %v2657 = vpow.pop %v2656
        %v2658 = vmul.f32 %v2648, 1.442695
        %v2659 = vpow.pop %v2658
        %v2660 = vmul.f32 %v2649, 1.442695
        %v2661 = vpow.pop %v2660
        %v2662 = vmul.f32 %v2650, 1.442695
        %v2663 = vpow.pop %v2662
        %v2664 = vmul.f32 %v2651, 1.442695
        %v2665 = vpow.pop %v2664
        %v2666 = vmul.f32 %v2652, 1.442695
        %v2667 = vpow.pop %v2666
        %v2668 = vmul.f32 %v2653, 1.442695
        %v2669 = vpow.pop %v2668
        %v2670 = vsel %vm1380, %v2655, 0.0
        %2671 = vadd.xlane.f32.xlu0 %v2670
        %v2672 = vpop.xlane.xlu0 %2671
        %v2673 = vsel %vm1380, %v2657, 0.0
        %2674 = vadd.xlane.f32.xlu0 %v2673
        %v2675 = vpop.xlane.xlu0 %2674
        %v2676 = vsel %vm1380, %v2659, 0.0
        %2677 = vadd.xlane.f32.xlu0 %v2676
        %v2678 = vpop.xlane.xlu0 %2677
        %v2679 = vsel %vm1380, %v2661, 0.0
        %2680 = vadd.xlane.f32.xlu0 %v2679
        %v2681 = vpop.xlane.xlu0 %2680
        %v2682 = vsel %vm1380, %v2663, 0.0
        %2683 = vadd.xlane.f32.xlu0 %v2682
        %v2684 = vpop.xlane.xlu0 %2683
        %v2685 = vsel %vm1380, %v2665, 0.0
        %2686 = vadd.xlane.f32.xlu0 %v2685
        %v2687 = vpop.xlane.xlu0 %2686
        %v2688 = vsel %vm1380, %v2667, 0.0
        %2689 = vadd.xlane.f32.xlu0 %v2688
        %v2690 = vpop.xlane.xlu0 %2689
        %v2691 = vsel %vm1380, %v2669, 0.0
        %2692 = vadd.xlane.f32.xlu0 %v2691
        %v2693 = vpop.xlane.xlu0 %2692
        %v2694 = vrcp.pop %v2672
        %v2695 = vmul.f32 %v2655, %v2694
        %v2696 = vrcp.pop %v2675
        %v2697 = vmul.f32 %v2657, %v2696
        %v2698 = vrcp.pop %v2678
        %v2699 = vmul.f32 %v2659, %v2698
        %v2700 = vrcp.pop %v2681
        %v2701 = vmul.f32 %v2661, %v2700
        %v2702 = vrcp.pop %v2684
        %v2703 = vmul.f32 %v2663, %v2702
        %v2704 = vrcp.pop %v2687
        %v2705 = vmul.f32 %v2665, %v2704
        %v2706 = vrcp.pop %v2690
        %v2707 = vmul.f32 %v2667, %v2706
        %v2708 = vrcp.pop %v2693
        %v2709 = vmul.f32 %v2669, %v2708
        %v2710 = vpack.c.bf16 %v2697, %v2695
        %v2711 = vpack.c.bf16 %v2701, %v2699
        %v2712 = vpack.c.bf16 %v2705, %v2703
        %v2713 = vpack.c.bf16 %v2709, %v2707
        %v2715 = vsel %vm1380, %v2710, 0
        %v2718 = vsel %vm1380, %v2711, 0
        %v2721 = vsel %vm1380, %v2712, 0
        %v2724 = vsel %vm1380, %v2713, 0
        %2726 = vmatprep.subr.bf16.mxu0 0
        %2727 = vmatpush1.bf16.msra.mxu0 %v2529
        %2728 = vmatprep.subr.bf16.mxu0 0
        %2729 = vmatpush1.bf16.msra.mxu0 %v2530
        %2730 = vmatprep.subr.bf16.mxu0 0
        %2731 = vmatpush1.bf16.msra.mxu0 %v2531
        %2732 = vmatprep.subr.bf16.mxu0 0
        %2733 = vmatpush1.bf16.msra.mxu0 %v2532
        %2734 = vmatprep.subr.bf16.mxu0 0
        %2735 = vmatpush1.bf16.msra.mxu0 0
        %2736 = vmatprep.subr.bf16.mxu0 0
        %2737 = vmatpush1.bf16.msra.mxu0 0
        %2738 = vmatprep.subr.bf16.mxu0 0
        %2739 = vmatpush1.bf16.msra.mxu0 0
        %2740 = vmatprep.subr.bf16.mxu0 0
        %2741 = vmatpush1.bf16.msra.mxu0 0
        %2742 = vmatprep.subr.bf16.mxu0 0
        %2743 = vmatpush1.bf16.msra.mxu0 0
        %2744 = vmatprep.subr.bf16.mxu0 0
        %2745 = vmatpush1.bf16.msra.mxu0 0
        %2746 = vmatprep.subr.bf16.mxu0 0
        %2747 = vmatpush1.bf16.msra.mxu0 0
        %2748 = vmatprep.subr.bf16.mxu0 0
        %2749 = vmatpush1.bf16.msra.mxu0 0
        %2750 = vmatprep.subr.bf16.mxu0 0
        %2751 = vmatpush1.bf16.msra.mxu0 0
        %2752 = vmatprep.subr.bf16.mxu0 0
        %2753 = vmatpush1.bf16.msra.mxu0 0
        %2754 = vmatprep.subr.bf16.mxu0 0
        %2755 = vmatpush1.bf16.msra.mxu0 0
        %2756 = vmatprep.subr.bf16.mxu0 0
        %2757 = vmatpush1.bf16.msra.mxu0 0
        %2758 = vmatprep.mubr.bf16.mxu0 0
        %2759 = vmatmul.mubr.bf16.gmra.mrb[0].mxu0 %v2715
        %v2760 = vpop.f32.mrb[0].mxu0
        %v2761 = vadd.f32 0.0, %v2760
        %v2762 = vpop.f32.mrb[0].mxu0
        %v2763 = vpop.f32.mrb[0].mxu0
        %v2764 = vadd.f32 0.0, %v2763
        %v2765 = vpop.f32.mrb[0].mxu0
        %2766 = vmatprep.mubr.bf16.mxu0 0
        %2767 = vmatmul.mubr.bf16.gmra.mrb[0].mxu0 %v2718
        %v2768 = vpop.f32.mrb[0].mxu0
        %v2769 = vadd.f32 0.0, %v2768
        %v2770 = vpop.f32.mrb[0].mxu0
        %v2771 = vpop.f32.mrb[0].mxu0
        %v2772 = vadd.f32 0.0, %v2771
        %v2773 = vpop.f32.mrb[0].mxu0
        %2774 = vmatprep.mubr.bf16.mxu0 0
        %2775 = vmatmul.mubr.bf16.gmra.mrb[0].mxu0 %v2721
        %v2776 = vpop.f32.mrb[0].mxu0
        %v2777 = vadd.f32 0.0, %v2776
        %v2778 = vpop.f32.mrb[0].mxu0
        %v2779 = vpop.f32.mrb[0].mxu0
        %v2780 = vadd.f32 0.0, %v2779
        %v2781 = vpop.f32.mrb[0].mxu0
        %2782 = vmatprep.mubr.bf16.mxu0 0
        %2783 = vmatmul.mubr.bf16.gmra.mrb[0].mxu0 %v2724
        %v2784 = vpop.f32.mrb[0].mxu0
        %v2785 = vadd.f32 0.0, %v2784
        %v2786 = vpop.f32.mrb[0].mxu0
        %v2787 = vpop.f32.mrb[0].mxu0
        %v2788 = vadd.f32 0.0, %v2787
        %v2789 = vpop.f32.mrb[0].mxu0
        %2790 = vdwg.mxu0
        %v2791 = vpack.c.bf16 %v2764, %v2761
        %v2792 = vpack.c.bf16 %v2772, %v2769
        %v2793 = vpack.c.bf16 %v2780, %v2777
        %v2794 = vpack.c.bf16 %v2788, %v2785
        %2799 = vrot.lane.b32.xlu0 %v2521, 64
        %v2800 = vpop.permute.xlu0 %2799
        %2801 = vrot.lane.b32.xlu0 %v2522, 64
        %v2802 = vpop.permute.xlu0 %2801
        %2803 = vrot.lane.b32.xlu0 %v2523, 64
        %v2804 = vpop.permute.xlu0 %2803
        %2805 = vrot.lane.b32.xlu0 %v2524, 64
        %v2806 = vpop.permute.xlu0 %2805
        %2811 = vrot.lane.b32.xlu0 %v2525, 64
        %v2812 = vpop.permute.xlu0 %2811
        %2813 = vrot.lane.b32.xlu0 %v2526, 64
        %v2814 = vpop.permute.xlu0 %2813
        %2815 = vrot.lane.b32.xlu0 %v2527, 64
        %v2816 = vpop.permute.xlu0 %2815
        %2817 = vrot.lane.b32.xlu0 %v2528, 64
        %v2818 = vpop.permute.xlu0 %2817
        %v2820 = vsel %vm1380, %v2800, 0
        %v2823 = vsel %vm1380, %v2802, 0
        %v2826 = vsel %vm1380, %v2804, 0
        %v2829 = vsel %vm1380, %v2806, 0
        %v2832 = vsel %vm1380, %v2812, 0
        %v2835 = vsel %vm1380, %v2814, 0
        %v2838 = vsel %vm1380, %v2816, 0
        %v2841 = vsel %vm1380, %v2818, 0
        %2843 = vmatprep.subr.bf16.mxu0 0
        %2844 = vmatpush1.bf16.xpose.msra.mxu0 %v2832
        %2845 = vmatprep.subr.bf16.mxu0 0
        %2846 = vmatpush1.bf16.xpose.msra.mxu0 %v2835
        %2847 = vmatprep.subr.bf16.mxu0 0
        %2848 = vmatpush1.bf16.xpose.msra.mxu0 %v2838
        %2849 = vmatprep.subr.bf16.mxu0 0
        %2850 = vmatpush1.bf16.xpose.msra.mxu0 %v2841
        %2851 = vmatprep.subr.bf16.mxu0 0
        %2852 = vmatpush1.bf16.xpose.msra.mxu0 0
        %2853 = vmatprep.subr.bf16.mxu0 0
        %2854 = vmatpush1.bf16.xpose.msra.mxu0 0
        %2855 = vmatprep.subr.bf16.mxu0 0
        %2856 = vmatpush1.bf16.xpose.msra.mxu0 0
        %2857 = vmatprep.subr.bf16.mxu0 0
        %2858 = vmatpush1.bf16.xpose.msra.mxu0 0
        %2859 = vmatprep.subr.bf16.mxu0 0
        %2860 = vmatpush1.bf16.xpose.msra.mxu0 0
        %2861 = vmatprep.subr.bf16.mxu0 0
        %2862 = vmatpush1.bf16.xpose.msra.mxu0 0
        %2863 = vmatprep.subr.bf16.mxu0 0
        %2864 = vmatpush1.bf16.xpose.msra.mxu0 0
        %2865 = vmatprep.subr.bf16.mxu0 0
        %2866 = vmatpush1.bf16.xpose.msra.mxu0 0
        %2867 = vmatprep.subr.bf16.mxu0 0
        %2868 = vmatpush1.bf16.xpose.msra.mxu0 0
        %2869 = vmatprep.subr.bf16.mxu0 0
        %2870 = vmatpush1.bf16.xpose.msra.mxu0 0
        %2871 = vmatprep.subr.bf16.mxu0 0
        %2872 = vmatpush1.bf16.xpose.msra.mxu0 0
        %2873 = vmatprep.subr.bf16.mxu0 0
        %2874 = vmatpush1.bf16.xpose.msra.mxu0 0
        %2875 = vmatprep.mubr.bf16.mxu0 0
        %2876 = vmatmul.mubr.bf16.gmra.mrb[0].mxu0 %v2820
        %v2877 = vpop.f32.mrb[0].mxu0
        %v2878 = vadd.f32 0.0, %v2877
        %v2879 = vpop.f32.mrb[0].mxu0
        %v2880 = vpop.f32.mrb[0].mxu0
        %v2881 = vadd.f32 0.0, %v2880
        %v2882 = vpop.f32.mrb[0].mxu0
        %2883 = vmatprep.mubr.bf16.mxu0 0
        %2884 = vmatmul.mubr.bf16.gmra.mrb[0].mxu0 %v2823
        %v2885 = vpop.f32.mrb[0].mxu0
        %v2886 = vadd.f32 0.0, %v2885
        %v2887 = vpop.f32.mrb[0].mxu0
        %v2888 = vpop.f32.mrb[0].mxu0
        %v2889 = vadd.f32 0.0, %v2888
        %v2890 = vpop.f32.mrb[0].mxu0
        %2891 = vmatprep.mubr.bf16.mxu0 0
        %2892 = vmatmul.mubr.bf16.gmra.mrb[0].mxu0 %v2826
        %v2893 = vpop.f32.mrb[0].mxu0
        %v2894 = vadd.f32 0.0, %v2893
        %v2895 = vpop.f32.mrb[0].mxu0
        %v2896 = vpop.f32.mrb[0].mxu0
        %v2897 = vadd.f32 0.0, %v2896
        %v2898 = vpop.f32.mrb[0].mxu0
        %2899 = vmatprep.mubr.bf16.mxu0 0
        %2900 = vmatmul.mubr.bf16.gmra.mrb[0].mxu0 %v2829
        %v2901 = vpop.f32.mrb[0].mxu0
        %v2902 = vadd.f32 0.0, %v2901
        %v2903 = vpop.f32.mrb[0].mxu0
        %v2904 = vpop.f32.mrb[0].mxu0
        %v2905 = vadd.f32 0.0, %v2904
        %v2906 = vpop.f32.mrb[0].mxu0
        %2907 = vdwg.mxu0
        %v2908 = vsel %vm1380, %v2878, -inf
        %2909 = vmax.xlane.f32.xlu0 %v2908
        %v2910 = vpop.xlane.xlu0 %2909
        %v2911 = vsel %vm1380, %v2881, -inf
        %2912 = vmax.xlane.f32.xlu0 %v2911
        %v2913 = vpop.xlane.xlu0 %2912
        %v2914 = vsel %vm1380, %v2886, -inf
        %2915 = vmax.xlane.f32.xlu0 %v2914
        %v2916 = vpop.xlane.xlu0 %2915
        %v2917 = vsel %vm1380, %v2889, -inf
        %2918 = vmax.xlane.f32.xlu0 %v2917
        %v2919 = vpop.xlane.xlu0 %2918
        %v2920 = vsel %vm1380, %v2894, -inf
        %2921 = vmax.xlane.f32.xlu0 %v2920
        %v2922 = vpop.xlane.xlu0 %2921
        %v2923 = vsel %vm1380, %v2897, -inf
        %2924 = vmax.xlane.f32.xlu0 %v2923
        %v2925 = vpop.xlane.xlu0 %2924
        %v2926 = vsel %vm1380, %v2902, -inf
        %2927 = vmax.xlane.f32.xlu0 %v2926
        %v2928 = vpop.xlane.xlu0 %2927
        %v2929 = vsel %vm1380, %v2905, -inf
        %2930 = vmax.xlane.f32.xlu0 %v2929
        %v2931 = vpop.xlane.xlu0 %2930
        %v2932 = vsub.f32 %v2878, %v2910
        %v2933 = vsub.f32 %v2881, %v2913
        %v2934 = vsub.f32 %v2886, %v2916
        %v2935 = vsub.f32 %v2889, %v2919
        %v2936 = vsub.f32 %v2894, %v2922
        %v2937 = vsub.f32 %v2897, %v2925
        %v2938 = vsub.f32 %v2902, %v2928
        %v2939 = vsub.f32 %v2905, %v2931
        %v2940 = vmul.f32 %v2932, 1.442695
        %v2941 = vpow.pop %v2940
        %v2942 = vmul.f32 %v2933, 1.442695
        %v2943 = vpow.pop %v2942
        %v2944 = vmul.f32 %v2934, 1.442695
        %v2945 = vpow.pop %v2944
        %v2946 = vmul.f32 %v2935, 1.442695
        %v2947 = vpow.pop %v2946
        %v2948 = vmul.f32 %v2936, 1.442695
        %v2949 = vpow.pop %v2948
        %v2950 = vmul.f32 %v2937, 1.442695
        %v2951 = vpow.pop %v2950
        %v2952 = vmul.f32 %v2938, 1.442695
        %v2953 = vpow.pop %v2952
        %v2954 = vmul.f32 %v2939, 1.442695
        %v2955 = vpow.pop %v2954
        %v2956 = vsel %vm1380, %v2941, 0.0
        %2957 = vadd.xlane.f32.xlu0 %v2956
        %v2958 = vpop.xlane.xlu0 %2957
        %v2959 = vsel %vm1380, %v2943, 0.0
        %2960 = vadd.xlane.f32.xlu0 %v2959
        %v2961 = vpop.xlane.xlu0 %2960
        %v2962 = vsel %vm1380, %v2945, 0.0
        %2963 = vadd.xlane.f32.xlu0 %v2962
        %v2964 = vpop.xlane.xlu0 %2963
        %v2965 = vsel %vm1380, %v2947, 0.0
        %2966 = vadd.xlane.f32.xlu0 %v2965
        %v2967 = vpop.xlane.xlu0 %2966
        %v2968 = vsel %vm1380, %v2949, 0.0
        %2969 = vadd.xlane.f32.xlu0 %v2968
        %v2970 = vpop.xlane.xlu0 %2969
        %v2971 = vsel %vm1380, %v2951, 0.0
        %2972 = vadd.xlane.f32.xlu0 %v2971
        %v2973 = vpop.xlane.xlu0 %2972
        %v2974 = vsel %vm1380, %v2953, 0.0
        %2975 = vadd.xlane.f32.xlu0 %v2974
        %v2976 = vpop.xlane.xlu0 %2975
        %v2977 = vsel %vm1380, %v2955, 0.0
        %2978 = vadd.xlane.f32.xlu0 %v2977
        %v2979 = vpop.xlane.xlu0 %2978
        %v2980 = vrcp.pop %v2958
        %v2981 = vmul.f32 %v2941, %v2980
        %v2982 = vrcp.pop %v2961
        %v2983 = vmul.f32 %v2943, %v2982
        %v2984 = vrcp.pop %v2964
        %v2985 = vmul.f32 %v2945, %v2984
        %v2986 = vrcp.pop %v2967
        %v2987 = vmul.f32 %v2947, %v2986
        %v2988 = vrcp.pop %v2970
        %v2989 = vmul.f32 %v2949, %v2988
        %v2990 = vrcp.pop %v2973
        %v2991 = vmul.f32 %v2951, %v2990
        %v2992 = vrcp.pop %v2976
        %v2993 = vmul.f32 %v2953, %v2992
        %v2994 = vrcp.pop %v2979
        %v2995 = vmul.f32 %v2955, %v2994
        %v2996 = vpack.c.bf16 %v2983, %v2981
        %v2997 = vpack.c.bf16 %v2987, %v2985
        %v2998 = vpack.c.bf16 %v2991, %v2989
        %v2999 = vpack.c.bf16 %v2995, %v2993
        %3004 = vrot.lane.b32.xlu0 %v2529, 64
        %v3005 = vpop.permute.xlu0 %3004
        %3006 = vrot.lane.b32.xlu0 %v2530, 64
        %v3007 = vpop.permute.xlu0 %3006
        %3008 = vrot.lane.b32.xlu0 %v2531, 64
        %v3009 = vpop.permute.xlu0 %3008
        %3010 = vrot.lane.b32.xlu0 %v2532, 64
        %v3011 = vpop.permute.xlu0 %3010
        %v3017 = vsel %vm1380, %v2996, 0
        %v3020 = vsel %vm1380, %v2997, 0
        %v3023 = vsel %vm1380, %v2998, 0
        %v3026 = vsel %vm1380, %v2999, 0
        %3028 = vmatprep.subr.bf16.mxu0 0
        %3029 = vmatpush1.bf16.msra.mxu0 %v3005
        %3030 = vmatprep.subr.bf16.mxu0 0
        %3031 = vmatpush1.bf16.msra.mxu0 %v3007
        %3032 = vmatprep.subr.bf16.mxu0 0
        %3033 = vmatpush1.bf16.msra.mxu0 %v3009
        %3034 = vmatprep.subr.bf16.mxu0 0
        %3035 = vmatpush1.bf16.msra.mxu0 %v3011
        %3036 = vmatprep.subr.bf16.mxu0 0
        %3037 = vmatpush1.bf16.msra.mxu0 0
        %3038 = vmatprep.subr.bf16.mxu0 0
        %3039 = vmatpush1.bf16.msra.mxu0 0
        %3040 = vmatprep.subr.bf16.mxu0 0
        %3041 = vmatpush1.bf16.msra.mxu0 0
        %3042 = vmatprep.subr.bf16.mxu0 0
        %3043 = vmatpush1.bf16.msra.mxu0 0
        %3044 = vmatprep.subr.bf16.mxu0 0
        %3045 = vmatpush1.bf16.msra.mxu0 0
        %3046 = vmatprep.subr.bf16.mxu0 0
        %3047 = vmatpush1.bf16.msra.mxu0 0
        %3048 = vmatprep.subr.bf16.mxu0 0
        %3049 = vmatpush1.bf16.msra.mxu0 0
        %3050 = vmatprep.subr.bf16.mxu0 0
        %3051 = vmatpush1.bf16.msra.mxu0 0
        %3052 = vmatprep.subr.bf16.mxu0 0
        %3053 = vmatpush1.bf16.msra.mxu0 0
        %3054 = vmatprep.subr.bf16.mxu0 0
        %3055 = vmatpush1.bf16.msra.mxu0 0
        %3056 = vmatprep.subr.bf16.mxu0 0
        %3057 = vmatpush1.bf16.msra.mxu0 0
        %3058 = vmatprep.subr.bf16.mxu0 0
        %3059 = vmatpush1.bf16.msra.mxu0 0
        %3060 = vmatprep.mubr.bf16.mxu0 0
        %3061 = vmatmul.mubr.bf16.gmra.mrb[0].mxu0 %v3017
        %v3062 = vpop.f32.mrb[0].mxu0
        %v3063 = vadd.f32 0.0, %v3062
        %v3064 = vpop.f32.mrb[0].mxu0
        %v3065 = vpop.f32.mrb[0].mxu0
        %v3066 = vadd.f32 0.0, %v3065
        %v3067 = vpop.f32.mrb[0].mxu0
        %3068 = vmatprep.mubr.bf16.mxu0 0
        %3069 = vmatmul.mubr.bf16.gmra.mrb[0].mxu0 %v3020
        %v3070 = vpop.f32.mrb[0].mxu0
        %v3071 = vadd.f32 0.0, %v3070
        %v3072 = vpop.f32.mrb[0].mxu0
        %v3073 = vpop.f32.mrb[0].mxu0
        %v3074 = vadd.f32 0.0, %v3073
        %v3075 = vpop.f32.mrb[0].mxu0
        %3076 = vmatprep.mubr.bf16.mxu0 0
        %3077 = vmatmul.mubr.bf16.gmra.mrb[0].mxu0 %v3023
        %v3078 = vpop.f32.mrb[0].mxu0
        %v3079 = vadd.f32 0.0, %v3078
        %v3080 = vpop.f32.mrb[0].mxu0
        %v3081 = vpop.f32.mrb[0].mxu0
        %v3082 = vadd.f32 0.0, %v3081
        %v3083 = vpop.f32.mrb[0].mxu0
        %3084 = vmatprep.mubr.bf16.mxu0 0
        %3085 = vmatmul.mubr.bf16.gmra.mrb[0].mxu0 %v3026
        %v3086 = vpop.f32.mrb[0].mxu0
        %v3087 = vadd.f32 0.0, %v3086
        %v3088 = vpop.f32.mrb[0].mxu0
        %v3089 = vpop.f32.mrb[0].mxu0
        %v3090 = vadd.f32 0.0, %v3089
        %v3091 = vpop.f32.mrb[0].mxu0
        %3092 = vdwg.mxu0
        %v3093 = vpack.c.bf16 %v3066, %v3063
        %v3094 = vpack.c.bf16 %v3074, %v3071
        %v3095 = vpack.c.bf16 %v3082, %v3079
        %v3096 = vpack.c.bf16 %v3090, %v3087
        %v3097 = vld [vmem:[#allocation2 + $0x18] sm:$0xff]
        %v3098 = vld [vmem:[#allocation2 + $0x78] sm:$0xff]
        %v3099 = vld [vmem:[#allocation2 + $0xd8] sm:$0xff]
        %v3100 = vld [vmem:[#allocation2 + $0x138] sm:$0xff]
        %v3101 = vld [vmem:[#allocation2 + $0x38] sm:$0xff]
        %v3102 = vld [vmem:[#allocation2 + $0x98] sm:$0xff]
        %v3103 = vld [vmem:[#allocation2 + $0xf8] sm:$0xff]
        %v3104 = vld [vmem:[#allocation2 + $0x158] sm:$0xff]
        %v3105 = vld [vmem:[#allocation2 + $0x58] sm:$0xff]
        %v3106 = vld [vmem:[#allocation2 + $0xb8] sm:$0xff]
        %v3107 = vld [vmem:[#allocation2 + $0x118] sm:$0xff]
        %v3108 = vld [vmem:[#allocation2 + $0x178] sm:$0xff]
        %v3110 = vsel %vm1380, %v3097, 0
        %v3113 = vsel %vm1380, %v3098, 0
        %v3116 = vsel %vm1380, %v3099, 0
        %v3119 = vsel %vm1380, %v3100, 0
        %v3122 = vsel %vm1380, %v3101, 0
        %v3125 = vsel %vm1380, %v3102, 0
        %v3128 = vsel %vm1380, %v3103, 0
        %v3131 = vsel %vm1380, %v3104, 0
        %3133 = vmatprep.subr.bf16.mxu0 0
        %3134 = vmatpush1.bf16.xpose.msra.mxu0 %v3122
        %3135 = vmatprep.subr.bf16.mxu0 0
        %3136 = vmatpush1.bf16.xpose.msra.mxu0 %v3125
        %3137 = vmatprep.subr.bf16.mxu0 0
        %3138 = vmatpush1.bf16.xpose.msra.mxu0 %v3128
        %3139 = vmatprep.subr.bf16.mxu0 0
        %3140 = vmatpush1.bf16.xpose.msra.mxu0 %v3131
        %3141 = vmatprep.subr.bf16.mxu0 0
        %3142 = vmatpush1.bf16.xpose.msra.mxu0 0
        %3143 = vmatprep.subr.bf16.mxu0 0
        %3144 = vmatpush1.bf16.xpose.msra.mxu0 0
        %3145 = vmatprep.subr.bf16.mxu0 0
        %3146 = vmatpush1.bf16.xpose.msra.mxu0 0
        %3147 = vmatprep.subr.bf16.mxu0 0
        %3148 = vmatpush1.bf16.xpose.msra.mxu0 0
        %3149 = vmatprep.subr.bf16.mxu0 0
        %3150 = vmatpush1.bf16.xpose.msra.mxu0 0
        %3151 = vmatprep.subr.bf16.mxu0 0
        %3152 = vmatpush1.bf16.xpose.msra.mxu0 0
        %3153 = vmatprep.subr.bf16.mxu0 0
        %3154 = vmatpush1.bf16.xpose.msra.mxu0 0
        %3155 = vmatprep.subr.bf16.mxu0 0
        %3156 = vmatpush1.bf16.xpose.msra.mxu0 0
        %3157 = vmatprep.subr.bf16.mxu0 0
        %3158 = vmatpush1.bf16.xpose.msra.mxu0 0
        %3159 = vmatprep.subr.bf16.mxu0 0
        %3160 = vmatpush1.bf16.xpose.msra.mxu0 0
        %3161 = vmatprep.subr.bf16.mxu0 0
        %3162 = vmatpush1.bf16.xpose.msra.mxu0 0
        %3163 = vmatprep.subr.bf16.mxu0 0
        %3164 = vmatpush1.bf16.xpose.msra.mxu0 0
        %3165 = vmatprep.mubr.bf16.mxu0 0
        %3166 = vmatmul.mubr.bf16.gmra.mrb[0].mxu0 %v3110
        %v3167 = vpop.f32.mrb[0].mxu0
        %v3168 = vadd.f32 0.0, %v3167
        %v3169 = vpop.f32.mrb[0].mxu0
        %v3170 = vpop.f32.mrb[0].mxu0
        %v3171 = vadd.f32 0.0, %v3170
        %v3172 = vpop.f32.mrb[0].mxu0
        %3173 = vmatprep.mubr.bf16.mxu0 0
        %3174 = vmatmul.mubr.bf16.gmra.mrb[0].mxu0 %v3113
        %v3175 = vpop.f32.mrb[0].mxu0
        %v3176 = vadd.f32 0.0, %v3175
        %v3177 = vpop.f32.mrb[0].mxu0
        %v3178 = vpop.f32.mrb[0].mxu0
        %v3179 = vadd.f32 0.0, %v3178
        %v3180 = vpop.f32.mrb[0].mxu0
        %3181 = vmatprep.mubr.bf16.mxu0 0
        %3182 = vmatmul.mubr.bf16.gmra.mrb[0].mxu0 %v3116
        %v3183 = vpop.f32.mrb[0].mxu0
        %v3184 = vadd.f32 0.0, %v3183
        %v3185 = vpop.f32.mrb[0].mxu0
        %v3186 = vpop.f32.mrb[0].mxu0
        %v3187 = vadd.f32 0.0, %v3186
        %v3188 = vpop.f32.mrb[0].mxu0
        %3189 = vmatprep.mubr.bf16.mxu0 0
        %3190 = vmatmul.mubr.bf16.gmra.mrb[0].mxu0 %v3119
        %v3191 = vpop.f32.mrb[0].mxu0
        %v3192 = vadd.f32 0.0, %v3191
        %v3193 = vpop.f32.mrb[0].mxu0
        %v3194 = vpop.f32.mrb[0].mxu0
        %v3195 = vadd.f32 0.0, %v3194
        %v3196 = vpop.f32.mrb[0].mxu0
        %3197 = vdwg.mxu0
        %v3198 = vsel %vm1380, %v3168, -inf
        %3199 = vmax.xlane.f32.xlu0 %v3198
        %v3200 = vpop.xlane.xlu0 %3199
        %v3201 = vsel %vm1380, %v3171, -inf
        %3202 = vmax.xlane.f32.xlu0 %v3201
        %v3203 = vpop.xlane.xlu0 %3202
        %v3204 = vsel %vm1380, %v3176, -inf
        %3205 = vmax.xlane.f32.xlu0 %v3204
        %v3206 = vpop.xlane.xlu0 %3205
        %v3207 = vsel %vm1380, %v3179, -inf
        %3208 = vmax.xlane.f32.xlu0 %v3207
        %v3209 = vpop.xlane.xlu0 %3208
        %v3210 = vsel %vm1380, %v3184, -inf
        %3211 = vmax.xlane.f32.xlu0 %v3210
        %v3212 = vpop.xlane.xlu0 %3211
        %v3213 = vsel %vm1380, %v3187, -inf
        %3214 = vmax.xlane.f32.xlu0 %v3213
        %v3215 = vpop.xlane.xlu0 %3214
        %v3216 = vsel %vm1380, %v3192, -inf
        %3217 = vmax.xlane.f32.xlu0 %v3216
        %v3218 = vpop.xlane.xlu0 %3217
        %v3219 = vsel %vm1380, %v3195, -inf
        %3220 = vmax.xlane.f32.xlu0 %v3219
        %v3221 = vpop.xlane.xlu0 %3220
        %v3222 = vsub.f32 %v3168, %v3200
        %v3223 = vsub.f32 %v3171, %v3203
        %v3224 = vsub.f32 %v3176, %v3206
        %v3225 = vsub.f32 %v3179, %v3209
        %v3226 = vsub.f32 %v3184, %v3212
        %v3227 = vsub.f32 %v3187, %v3215
        %v3228 = vsub.f32 %v3192, %v3218
        %v3229 = vsub.f32 %v3195, %v3221
        %v3230 = vmul.f32 %v3222, 1.442695
        %v3231 = vpow.pop %v3230
        %v3232 = vmul.f32 %v3223, 1.442695
        %v3233 = vpow.pop %v3232
        %v3234 = vmul.f32 %v3224, 1.442695
        %v3235 = vpow.pop %v3234
        %v3236 = vmul.f32 %v3225, 1.442695
        %v3237 = vpow.pop %v3236
        %v3238 = vmul.f32 %v3226, 1.442695
        %v3239 = vpow.pop %v3238
        %v3240 = vmul.f32 %v3227, 1.442695
        %v3241 = vpow.pop %v3240
        %v3242 = vmul.f32 %v3228, 1.442695
        %v3243 = vpow.pop %v3242
        %v3244 = vmul.f32 %v3229, 1.442695
        %v3245 = vpow.pop %v3244
        %v3246 = vsel %vm1380, %v3231, 0.0
        %3247 = vadd.xlane.f32.xlu0 %v3246
        %v3248 = vpop.xlane.xlu0 %3247
        %v3249 = vsel %vm1380, %v3233, 0.0
        %3250 = vadd.xlane.f32.xlu0 %v3249
        %v3251 = vpop.xlane.xlu0 %3250
        %v3252 = vsel %vm1380, %v3235, 0.0
        %3253 = vadd.xlane.f32.xlu0 %v3252
        %v3254 = vpop.xlane.xlu0 %3253
        %v3255 = vsel %vm1380, %v3237, 0.0
        %3256 = vadd.xlane.f32.xlu0 %v3255
        %v3257 = vpop.xlane.xlu0 %3256
        %v3258 = vsel %vm1380, %v3239, 0.0
        %3259 = vadd.xlane.f32.xlu0 %v3258
        %v3260 = vpop.xlane.xlu0 %3259
        %v3261 = vsel %vm1380, %v3241, 0.0
        %3262 = vadd.xlane.f32.xlu0 %v3261
        %v3263 = vpop.xlane.xlu0 %3262
        %v3264 = vsel %vm1380, %v3243, 0.0
        %3265 = vadd.xlane.f32.xlu0 %v3264
        %v3266 = vpop.xlane.xlu0 %3265
        %v3267 = vsel %vm1380, %v3245, 0.0
        %3268 = vadd.xlane.f32.xlu0 %v3267
        %v3269 = vpop.xlane.xlu0 %3268
        %v3270 = vrcp.pop %v3248
        %v3271 = vmul.f32 %v3231, %v3270
        %v3272 = vrcp.pop %v3251
        %v3273 = vmul.f32 %v3233, %v3272
        %v3274 = vrcp.pop %v3254
        %v3275 = vmul.f32 %v3235, %v3274
        %v3276 = vrcp.pop %v3257
        %v3277 = vmul.f32 %v3237, %v3276
        %v3278 = vrcp.pop %v3260
        %v3279 = vmul.f32 %v3239, %v3278
        %v3280 = vrcp.pop %v3263
        %v3281 = vmul.f32 %v3241, %v3280
        %v3282 = vrcp.pop %v3266
        %v3283 = vmul.f32 %v3243, %v3282
        %v3284 = vrcp.pop %v3269
        %v3285 = vmul.f32 %v3245, %v3284
        %v3286 = vpack.c.bf16 %v3273, %v3271
        %v3287 = vpack.c.bf16 %v3277, %v3275
        %v3288 = vpack.c.bf16 %v3281, %v3279
        %v3289 = vpack.c.bf16 %v3285, %v3283
        %v3291 = vsel %vm1380, %v3286, 0
        %v3294 = vsel %vm1380, %v3287, 0
        %v3297 = vsel %vm1380, %v3288, 0
        %v3300 = vsel %vm1380, %v3289, 0
        %3302 = vmatprep.subr.bf16.mxu0 0
        %3303 = vmatpush1.bf16.msra.mxu0 %v3105
        %3304 = vmatprep.subr.bf16.mxu0 0
        %3305 = vmatpush1.bf16.msra.mxu0 %v3106
        %3306 = vmatprep.subr.bf16.mxu0 0
        %3307 = vmatpush1.bf16.msra.mxu0 %v3107
        %3308 = vmatprep.subr.bf16.mxu0 0
        %3309 = vmatpush1.bf16.msra.mxu0 %v3108
        %3310 = vmatprep.subr.bf16.mxu0 0
        %3311 = vmatpush1.bf16.msra.mxu0 0
        %3312 = vmatprep.subr.bf16.mxu0 0
        %3313 = vmatpush1.bf16.msra.mxu0 0
        %3314 = vmatprep.subr.bf16.mxu0 0
        %3315 = vmatpush1.bf16.msra.mxu0 0
        %3316 = vmatprep.subr.bf16.mxu0 0
        %3317 = vmatpush1.bf16.msra.mxu0 0
        %3318 = vmatprep.subr.bf16.mxu0 0
        %3319 = vmatpush1.bf16.msra.mxu0 0
        %3320 = vmatprep.subr.bf16.mxu0 0
        %3321 = vmatpush1.bf16.msra.mxu0 0
        %3322 = vmatprep.subr.bf16.mxu0 0
        %3323 = vmatpush1.bf16.msra.mxu0 0
        %3324 = vmatprep.subr.bf16.mxu0 0
        %3325 = vmatpush1.bf16.msra.mxu0 0
        %3326 = vmatprep.subr.bf16.mxu0 0
        %3327 = vmatpush1.bf16.msra.mxu0 0
        %3328 = vmatprep.subr.bf16.mxu0 0
        %3329 = vmatpush1.bf16.msra.mxu0 0
        %3330 = vmatprep.subr.bf16.mxu0 0
        %3331 = vmatpush1.bf16.msra.mxu0 0
        %3332 = vmatprep.subr.bf16.mxu0 0
        %3333 = vmatpush1.bf16.msra.mxu0 0
        %3334 = vmatprep.mubr.bf16.mxu0 0
        %3335 = vmatmul.mubr.bf16.gmra.mrb[0].mxu0 %v3291
        %v3336 = vpop.f32.mrb[0].mxu0
        %v3337 = vadd.f32 0.0, %v3336
        %v3338 = vpop.f32.mrb[0].mxu0
        %v3339 = vpop.f32.mrb[0].mxu0
        %v3340 = vadd.f32 0.0, %v3339
        %v3341 = vpop.f32.mrb[0].mxu0
        %3342 = vmatprep.mubr.bf16.mxu0 0
        %3343 = vmatmul.mubr.bf16.gmra.mrb[0].mxu0 %v3294
        %v3344 = vpop.f32.mrb[0].mxu0
        %v3345 = vadd.f32 0.0, %v3344
        %v3346 = vpop.f32.mrb[0].mxu0
        %v3347 = vpop.f32.mrb[0].mxu0
        %v3348 = vadd.f32 0.0, %v3347
        %v3349 = vpop.f32.mrb[0].mxu0
        %3350 = vmatprep.mubr.bf16.mxu0 0
        %3351 = vmatmul.mubr.bf16.gmra.mrb[0].mxu0 %v3297
        %v3352 = vpop.f32.mrb[0].mxu0
        %v3353 = vadd.f32 0.0, %v3352
        %v3354 = vpop.f32.mrb[0].mxu0
        %v3355 = vpop.f32.mrb[0].mxu0
        %v3356 = vadd.f32 0.0, %v3355
        %v3357 = vpop.f32.mrb[0].mxu0
        %3358 = vmatprep.mubr.bf16.mxu0 0
        %3359 = vmatmul.mubr.bf16.gmra.mrb[0].mxu0 %v3300
        %v3360 = vpop.f32.mrb[0].mxu0
        %v3361 = vadd.f32 0.0, %v3360
        %v3362 = vpop.f32.mrb[0].mxu0
        %v3363 = vpop.f32.mrb[0].mxu0
        %v3364 = vadd.f32 0.0, %v3363
        %v3365 = vpop.f32.mrb[0].mxu0
        %3366 = vdwg.mxu0
        %v3367 = vpack.c.bf16 %v3340, %v3337
        %v3368 = vpack.c.bf16 %v3348, %v3345
        %v3369 = vpack.c.bf16 %v3356, %v3353
        %v3370 = vpack.c.bf16 %v3364, %v3361
        %3375 = vrot.lane.b32.xlu0 %v3097, 64
        %v3376 = vpop.permute.xlu0 %3375
        %3377 = vrot.lane.b32.xlu0 %v3098, 64
        %v3378 = vpop.permute.xlu0 %3377
        %3379 = vrot.lane.b32.xlu0 %v3099, 64
        %v3380 = vpop.permute.xlu0 %3379
        %3381 = vrot.lane.b32.xlu0 %v3100, 64
        %v3382 = vpop.permute.xlu0 %3381
        %3387 = vrot.lane.b32.xlu0 %v3101, 64
        %v3388 = vpop.permute.xlu0 %3387
        %3389 = vrot.lane.b32.xlu0 %v3102, 64
        %v3390 = vpop.permute.xlu0 %3389
        %3391 = vrot.lane.b32.xlu0 %v3103, 64
        %v3392 = vpop.permute.xlu0 %3391
        %3393 = vrot.lane.b32.xlu0 %v3104, 64
        %v3394 = vpop.permute.xlu0 %3393
        %v3396 = vsel %vm1380, %v3376, 0
        %v3399 = vsel %vm1380, %v3378, 0
        %v3402 = vsel %vm1380, %v3380, 0
        %v3405 = vsel %vm1380, %v3382, 0
        %v3408 = vsel %vm1380, %v3388, 0
        %v3411 = vsel %vm1380, %v3390, 0
        %v3414 = vsel %vm1380, %v3392, 0
        %v3417 = vsel %vm1380, %v3394, 0
        %3419 = vmatprep.subr.bf16.mxu0 0
        %3420 = vmatpush1.bf16.xpose.msra.mxu0 %v3408
        %3421 = vmatprep.subr.bf16.mxu0 0
        %3422 = vmatpush1.bf16.xpose.msra.mxu0 %v3411
        %3423 = vmatprep.subr.bf16.mxu0 0
        %3424 = vmatpush1.bf16.xpose.msra.mxu0 %v3414
        %3425 = vmatprep.subr.bf16.mxu0 0
        %3426 = vmatpush1.bf16.xpose.msra.mxu0 %v3417
        %3427 = vmatprep.subr.bf16.mxu0 0
        %3428 = vmatpush1.bf16.xpose.msra.mxu0 0
        %3429 = vmatprep.subr.bf16.mxu0 0
        %3430 = vmatpush1.bf16.xpose.msra.mxu0 0
        %3431 = vmatprep.subr.bf16.mxu0 0
        %3432 = vmatpush1.bf16.xpose.msra.mxu0 0
        %3433 = vmatprep.subr.bf16.mxu0 0
        %3434 = vmatpush1.bf16.xpose.msra.mxu0 0
        %3435 = vmatprep.subr.bf16.mxu0 0
        %3436 = vmatpush1.bf16.xpose.msra.mxu0 0
        %3437 = vmatprep.subr.bf16.mxu0 0
        %3438 = vmatpush1.bf16.xpose.msra.mxu0 0
        %3439 = vmatprep.subr.bf16.mxu0 0
        %3440 = vmatpush1.bf16.xpose.msra.mxu0 0
        %3441 = vmatprep.subr.bf16.mxu0 0
        %3442 = vmatpush1.bf16.xpose.msra.mxu0 0
        %3443 = vmatprep.subr.bf16.mxu0 0
        %3444 = vmatpush1.bf16.xpose.msra.mxu0 0
        %3445 = vmatprep.subr.bf16.mxu0 0
        %3446 = vmatpush1.bf16.xpose.msra.mxu0 0
        %3447 = vmatprep.subr.bf16.mxu0 0
        %3448 = vmatpush1.bf16.xpose.msra.mxu0 0
        %3449 = vmatprep.subr.bf16.mxu0 0
        %3450 = vmatpush1.bf16.xpose.msra.mxu0 0
        %3451 = vmatprep.mubr.bf16.mxu0 0
        %3452 = vmatmul.mubr.bf16.gmra.mrb[0].mxu0 %v3396
        %v3453 = vpop.f32.mrb[0].mxu0
        %v3454 = vadd.f32 0.0, %v3453
        %v3455 = vpop.f32.mrb[0].mxu0
        %v3456 = vpop.f32.mrb[0].mxu0
        %v3457 = vadd.f32 0.0, %v3456
        %v3458 = vpop.f32.mrb[0].mxu0
        %3459 = vmatprep.mubr.bf16.mxu0 0
        %3460 = vmatmul.mubr.bf16.gmra.mrb[0].mxu0 %v3399
        %v3461 = vpop.f32.mrb[0].mxu0
        %v3462 = vadd.f32 0.0, %v3461
        %v3463 = vpop.f32.mrb[0].mxu0
        %v3464 = vpop.f32.mrb[0].mxu0
        %v3465 = vadd.f32 0.0, %v3464
        %v3466 = vpop.f32.mrb[0].mxu0
        %3467 = vmatprep.mubr.bf16.mxu0 0
        %3468 = vmatmul.mubr.bf16.gmra.mrb[0].mxu0 %v3402
        %v3469 = vpop.f32.mrb[0].mxu0
        %v3470 = vadd.f32 0.0, %v3469
        %v3471 = vpop.f32.mrb[0].mxu0
        %v3472 = vpop.f32.mrb[0].mxu0
        %v3473 = vadd.f32 0.0, %v3472
        %v3474 = vpop.f32.mrb[0].mxu0
        %3475 = vmatprep.mubr.bf16.mxu0 0
        %3476 = vmatmul.mubr.bf16.gmra.mrb[0].mxu0 %v3405
        %v3477 = vpop.f32.mrb[0].mxu0
        %v3478 = vadd.f32 0.0, %v3477
        %v3479 = vpop.f32.mrb[0].mxu0
        %v3480 = vpop.f32.mrb[0].mxu0
        %v3481 = vadd.f32 0.0, %v3480
        %v3482 = vpop.f32.mrb[0].mxu0
        %3483 = vdwg.mxu0
        %v3484 = vsel %vm1380, %v3454, -inf
        %3485 = vmax.xlane.f32.xlu0 %v3484
        %v3486 = vpop.xlane.xlu0 %3485
        %v3487 = vsel %vm1380, %v3457, -inf
        %3488 = vmax.xlane.f32.xlu0 %v3487
        %v3489 = vpop.xlane.xlu0 %3488
        %v3490 = vsel %vm1380, %v3462, -inf
        %3491 = vmax.xlane.f32.xlu0 %v3490
        %v3492 = vpop.xlane.xlu0 %3491
        %v3493 = vsel %vm1380, %v3465, -inf
        %3494 = vmax.xlane.f32.xlu0 %v3493
        %v3495 = vpop.xlane.xlu0 %3494
        %v3496 = vsel %vm1380, %v3470, -inf
        %3497 = vmax.xlane.f32.xlu0 %v3496
        %v3498 = vpop.xlane.xlu0 %3497
        %v3499 = vsel %vm1380, %v3473, -inf
        %3500 = vmax.xlane.f32.xlu0 %v3499
        %v3501 = vpop.xlane.xlu0 %3500
        %v3502 = vsel %vm1380, %v3478, -inf
        %3503 = vmax.xlane.f32.xlu0 %v3502
        %v3504 = vpop.xlane.xlu0 %3503
        %v3505 = vsel %vm1380, %v3481, -inf
        %3506 = vmax.xlane.f32.xlu0 %v3505
        %v3507 = vpop.xlane.xlu0 %3506
        %v3508 = vsub.f32 %v3454, %v3486
        %v3509 = vsub.f32 %v3457, %v3489
        %v3510 = vsub.f32 %v3462, %v3492
        %v3511 = vsub.f32 %v3465, %v3495
        %v3512 = vsub.f32 %v3470, %v3498
        %v3513 = vsub.f32 %v3473, %v3501
        %v3514 = vsub.f32 %v3478, %v3504
        %v3515 = vsub.f32 %v3481, %v3507
        %v3516 = vmul.f32 %v3508, 1.442695
        %v3517 = vpow.pop %v3516
        %v3518 = vmul.f32 %v3509, 1.442695
        %v3519 = vpow.pop %v3518
        %v3520 = vmul.f32 %v3510, 1.442695
        %v3521 = vpow.pop %v3520
        %v3522 = vmul.f32 %v3511, 1.442695
        %v3523 = vpow.pop %v3522
        %v3524 = vmul.f32 %v3512, 1.442695
        %v3525 = vpow.pop %v3524
        %v3526 = vmul.f32 %v3513, 1.442695
        %v3527 = vpow.pop %v3526
        %v3528 = vmul.f32 %v3514, 1.442695
        %v3529 = vpow.pop %v3528
        %v3530 = vmul.f32 %v3515, 1.442695
        %v3531 = vpow.pop %v3530
        %v3532 = vsel %vm1380, %v3517, 0.0
        %3533 = vadd.xlane.f32.xlu0 %v3532
        %v3534 = vpop.xlane.xlu0 %3533
        %v3535 = vsel %vm1380, %v3519, 0.0
        %3536 = vadd.xlane.f32.xlu0 %v3535
        %v3537 = vpop.xlane.xlu0 %3536
        %v3538 = vsel %vm1380, %v3521, 0.0
        %3539 = vadd.xlane.f32.xlu0 %v3538
        %v3540 = vpop.xlane.xlu0 %3539
        %v3541 = vsel %vm1380, %v3523, 0.0
        %3542 = vadd.xlane.f32.xlu0 %v3541
        %v3543 = vpop.xlane.xlu0 %3542
        %v3544 = vsel %vm1380, %v3525, 0.0
        %3545 = vadd.xlane.f32.xlu0 %v3544
        %v3546 = vpop.xlane.xlu0 %3545
        %v3547 = vsel %vm1380, %v3527, 0.0
        %3548 = vadd.xlane.f32.xlu0 %v3547
        %v3549 = vpop.xlane.xlu0 %3548
        %v3550 = vsel %vm1380, %v3529, 0.0
        %3551 = vadd.xlane.f32.xlu0 %v3550
        %v3552 = vpop.xlane.xlu0 %3551
        %v3553 = vsel %vm1380, %v3531, 0.0
        %3554 = vadd.xlane.f32.xlu0 %v3553
        %v3555 = vpop.xlane.xlu0 %3554
        %v3556 = vrcp.pop %v3534
        %v3557 = vmul.f32 %v3517, %v3556
        %v3558 = vrcp.pop %v3537
        %v3559 = vmul.f32 %v3519, %v3558
        %v3560 = vrcp.pop %v3540
        %v3561 = vmul.f32 %v3521, %v3560
        %v3562 = vrcp.pop %v3543
        %v3563 = vmul.f32 %v3523, %v3562
        %v3564 = vrcp.pop %v3546
        %v3565 = vmul.f32 %v3525, %v3564
        %v3566 = vrcp.pop %v3549
        %v3567 = vmul.f32 %v3527, %v3566
        %v3568 = vrcp.pop %v3552
        %v3569 = vmul.f32 %v3529, %v3568
        %v3570 = vrcp.pop %v3555
        %v3571 = vmul.f32 %v3531, %v3570
        %v3572 = vpack.c.bf16 %v3559, %v3557
        %v3573 = vpack.c.bf16 %v3563, %v3561
        %v3574 = vpack.c.bf16 %v3567, %v3565
        %v3575 = vpack.c.bf16 %v3571, %v3569
        %3580 = vrot.lane.b32.xlu0 %v3105, 64
        %v3581 = vpop.permute.xlu0 %3580
        %3582 = vrot.lane.b32.xlu0 %v3106, 64
        %v3583 = vpop.permute.xlu0 %3582
        %3584 = vrot.lane.b32.xlu0 %v3107, 64
        %v3585 = vpop.permute.xlu0 %3584
        %3586 = vrot.lane.b32.xlu0 %v3108, 64
        %v3587 = vpop.permute.xlu0 %3586
        %v3593 = vsel %vm1380, %v3572, 0
        %v3596 = vsel %vm1380, %v3573, 0
        %v3599 = vsel %vm1380, %v3574, 0
        %v3602 = vsel %vm1380, %v3575, 0
        %3604 = vmatprep.subr.bf16.mxu0 0
        %3605 = vmatpush1.bf16.msra.mxu0 %v3581
        %3606 = vmatprep.subr.bf16.mxu0 0
        %3607 = vmatpush1.bf16.msra.mxu0 %v3583
        %3608 = vmatprep.subr.bf16.mxu0 0
        %3609 = vmatpush1.bf16.msra.mxu0 %v3585
        %3610 = vmatprep.subr.bf16.mxu0 0
        %3611 = vmatpush1.bf16.msra.mxu0 %v3587
        %3612 = vmatprep.subr.bf16.mxu0 0
        %3613 = vmatpush1.bf16.msra.mxu0 0
        %3614 = vmatprep.subr.bf16.mxu0 0
        %3615 = vmatpush1.bf16.msra.mxu0 0
        %3616 = vmatprep.subr.bf16.mxu0 0
        %3617 = vmatpush1.bf16.msra.mxu0 0
        %3618 = vmatprep.subr.bf16.mxu0 0
        %3619 = vmatpush1.bf16.msra.mxu0 0
        %3620 = vmatprep.subr.bf16.mxu0 0
        %3621 = vmatpush1.bf16.msra.mxu0 0
        %3622 = vmatprep.subr.bf16.mxu0 0
        %3623 = vmatpush1.bf16.msra.mxu0 0
        %3624 = vmatprep.subr.bf16.mxu0 0
        %3625 = vmatpush1.bf16.msra.mxu0 0
        %3626 = vmatprep.subr.bf16.mxu0 0
        %3627 = vmatpush1.bf16.msra.mxu0 0
        %3628 = vmatprep.subr.bf16.mxu0 0
        %3629 = vmatpush1.bf16.msra.mxu0 0
        %3630 = vmatprep.subr.bf16.mxu0 0
        %3631 = vmatpush1.bf16.msra.mxu0 0
        %3632 = vmatprep.subr.bf16.mxu0 0
        %3633 = vmatpush1.bf16.msra.mxu0 0
        %3634 = vmatprep.subr.bf16.mxu0 0
        %3635 = vmatpush1.bf16.msra.mxu0 0
        %3636 = vmatprep.mubr.bf16.mxu0 0
        %3637 = vmatmul.mubr.bf16.gmra.mrb[0].mxu0 %v3593
        %v3638 = vpop.f32.mrb[0].mxu0
        %v3639 = vadd.f32 0.0, %v3638
        %v3640 = vpop.f32.mrb[0].mxu0
        %v3641 = vpop.f32.mrb[0].mxu0
        %v3642 = vadd.f32 0.0, %v3641
        %v3643 = vpop.f32.mrb[0].mxu0
        %3644 = vmatprep.mubr.bf16.mxu0 0
        %3645 = vmatmul.mubr.bf16.gmra.mrb[0].mxu0 %v3596
        %v3646 = vpop.f32.mrb[0].mxu0
        %v3647 = vadd.f32 0.0, %v3646
        %v3648 = vpop.f32.mrb[0].mxu0
        %v3649 = vpop.f32.mrb[0].mxu0
        %v3650 = vadd.f32 0.0, %v3649
        %v3651 = vpop.f32.mrb[0].mxu0
        %3652 = vmatprep.mubr.bf16.mxu0 0
        %3653 = vmatmul.mubr.bf16.gmra.mrb[0].mxu0 %v3599
        %v3654 = vpop.f32.mrb[0].mxu0
        %v3655 = vadd.f32 0.0, %v3654
        %v3656 = vpop.f32.mrb[0].mxu0
        %v3657 = vpop.f32.mrb[0].mxu0
        %v3658 = vadd.f32 0.0, %v3657
        %v3659 = vpop.f32.mrb[0].mxu0
        %3660 = vmatprep.mubr.bf16.mxu0 0
        %3661 = vmatmul.mubr.bf16.gmra.mrb[0].mxu0 %v3602
        %v3662 = vpop.f32.mrb[0].mxu0
        %v3663 = vadd.f32 0.0, %v3662
        %v3664 = vpop.f32.mrb[0].mxu0
        %v3665 = vpop.f32.mrb[0].mxu0
        %v3666 = vadd.f32 0.0, %v3665
        %v3667 = vpop.f32.mrb[0].mxu0
        %3668 = vdwg.mxu0
        %v3669 = vpack.c.bf16 %v3642, %v3639
        %v3670 = vpack.c.bf16 %v3650, %v3647
        %v3671 = vpack.c.bf16 %v3658, %v3655
        %v3672 = vpack.c.bf16 %v3666, %v3663
        %3677 = vrot.lane.b32.xlu0 %v1941, 64
        %v3678 = vpop.permute.xlu0 %3677
        %3679 = vrot.lane.b32.xlu0 %v1942, 64
        %v3680 = vpop.permute.xlu0 %3679
        %3681 = vrot.lane.b32.xlu0 %v1943, 64
        %v3682 = vpop.permute.xlu0 %3681
        %3683 = vrot.lane.b32.xlu0 %v1944, 64
        %v3684 = vpop.permute.xlu0 %3683
        %3689 = vrot.lane.b32.xlu0 %v2517, 64
        %v3690 = vpop.permute.xlu0 %3689
        %3691 = vrot.lane.b32.xlu0 %v2518, 64
        %v3692 = vpop.permute.xlu0 %3691
        %3693 = vrot.lane.b32.xlu0 %v2519, 64
        %v3694 = vpop.permute.xlu0 %3693
        %3695 = vrot.lane.b32.xlu0 %v2520, 64
        %v3696 = vpop.permute.xlu0 %3695
        %3701 = vrot.lane.b32.xlu0 %v3093, 64
        %v3702 = vpop.permute.xlu0 %3701
        %3703 = vrot.lane.b32.xlu0 %v3094, 64
        %v3704 = vpop.permute.xlu0 %3703
        %3705 = vrot.lane.b32.xlu0 %v3095, 64
        %v3706 = vpop.permute.xlu0 %3705
        %3707 = vrot.lane.b32.xlu0 %v3096, 64
        %v3708 = vpop.permute.xlu0 %3707
        %3713 = vrot.lane.b32.xlu0 %v3669, 64
        %v3714 = vpop.permute.xlu0 %3713
        %3715 = vrot.lane.b32.xlu0 %v3670, 64
        %v3716 = vpop.permute.xlu0 %3715
        %3717 = vrot.lane.b32.xlu0 %v3671, 64
        %v3718 = vpop.permute.xlu0 %3717
        %3719 = vrot.lane.b32.xlu0 %v3672, 64
        %v3720 = vpop.permute.xlu0 %3719
        %v3723 = vsel %vm1380, %v1639, %v3678
        %v3727 = vsel %vm1380, %v1640, %v3680
        %v3731 = vsel %vm1380, %v1641, %v3682
        %v3735 = vsel %vm1380, %v1642, %v3684
        %v3739 = vsel %vm1380, %v2215, %v3690
        %v3743 = vsel %vm1380, %v2216, %v3692
        %v3747 = vsel %vm1380, %v2217, %v3694
        %v3751 = vsel %vm1380, %v2218, %v3696
        %v3755 = vsel %vm1380, %v2791, %v3702
        %v3759 = vsel %vm1380, %v2792, %v3704
        %v3763 = vsel %vm1380, %v2793, %v3706
        %v3767 = vsel %vm1380, %v2794, %v3708
        %v3771 = vsel %vm1380, %v3367, %v3714
        %v3775 = vsel %vm1380, %v3368, %v3716
        %v3779 = vsel %vm1380, %v3369, %v3718
        %v3783 = vsel %vm1380, %v3370, %v3720
        %v3785 = vld [vmem:[#allocation8] sm:$0xf]
        %v3786 = vld [vmem:[#allocation8 + $0x4] sm:$0xf]
        %v3787 = vld [vmem:[#allocation8 + $0x8] sm:$0xf]
        %v3788 = vld [vmem:[#allocation8 + $0xc] sm:$0xf]
        %v3789 = vld [vmem:[#allocation8 + $0x10] sm:$0xf]
        %v3790 = vld [vmem:[#allocation8 + $0x14] sm:$0xf]
        %v3791 = vld [vmem:[#allocation8 + $0x18] sm:$0xf]
        %v3792 = vld [vmem:[#allocation8 + $0x1c] sm:$0xf]
        %v3793 = vld [vmem:[#allocation8 + $0x20] sm:$0xf]
        %v3794 = vld [vmem:[#allocation8 + $0x24] sm:$0xf]
        %v3795 = vld [vmem:[#allocation8 + $0x28] sm:$0xf]
        %v3796 = vld [vmem:[#allocation8 + $0x2c] sm:$0xf]
        %v3797 = vld [vmem:[#allocation8 + $0x30] sm:$0xf]
        %v3798 = vld [vmem:[#allocation8 + $0x34] sm:$0xf]
        %v3799 = vld [vmem:[#allocation8 + $0x38] sm:$0xf]
        %v3800 = vld [vmem:[#allocation8 + $0x3c] sm:$0xf]
        %v3801 = vld [vmem:[#allocation8 + $0x40] sm:$0xf]
        %v3802 = vld [vmem:[#allocation8 + $0x44] sm:$0xf]
        %v3803 = vld [vmem:[#allocation8 + $0x48] sm:$0xf]
        %v3804 = vld [vmem:[#allocation8 + $0x4c] sm:$0xf]
        %v3805 = vld [vmem:[#allocation8 + $0x50] sm:$0xf]
        %v3806 = vld [vmem:[#allocation8 + $0x54] sm:$0xf]
        %v3807 = vld [vmem:[#allocation8 + $0x58] sm:$0xf]
        %v3808 = vld [vmem:[#allocation8 + $0x5c] sm:$0xf]
        %v3809 = vld [vmem:[#allocation8 + $0x60] sm:$0xf]
        %v3810 = vld [vmem:[#allocation8 + $0x64] sm:$0xf]
        %v3811 = vld [vmem:[#allocation8 + $0x68] sm:$0xf]
        %v3812 = vld [vmem:[#allocation8 + $0x6c] sm:$0xf]
        %v3813 = vld [vmem:[#allocation8 + $0x70] sm:$0xf]
        %v3814 = vld [vmem:[#allocation8 + $0x74] sm:$0xf]
        %v3815 = vld [vmem:[#allocation8 + $0x78] sm:$0xf]
        %v3816 = vld [vmem:[#allocation8 + $0x7c] sm:$0xf]
        %v3817 = vld [vmem:[#allocation8 + $0x80] sm:$0xf]
        %v3818 = vld [vmem:[#allocation8 + $0x84] sm:$0xf]
        %v3819 = vld [vmem:[#allocation8 + $0x88] sm:$0xf]
        %v3820 = vld [vmem:[#allocation8 + $0x8c] sm:$0xf]
        %v3821 = vld [vmem:[#allocation8 + $0x90] sm:$0xf]
        %v3822 = vld [vmem:[#allocation8 + $0x94] sm:$0xf]
        %v3823 = vld [vmem:[#allocation8 + $0x98] sm:$0xf]
        %v3824 = vld [vmem:[#allocation8 + $0x9c] sm:$0xf]
        %v3825 = vld [vmem:[#allocation8 + $0xa0] sm:$0xf]
        %v3826 = vld [vmem:[#allocation8 + $0xa4] sm:$0xf]
        %v3827 = vld [vmem:[#allocation8 + $0xa8] sm:$0xf]
        %v3828 = vld [vmem:[#allocation8 + $0xac] sm:$0xf]
        %v3829 = vld [vmem:[#allocation8 + $0xb0] sm:$0xf]
        %v3830 = vld [vmem:[#allocation8 + $0xb4] sm:$0xf]
        %v3831 = vld [vmem:[#allocation8 + $0xb8] sm:$0xf]
        %v3832 = vld [vmem:[#allocation8 + $0xbc] sm:$0xf]
        %v3833 = vld [vmem:[#allocation8 + $0xc0] sm:$0xf]
        %v3834 = vld [vmem:[#allocation8 + $0xc4] sm:$0xf]
        %v3835 = vld [vmem:[#allocation8 + $0xc8] sm:$0xf]
        %v3836 = vld [vmem:[#allocation8 + $0xcc] sm:$0xf]
        %v3837 = vld [vmem:[#allocation8 + $0xd0] sm:$0xf]
        %v3838 = vld [vmem:[#allocation8 + $0xd4] sm:$0xf]
        %v3839 = vld [vmem:[#allocation8 + $0xd8] sm:$0xf]
        %v3840 = vld [vmem:[#allocation8 + $0xdc] sm:$0xf]
        %v3841 = vld [vmem:[#allocation8 + $0xe0] sm:$0xf]
        %v3842 = vld [vmem:[#allocation8 + $0xe4] sm:$0xf]
        %v3843 = vld [vmem:[#allocation8 + $0xe8] sm:$0xf]
        %v3844 = vld [vmem:[#allocation8 + $0xec] sm:$0xf]
        %v3845 = vld [vmem:[#allocation8 + $0xf0] sm:$0xf]
        %v3846 = vld [vmem:[#allocation8 + $0xf4] sm:$0xf]
        %v3847 = vld [vmem:[#allocation8 + $0xf8] sm:$0xf]
        %v3848 = vld [vmem:[#allocation8 + $0xfc] sm:$0xf]
        %v3849 = vld [vmem:[%s3] sm:$0x1]
        %v3851 = vlaneseq
        %v3852 = vshrl.u32 %v3851, 7
        %v3853 = vsub.s32 0, %v3852
        %v3854 = vrot.slane %v3849, %v3853
        %v3920 = vunpack.c.l.b16 %v3785
        %v3921 = vunpack.c.l.b16 %v3786
        %v3922 = vunpack.c.l.b16 %v3787
        %v3923 = vunpack.c.l.b16 %v3788
        %v3924 = vunpack.c.l.b16 %v3789
        %v3925 = vunpack.c.l.b16 %v3790
        %v3926 = vunpack.c.l.b16 %v3791
        %v3927 = vunpack.c.l.b16 %v3792
        %v3928 = vunpack.c.l.b16 %v3793
        %v3929 = vunpack.c.l.b16 %v3794
        %v3930 = vunpack.c.l.b16 %v3795
        %v3931 = vunpack.c.l.b16 %v3796
        %v3932 = vunpack.c.l.b16 %v3797
        %v3933 = vunpack.c.l.b16 %v3798
        %v3934 = vunpack.c.l.b16 %v3799
        %v3935 = vunpack.c.l.b16 %v3800
        %v3936 = vunpack.c.l.b16 %v3801
        %v3937 = vunpack.c.l.b16 %v3802
        %v3938 = vunpack.c.l.b16 %v3803
        %v3939 = vunpack.c.l.b16 %v3804
        %v3940 = vunpack.c.l.b16 %v3805
        %v3941 = vunpack.c.l.b16 %v3806
        %v3942 = vunpack.c.l.b16 %v3807
        %v3943 = vunpack.c.l.b16 %v3808
        %v3944 = vunpack.c.l.b16 %v3809
        %v3945 = vunpack.c.l.b16 %v3810
        %v3946 = vunpack.c.l.b16 %v3811
        %v3947 = vunpack.c.l.b16 %v3812
        %v3948 = vunpack.c.l.b16 %v3813
        %v3949 = vunpack.c.l.b16 %v3814
        %v3950 = vunpack.c.l.b16 %v3815
        %v3951 = vunpack.c.l.b16 %v3816
        %v3952 = vunpack.c.l.b16 %v3817
        %v3953 = vunpack.c.l.b16 %v3818
        %v3954 = vunpack.c.l.b16 %v3819
        %v3955 = vunpack.c.l.b16 %v3820
        %v3956 = vunpack.c.l.b16 %v3821
        %v3957 = vunpack.c.l.b16 %v3822
        %v3958 = vunpack.c.l.b16 %v3823
        %v3959 = vunpack.c.l.b16 %v3824
        %v3960 = vunpack.c.l.b16 %v3825
        %v3961 = vunpack.c.l.b16 %v3826
        %v3962 = vunpack.c.l.b16 %v3827
        %v3963 = vunpack.c.l.b16 %v3828
        %v3964 = vunpack.c.l.b16 %v3829
        %v3965 = vunpack.c.l.b16 %v3830
        %v3966 = vunpack.c.l.b16 %v3831
        %v3967 = vunpack.c.l.b16 %v3832
        %v3968 = vunpack.c.l.b16 %v3833
        %v3969 = vunpack.c.l.b16 %v3834
        %v3970 = vunpack.c.l.b16 %v3835
        %v3971 = vunpack.c.l.b16 %v3836
        %v3972 = vunpack.c.l.b16 %v3837
        %v3973 = vunpack.c.l.b16 %v3838
        %v3974 = vunpack.c.l.b16 %v3839
        %v3975 = vunpack.c.l.b16 %v3840
        %v3976 = vunpack.c.l.b16 %v3841
        %v3977 = vunpack.c.l.b16 %v3842
        %v3978 = vunpack.c.l.b16 %v3843
        %v3979 = vunpack.c.l.b16 %v3844
        %v3980 = vunpack.c.l.b16 %v3845
        %v3981 = vunpack.c.l.b16 %v3846
        %v3982 = vunpack.c.l.b16 %v3847
        %v3983 = vunpack.c.l.b16 %v3848
        %v3984 = vpack.c.b16 %v3921, %v3920
        %v3985 = vpack.c.b16 %v3923, %v3922
        %v3986 = vpack.c.b16 %v3925, %v3924
        %v3987 = vpack.c.b16 %v3927, %v3926
        %v3988 = vpack.c.b16 %v3929, %v3928
        %v3989 = vpack.c.b16 %v3931, %v3930
        %v3990 = vpack.c.b16 %v3933, %v3932
        %v3991 = vpack.c.b16 %v3935, %v3934
        %v3992 = vpack.c.b16 %v3937, %v3936
        %v3993 = vpack.c.b16 %v3939, %v3938
        %v3994 = vpack.c.b16 %v3941, %v3940
        %v3995 = vpack.c.b16 %v3943, %v3942
        %v3996 = vpack.c.b16 %v3945, %v3944
        %v3997 = vpack.c.b16 %v3947, %v3946
        %v3998 = vpack.c.b16 %v3949, %v3948
        %v3999 = vpack.c.b16 %v3951, %v3950
        %v4000 = vpack.c.b16 %v3953, %v3952
        %v4001 = vpack.c.b16 %v3955, %v3954
        %v4002 = vpack.c.b16 %v3957, %v3956
        %v4003 = vpack.c.b16 %v3959, %v3958
        %v4004 = vpack.c.b16 %v3961, %v3960
        %v4005 = vpack.c.b16 %v3963, %v3962
        %v4006 = vpack.c.b16 %v3965, %v3964
        %v4007 = vpack.c.b16 %v3967, %v3966
        %v4008 = vpack.c.b16 %v3969, %v3968
        %v4009 = vpack.c.b16 %v3971, %v3970
        %v4010 = vpack.c.b16 %v3973, %v3972
        %v4011 = vpack.c.b16 %v3975, %v3974
        %v4012 = vpack.c.b16 %v3977, %v3976
        %v4013 = vpack.c.b16 %v3979, %v3978
        %v4014 = vpack.c.b16 %v3981, %v3980
        %v4015 = vpack.c.b16 %v3983, %v3982
        %4048 = vmatprep.subr.bf16.mxu0 0
        %4049 = vmatpush1.bf16.msra.mxu0 %v3984
        %4050 = vmatprep.subr.bf16.mxu0 0
        %4051 = vmatpush1.bf16.msra.mxu0 %v3985
        %4052 = vmatprep.subr.bf16.mxu0 0
        %4053 = vmatpush1.bf16.msra.mxu0 %v3986
        %4054 = vmatprep.subr.bf16.mxu0 0
        %4055 = vmatpush1.bf16.msra.mxu0 %v3987
        %4056 = vmatprep.subr.bf16.mxu0 0
        %4057 = vmatpush1.bf16.msra.mxu0 %v3988
        %4058 = vmatprep.subr.bf16.mxu0 0
        %4059 = vmatpush1.bf16.msra.mxu0 %v3989
        %4060 = vmatprep.subr.bf16.mxu0 0
        %4061 = vmatpush1.bf16.msra.mxu0 %v3990
        %4062 = vmatprep.subr.bf16.mxu0 0
        %4063 = vmatpush1.bf16.msra.mxu0 %v3991
        %4064 = vmatprep.subr.bf16.mxu0 0
        %4065 = vmatpush1.bf16.msra.mxu0 %v3992
        %4066 = vmatprep.subr.bf16.mxu0 0
        %4067 = vmatpush1.bf16.msra.mxu0 %v3993
        %4068 = vmatprep.subr.bf16.mxu0 0
        %4069 = vmatpush1.bf16.msra.mxu0 %v3994
        %4070 = vmatprep.subr.bf16.mxu0 0
        %4071 = vmatpush1.bf16.msra.mxu0 %v3995
        %4072 = vmatprep.subr.bf16.mxu0 0
        %4073 = vmatpush1.bf16.msra.mxu0 %v3996
        %4074 = vmatprep.subr.bf16.mxu0 0
        %4075 = vmatpush1.bf16.msra.mxu0 %v3997
        %4076 = vmatprep.subr.bf16.mxu0 0
        %4077 = vmatpush1.bf16.msra.mxu0 %v3998
        %4078 = vmatprep.subr.bf16.mxu0 0
        %4079 = vmatpush1.bf16.msra.mxu0 %v3999
        %4080 = vmatprep.mubr.bf16.mxu0 %v3739
        %4081 = vmatmul.mubr.bf16.gmra.mrb[0].mxu0 %v3723
        %v4082 = vpop.f32.mrb[0].mxu0
        %v4083 = vadd.f32 %v3854, %v4082
        %v4084 = vpop.f32.mrb[0].mxu0
        %v4085 = vpop.f32.mrb[0].mxu0
        %v4086 = vadd.f32 %v3854, %v4085
        %v4087 = vpop.f32.mrb[0].mxu0
        %4088 = vmatprep.mubr.bf16.mxu0 %v3743
        %4089 = vmatmul.mubr.bf16.gmra.mrb[0].mxu0 %v3727
        %v4090 = vpop.f32.mrb[0].mxu0
        %v4091 = vadd.f32 %v3854, %v4090
        %v4092 = vpop.f32.mrb[0].mxu0
        %v4093 = vpop.f32.mrb[0].mxu0
        %v4094 = vadd.f32 %v3854, %v4093
        %v4095 = vpop.f32.mrb[0].mxu0
        %4096 = vmatprep.mubr.bf16.mxu0 %v3747
        %4097 = vmatmul.mubr.bf16.gmra.mrb[0].mxu0 %v3731
        %v4098 = vpop.f32.mrb[0].mxu0
        %v4099 = vadd.f32 %v3854, %v4098
        %v4100 = vpop.f32.mrb[0].mxu0
        %v4101 = vpop.f32.mrb[0].mxu0
        %v4102 = vadd.f32 %v3854, %v4101
        %v4103 = vpop.f32.mrb[0].mxu0
        %4104 = vmatprep.mubr.bf16.mxu0 %v3751
        %4105 = vmatmul.mubr.bf16.gmra.mrb[0].mxu0 %v3735
        %v4106 = vpop.f32.mrb[0].mxu0
        %v4107 = vadd.f32 %v3854, %v4106
        %v4108 = vpop.f32.mrb[0].mxu0
        %v4109 = vpop.f32.mrb[0].mxu0
        %v4110 = vadd.f32 %v3854, %v4109
        %v4111 = vpop.f32.mrb[0].mxu0
        %4112 = vdwg.mxu0
        %4113 = vmatprep.subr.bf16.mxu0 0
        %4114 = vmatpush1.bf16.msra.mxu0 %v4000
        %4115 = vmatprep.subr.bf16.mxu0 0
        %4116 = vmatpush1.bf16.msra.mxu0 %v4001
        %4117 = vmatprep.subr.bf16.mxu0 0
        %4118 = vmatpush1.bf16.msra.mxu0 %v4002
        %4119 = vmatprep.subr.bf16.mxu0 0
        %4120 = vmatpush1.bf16.msra.mxu0 %v4003
        %4121 = vmatprep.subr.bf16.mxu0 0
        %4122 = vmatpush1.bf16.msra.mxu0 %v4004
        %4123 = vmatprep.subr.bf16.mxu0 0
        %4124 = vmatpush1.bf16.msra.mxu0 %v4005
        %4125 = vmatprep.subr.bf16.mxu0 0
        %4126 = vmatpush1.bf16.msra.mxu0 %v4006
        %4127 = vmatprep.subr.bf16.mxu0 0
        %4128 = vmatpush1.bf16.msra.mxu0 %v4007
        %4129 = vmatprep.subr.bf16.mxu0 0
        %4130 = vmatpush1.bf16.msra.mxu0 %v4008
        %4131 = vmatprep.subr.bf16.mxu0 0
        %4132 = vmatpush1.bf16.msra.mxu0 %v4009
        %4133 = vmatprep.subr.bf16.mxu0 0
        %4134 = vmatpush1.bf16.msra.mxu0 %v4010
        %4135 = vmatprep.subr.bf16.mxu0 0
        %4136 = vmatpush1.bf16.msra.mxu0 %v4011
        %4137 = vmatprep.subr.bf16.mxu0 0
        %4138 = vmatpush1.bf16.msra.mxu0 %v4012
        %4139 = vmatprep.subr.bf16.mxu0 0
        %4140 = vmatpush1.bf16.msra.mxu0 %v4013
        %4141 = vmatprep.subr.bf16.mxu0 0
        %4142 = vmatpush1.bf16.msra.mxu0 %v4014
        %4143 = vmatprep.subr.bf16.mxu0 0
        %4144 = vmatpush1.bf16.msra.mxu0 %v4015
        %4145 = vmatprep.mubr.bf16.mxu0 %v3771
        %4146 = vmatmul.mubr.bf16.gmra.mrb[0].mxu0 %v3755
        %v4147 = vpop.f32.mrb[0].mxu0
        %v4148 = vadd.f32 %v4083, %v4147
        %v4149 = vpop.f32.mrb[0].mxu0
        %v4150 = vpop.f32.mrb[0].mxu0
        %v4151 = vadd.f32 %v4086, %v4150
        %v4152 = vpop.f32.mrb[0].mxu0
        %4153 = vmatprep.mubr.bf16.mxu0 %v3775
        %4154 = vmatmul.mubr.bf16.gmra.mrb[0].mxu0 %v3759
        %v4155 = vpop.f32.mrb[0].mxu0
        %v4156 = vadd.f32 %v4091, %v4155
        %v4157 = vpop.f32.mrb[0].mxu0
        %v4158 = vpop.f32.mrb[0].mxu0
        %v4159 = vadd.f32 %v4094, %v4158
        %v4160 = vpop.f32.mrb[0].mxu0
        %4161 = vmatprep.mubr.bf16.mxu0 %v3779
        %4162 = vmatmul.mubr.bf16.gmra.mrb[0].mxu0 %v3763
        %v4163 = vpop.f32.mrb[0].mxu0
        %v4164 = vadd.f32 %v4099, %v4163
        %v4165 = vpop.f32.mrb[0].mxu0
        %v4166 = vpop.f32.mrb[0].mxu0
        %v4167 = vadd.f32 %v4102, %v4166
        %v4168 = vpop.f32.mrb[0].mxu0
        %4169 = vmatprep.mubr.bf16.mxu0 %v3783
        %4170 = vmatmul.mubr.bf16.gmra.mrb[0].mxu0 %v3767
        %v4171 = vpop.f32.mrb[0].mxu0
        %v4172 = vadd.f32 %v4107, %v4171
        %v4173 = vpop.f32.mrb[0].mxu0
        %v4174 = vpop.f32.mrb[0].mxu0
        %v4175 = vadd.f32 %v4110, %v4174
        %v4176 = vpop.f32.mrb[0].mxu0
        %4177 = vdwg.mxu0
        %4178 = vst [vmem:[%s244] sm:$0xff] %v4148
        %4179 = vst [vmem:[%s244 + $0x8] sm:$0xff] %v4151
        %4180 = vst [vmem:[%s244 + $0x10] sm:$0xff] %v4156
        %4181 = vst [vmem:[%s244 + $0x18] sm:$0xff] %v4159
        %4182 = vst [vmem:[%s244 + $0x20] sm:$0xff] %v4164
        %4183 = vst [vmem:[%s244 + $0x28] sm:$0xff] %v4167
        %4184 = vst [vmem:[%s244 + $0x30] sm:$0xff] %v4172
        %4185 = vst [vmem:[%s244 + $0x38] sm:$0xff] %v4175
        %s4186 = sand.u32 %s119, 1
        %s4187 = scalar_lea.sflag [#allocation5], %s4186
        %s4188 = sand.u32 %s119, 1
        %s4189 = smul.addr %s4188, 64
        %s4190 = scalar_lea.vmem [#allocation9], %s4189
        // Predicated region
        $region49: #{attention_forward.1} parent=35 // pred_check
          %p4191 = pneg %p129
        $region50: #{attention_forward.1} parent=35 // pred_check_branch
          %4193 = sbr.rel (%p4191) target = $region52
        $region51: #{attention_forward.1} parent=35 // pred_region
          %s4195 = ssub.s32 1024, 1024
          %4196 = vsyncadd %s4187, %s4195
          %s4197 = smul.addr %s22, 8
          %s4198 = smul.addr %s4197, 128
          %s4199 = scalar_lea.hbm %s4, %s4198
          %s4200 = sshll.u32 %s4190, 4
          %s4201 = int_to_ptr.vmem [resolvable:$true] %s4200
          %4206 = dma.vmem_to_hbm [thread:$0]  %s4201, 1024, %s4199, %s4187, 128, 128, 8
        $region52: #{attention_forward.1} parent=35 // pred_fallthru
          _
      $region36: #{attention_forward.1} parent=5 // pred_fallthru
        _
      %p4207 = scmp.le.s32.totalorder 2, %s17
      // Predicated region
      $region53: #{attention_forward.1} parent=5 // pred_check
        %p4208 = pneg %p4207
      $region54: #{attention_forward.1} parent=5 // pred_check_branch
        %4210 = sbr.rel (%p4208) target = $region56
      $region55: #{attention_forward.1} parent=5 // pred_region
        %s4211 = ssub.s32 %s17, 2
        // Predicated region
        $region57: #{attention_forward.1} parent=55 // pred_check
          %p4212 = pneg %p135
        $region58: #{attention_forward.1} parent=55 // pred_check_branch
          %4214 = sbr.rel (%p4212) target = $region60
        $region59: #{attention_forward.1} parent=55 // pred_region
          %s4215 = sand.u32 %s120, 1
          %s4216 = scalar_lea.sflag [#allocation5], %s4215
          %s4217 = sand.u32 %s120, 1
          %s4218 = smul.addr %s4217, 64
          %s4219 = scalar_lea.vmem [#allocation9], %s4218
          %4220 = dma.done %s4216, 1024
        $region60: #{attention_forward.1} parent=55 // pred_fallthru
          _
      $region56: #{attention_forward.1} parent=5 // pred_fallthru
        _
    $region6: #{attention_forward.1} parent=1 // loop_footer
      %s21 = sadd.s32 1, %s17
    $region7: #{attention_forward.1} parent=1 // loop_footer_branch
      %16 = sbr.rel target = $region3
    $region8: #{attention_forward.1} parent=1 // loop_exit
      _
    %4221 = vsyncpa [#allocation4], 1
    %s4222 = scalar_lea.sflag [#allocation4], 1
    %4223 = vsyncpa %s4222, 1
    %4224 = vsyncpa [#allocation7], 1
    %4225 = vsyncpa [#allocation5], 1
    %s4226 = scalar_lea.sflag [#allocation5], 1
    %4227 = vsyncpa %s4226, 1

</llo_original>
